<compile_context>
chip_gen: v7x
topology: tpu7x:2x2x1
jax: 0.10.0
libtpu: 0.0.40
codegen_flags: <defaults>
</compile_context>

<pallas_src>
import numpy as np

import jax
import jax.numpy as jnp
from jax.experimental import pallas as pl
from jax.experimental.pallas import tpu as pltpu


# Images per grid step.  Must be a multiple of 8 (sublane tile) so all
# in-kernel slices/reshapes stay vreg-aligned.  Raise for large batches
# (keeps v5e happy at 8-64; grid length >= 2 uses both v7x TensorCores).
TB = 8


# ------------------------------ fused kernel -------------------------------
#
# Per grid step (TB images):
#   x_ref   : (2, 16, TB, 128) bf16  parity-split rows, lane = w*3 + c (96 used)
#   w1b_ref : (5, 128, 256)    bf16  conv1 banded weights, per kh; cols = dw*128 + wp*8 + co
#   b1r_ref : (1, 128)         f32   conv1 bias tiled over pooled-W
#   w2b_ref : (5, 128, 256)    bf16  conv2 banded weights, per kh; cols = dw*128 + wp*16 + co
#   b2r_ref : (1, 128)         f32
#   wf1_ref : (5, 128, 128)    bf16  fc1 split into 5 slabs by pooled row h
#   wf2_ref, wf3_ref : (128,128) bf16 ; bf*_ref : (1,128) f32
#   o_ref   : (TB, 128)        f32   padded logits (lane-dense store)

def _lenet_kernel(x_ref, w1b_ref, b1r_ref, w2b_ref, b2r_ref,
                  wf1_ref, bf1_ref, wf2_ref, bf2_ref, wf3_ref, bf3_ref,
                  o_ref):
    tb = o_ref.shape[0]
    f32, bf16 = jnp.float32, jnp.bfloat16

    def banded_conv(get_lhs, wb_ref, b_ref):
        # conv + bias + ReLU + 2x2 max-pool, via per-kh accumulated matmuls.
        # Both horizontal pool offsets (dw) are stacked on N (cols 0..127 /
        # 128..255); vertical offsets (dh) are two accumulators.
        m = None
        for dh in range(2):
            acc = None
            for kh in range(5):
                y = jnp.dot(get_lhs(dh, kh), wb_ref[kh],
                            preferred_element_type=f32)
                acc = y if acc is None else acc + y
            m = acc if m is None else jnp.maximum(m, acc)
        m = jnp.maximum(m[:, :128], m[:, 128:])          # max over dw
        # relu(max + b) == max(relu(. + b)): bias/relu are monotone per lane.
        return jnp.maximum(m + b_ref[...], 0.0)

    # ---- stage 1: conv1(5x5, 3->6) + bias + ReLU + 2x2 max-pool -----------
    # input row r = 2*hp + dh + kh lives in parity plane (dh+kh)&1 at offset
    # (dh+kh)>>1 + hp  ->  contiguous 14-tile slice, free reshape (TB mult 8).
    def lhs1(dh, kh):
        p, o = (dh + kh) & 1, (dh + kh) >> 1
        return x_ref[p, o:o + 14, :, :].reshape(14 * tb, 128)

    p1 = banded_conv(lhs1, w1b_ref, b1r_ref)             # (14*TB, 128) f32
    p1b = p1.astype(bf16)                                 # rows: hp*TB + b

    # ---- stage 2: conv2(5x5, 6->16) + bias + ReLU + 2x2 max-pool ----------
    def lhs2(dh, kh):
        return jnp.concatenate(
            [p1b[(2 * h + dh + kh) * tb:(2 * h + dh + kh + 1) * tb]
             for h in range(5)], axis=0)                  # (5*TB, 128)

    p2 = banded_conv(lhs2, w2b_ref, b2r_ref)              # (5*TB, 128) f32
    p2b = p2.astype(bf16)                                  # rows: h*TB + b

    # ---- MLP head: fc1 as 5 accumulated slab-matmuls (no flatten relayout) -
    acc = None
    for h in range(5):
        y = jnp.dot(p2b[h * tb:(h + 1) * tb], wf1_ref[h],
                    preferred_element_type=f32)
        acc = y if acc is None else acc + y
    h1 = jnp.maximum(acc + bf1_ref[...], 0.0)
    h2 = jnp.maximum(
        jnp.dot(h1.astype(bf16), wf2_ref[...], preferred_element_type=f32)
        + bf2_ref[...], 0.0)
    o_ref[...] = (jnp.dot(h2.astype(bf16), wf3_ref[...],
                          preferred_element_type=f32) + bf3_ref[...])


# --------------------- one-time parameter packing (host) -------------------

_WEIGHT_ORDER = ("w1b", "b1r", "w2b", "b2r",
                 "wf1", "bf1", "wf2", "bf2", "wf3", "bf3")


def pack_params(p):
    """Build banded/padded bf16 weights once (zero runtime cost)."""
    f32 = np.float32
    w1 = np.asarray(p["conv1_w"], f32)        # (6, 3, 5, 5)
    b1 = np.asarray(p["conv1_b"], f32)
    w2 = np.asarray(p["conv2_w"], f32)        # (16, 6, 5, 5)
    b2 = np.asarray(p["conv2_b"], f32)

    # conv1 banded: per kh, rows = input lane w_in*3 + c, cols = dw*128 + wp*8 + co
    w1b = np.zeros((5, 128, 256), f32)
    for kh in range(5):
        for dw in range(2):
            for kw in range(5):
                for wp in range(14):
                    w_in = 2 * wp + dw + kw
                    w1b[kh, w_in * 3: w_in * 3 + 3,
                        dw * 128 + wp * 8: dw * 128 + wp * 8 + 6] = w1[:, :, kh, kw].T
    b1r = np.zeros((1, 128), f32)
    for wp in range(14):
        b1r[0, wp * 8: wp * 8 + 6] = b1

    # conv2 banded: per kh, rows = input lane wp1*8 + ci, cols = dw*128 + wp2*16 + co
    w2b = np.zeros((5, 128, 256), f32)
    for kh in range(5):
        for dw in range(2):
            for kw in range(5):
                for wp in range(5):
                    w_in = 2 * wp + dw + kw
                    w2b[kh, w_in * 8: w_in * 8 + 6,
                        dw * 128 + wp * 16: dw * 128 + wp * 16 + 16] = w2[:, :, kh, kw].T
    b2r = np.zeros((1, 128), f32)
    for wp in range(5):
        b2r[0, wp * 16: wp * 16 + 16] = b2

    # fc1 split into 5 slabs by pooled row h; slab rows = w*16 + c, cols 0..119.
    fc1_w = np.asarray(p["fc1_w"], f32)       # (120, 400), col = c*25 + h*5 + w
    wf1 = np.zeros((5, 128, 128), f32)
    for h in range(5):
        for w in range(5):
            for c in range(16):
                wf1[h, w * 16 + c, :120] = fc1_w[:, c * 25 + h * 5 + w]
    bf1 = np.zeros((1, 128), f32)
    bf1[0, :120] = np.asarray(p["fc1_b"], f32)

    wf2 = np.zeros((128, 128), f32)
    wf2[:120, :84] = np.asarray(p["fc2_w"], f32).T
    bf2 = np.zeros((1, 128), f32)
    bf2[0, :84] = np.asarray(p["fc2_b"], f32)

    wf3 = np.zeros((128, 128), f32)
    wf3[:84, :10] = np.asarray(p["fc3_w"], f32).T
    bf3 = np.zeros((1, 128), f32)
    bf3[0, :10] = np.asarray(p["fc3_b"], f32)

    return dict(
        w1b=jnp.asarray(w1b, jnp.bfloat16), b1r=jnp.asarray(b1r),
        w2b=jnp.asarray(w2b, jnp.bfloat16), b2r=jnp.asarray(b2r),
        wf1=jnp.asarray(wf1, jnp.bfloat16), bf1=jnp.asarray(bf1),
        wf2=jnp.asarray(wf2, jnp.bfloat16), bf2=jnp.asarray(bf2),
        wf3=jnp.asarray(wf3, jnp.bfloat16), bf3=jnp.asarray(bf3),
    )


# ------------------------------ forward wrapper -----------------------------

def _full_spec(a):
    n = a.ndim
    return pl.BlockSpec(a.shape, lambda i, _n=n: (0,) * _n)


@jax.jit
def lenet_forward(x, pk):
    B = x.shape[0]
    Bp = ((B + TB - 1) // TB) * TB

    # NCHW -> channel-minor rows, pad lanes 96->128, split rows by parity,
    # move batch into the sublane slot: (2 parity, 16 rows, Bp, 128) bf16.
    xr = x.transpose(0, 2, 3, 1).reshape(B, 32, 96)
    xr = jnp.pad(xr, ((0, Bp - B), (0, 0), (0, 32)))
    xr = xr.reshape(Bp, 16, 2, 128).transpose(2, 1, 0, 3).astype(jnp.bfloat16)

    flops_per_img = (10 * 14 * 128 * 256 * 2 + 10 * 5 * 128 * 256 * 2
                     + 5 * 128 * 128 * 2 + 2 * 128 * 128 * 2)
    weight_bytes = sum(int(np.prod(pk[k].shape)) * pk[k].dtype.itemsize
                       for k in _WEIGHT_ORDER)

    out = pl.pallas_call(
        _lenet_kernel,
        out_shape=jax.ShapeDtypeStruct((Bp, 128), jnp.float32),
        grid_spec=pltpu.PrefetchScalarGridSpec(
            num_scalar_prefetch=0,
            grid=(Bp // TB,),
            in_specs=[pl.BlockSpec((2, 16, TB, 128), lambda i: (0, 0, i, 0))]
                     + [_full_spec(pk[k]) for k in _WEIGHT_ORDER],
            out_specs=pl.BlockSpec((TB, 128), lambda i: (i, 0)),
        ),
        compiler_params=pltpu.CompilerParams(
            dimension_semantics=("parallel",)),
        cost_estimate=pl.CostEstimate(
            flops=Bp * flops_per_img,
            transcendentals=0,
            bytes_accessed=Bp * (2 * 16 * 128 * 2 + 128 * 4) + weight_bytes),
    )(xr, *[pk[k] for k in _WEIGHT_ORDER])
    return out[:B, :10]


# ---------------------------- reference (pure JAX) --------------------------

def lenet_reference(x, p):
    prec = jax.lax.Precision.HIGHEST

    def conv(x, w, b):
        y = jax.lax.conv_general_dilated(
            x, w, window_strides=(1, 1), padding="VALID",
            dimension_numbers=("NCHW", "OIHW", "NCHW"), precision=prec)
        return y + b[None, :, None, None]

    def pool(x):
        return jax.lax.reduce_window(x, -jnp.inf, jax.lax.max,
                                     (1, 1, 2, 2), (1, 1, 2, 2), "VALID")

    x = pool(jax.nn.relu(conv(x, p["conv1_w"], p["conv1_b"])))
    x = pool(jax.nn.relu(conv(x, p["conv2_w"], p["conv2_b"])))
    x = x.reshape(x.shape[0], -1)
    x = jax.nn.relu(jnp.dot(x, p["fc1_w"].T, precision=prec) + p["fc1_b"])
    x = jax.nn.relu(jnp.dot(x, p["fc2_w"].T, precision=prec) + p["fc2_b"])
    return jnp.dot(x, p["fc3_w"].T, precision=prec) + p["fc3_b"]


# ----------------------------- parameter init --------------------------------

def init_params(key):
    ks = jax.random.split(key, 10)

    def u(k, shape, fan_in):
        bound = 1.0 / float(fan_in) ** 0.5
        return jax.random.uniform(k, shape, jnp.float32, -bound, bound)

    return {
        "conv1_w": u(ks[0], (6, 3, 5, 5), 3 * 5 * 5),
        "conv1_b": u(ks[1], (6,), 3 * 5 * 5),
        "conv2_w": u(ks[2], (16, 6, 5, 5), 6 * 5 * 5),
        "conv2_b": u(ks[3], (16,), 6 * 5 * 5),
        "fc1_w": u(ks[4], (120, 400), 400),
        "fc1_b": u(ks[5], (120,), 400),
        "fc2_w": u(ks[6], (84, 120), 120),
        "fc2_b": u(ks[7], (84,), 120),
        "fc3_w": u(ks[8], (10, 84), 84),
        "fc3_b": u(ks[9], (10,), 84),
    }


if __name__ == "__main__":
    key = jax.random.PRNGKey(0)
    pkey, xkey = jax.random.split(key)
    params = init_params(pkey)
    packed = pack_params(params)          # one-time weight repacking (host)
    # LeNet geometry requires 3x32x32 input (fc1 expects 16*5*5 = 400).
    x = jax.random.normal(xkey, (2, 3, 32, 32), jnp.float32)

    out = jax.block_until_ready(lenet_forward(x, packed))
    ref = jax.block_until_ready(lenet_reference(x, params))

    assert out.shape == (2, 10) and out.dtype == jnp.float32
    err = float(jnp.max(jnp.abs(out - ref)))
    assert err < 3e-2, f"mismatch vs reference, max|diff|={err}"
    print("KERNEL_OK")
</pallas_src>

<mosaic_0001>
module attributes {stable_mosaic.version = 11 : i64} {
  func.func @_lenet_kernel(%arg0: i32, %arg1: memref<2x16x8x128xbf16, #tpu.memory_space<vmem>>, %arg2: memref<5x128x256xbf16, #tpu.memory_space<vmem>>, %arg3: memref<1x128xf32, #tpu.memory_space<vmem>>, %arg4: memref<5x128x256xbf16, #tpu.memory_space<vmem>>, %arg5: memref<1x128xf32, #tpu.memory_space<vmem>>, %arg6: memref<5x128x128xbf16, #tpu.memory_space<vmem>>, %arg7: memref<1x128xf32, #tpu.memory_space<vmem>>, %arg8: memref<128x128xbf16, #tpu.memory_space<vmem>>, %arg9: memref<1x128xf32, #tpu.memory_space<vmem>>, %arg10: memref<128x128xbf16, #tpu.memory_space<vmem>>, %arg11: memref<1x128xf32, #tpu.memory_space<vmem>>, %arg12: memref<8x128xf32, #tpu.memory_space<vmem>>) attributes {dimension_semantics = [#tpu.dimension_semantics<parallel>], iteration_bounds = array<i64: 1>, scalar_prefetch = 0 : i64, scratch_operands = 0 : i64, tpu.core_type = #tpu.core_type<tc>, window_params = [{transform_indices = @transform_0, window_bounds = array<i64: 2, 16, 8, 128>}, {pipeline_mode = #tpu.pipeline_mode<synchronous>, transform_indices = @transform_1, window_bounds = array<i64: 5, 128, 256>}, {pipeline_mode = #tpu.pipeline_mode<synchronous>, transform_indices = @transform_2, window_bounds = array<i64: 1, 128>}, {pipeline_mode = #tpu.pipeline_mode<synchronous>, transform_indices = @transform_3, window_bounds = array<i64: 5, 128, 256>}, {pipeline_mode = #tpu.pipeline_mode<synchronous>, transform_indices = @transform_4, window_bounds = array<i64: 1, 128>}, {pipeline_mode = #tpu.pipeline_mode<synchronous>, transform_indices = @transform_5, window_bounds = array<i64: 5, 128, 128>}, {pipeline_mode = #tpu.pipeline_mode<synchronous>, transform_indices = @transform_6, window_bounds = array<i64: 1, 128>}, {pipeline_mode = #tpu.pipeline_mode<synchronous>, transform_indices = @transform_7, window_bounds = array<i64: 128, 128>}, {pipeline_mode = #tpu.pipeline_mode<synchronous>, transform_indices = @transform_8, window_bounds = array<i64: 1, 128>}, {pipeline_mode = #tpu.pipeline_mode<synchronous>, transform_indices = @transform_9, window_bounds = array<i64: 128, 128>}, {pipeline_mode = #tpu.pipeline_mode<synchronous>, transform_indices = @transform_10, window_bounds = array<i64: 1, 128>}, {transform_indices = @transform_11, window_bounds = array<i64: 8, 128>}]} {
    %c0 = arith.constant 0 : index
    %c0_0 = arith.constant 0 : index
    %c0_1 = arith.constant 0 : index
    %c0_2 = arith.constant 0 : index
    %0 = vector.load %arg1[%c0, %c0_0, %c0_1, %c0_2] : memref<2x16x8x128xbf16, #tpu.memory_space<vmem>>, vector<1x14x8x128xbf16>
    %1 = vector.shape_cast %0 : vector<1x14x8x128xbf16> to vector<14x8x128xbf16>
    %2 = vector.shape_cast %1 : vector<14x8x128xbf16> to vector<112x128xbf16>
    %c0_3 = arith.constant 0 : index
    %c0_4 = arith.constant 0 : index
    %c0_5 = arith.constant 0 : index
    %3 = vector.load %arg2[%c0_3, %c0_4, %c0_5] : memref<5x128x256xbf16, #tpu.memory_space<vmem>>, vector<1x128x256xbf16>
    %4 = vector.shape_cast %3 : vector<1x128x256xbf16> to vector<128x256xbf16>
    %cst = arith.constant dense<0.000000e+00> : vector<112x256xf32>
    %5 = tpu.matmul %2, %4, %cst {dimension_numbers = #tpu.dot_dimension_numbers<[1], [0], [0], [1], [0, 0, 1, 1], [], []>} : vector<112x128xbf16>, vector<128x256xbf16>, vector<112x256xf32> -> vector<112x256xf32>
    %c1 = arith.constant 1 : index
    %c0_6 = arith.constant 0 : index
    %c0_7 = arith.constant 0 : index
    %c0_8 = arith.constant 0 : index
    %6 = vector.load %arg1[%c1, %c0_6, %c0_7, %c0_8] : memref<2x16x8x128xbf16, #tpu.memory_space<vmem>>, vector<1x14x8x128xbf16>
    %7 = vector.shape_cast %6 : vector<1x14x8x128xbf16> to vector<14x8x128xbf16>
    %8 = vector.shape_cast %7 : vector<14x8x128xbf16> to vector<112x128xbf16>
    %c1_9 = arith.constant 1 : index
    %c0_10 = arith.constant 0 : index
    %c0_11 = arith.constant 0 : index
    %9 = vector.load %arg2[%c1_9, %c0_10, %c0_11] : memref<5x128x256xbf16, #tpu.memory_space<vmem>>, vector<1x128x256xbf16>
    %10 = vector.shape_cast %9 : vector<1x128x256xbf16> to vector<128x256xbf16>
    %cst_12 = arith.constant dense<0.000000e+00> : vector<112x256xf32>
    %11 = tpu.matmul %8, %10, %cst_12 {dimension_numbers = #tpu.dot_dimension_numbers<[1], [0], [0], [1], [0, 0, 1, 1], [], []>} : vector<112x128xbf16>, vector<128x256xbf16>, vector<112x256xf32> -> vector<112x256xf32>
    %12 = arith.addf %5, %11 : vector<112x256xf32>
    %c0_13 = arith.constant 0 : index
    %c1_14 = arith.constant 1 : index
    %c0_15 = arith.constant 0 : index
    %c0_16 = arith.constant 0 : index
    %13 = vector.load %arg1[%c0_13, %c1_14, %c0_15, %c0_16] : memref<2x16x8x128xbf16, #tpu.memory_space<vmem>>, vector<1x14x8x128xbf16>
    %14 = vector.shape_cast %13 : vector<1x14x8x128xbf16> to vector<14x8x128xbf16>
    %15 = vector.shape_cast %14 : vector<14x8x128xbf16> to vector<112x128xbf16>
    %c2 = arith.constant 2 : index
    %c0_17 = arith.constant 0 : index
    %c0_18 = arith.constant 0 : index
    %16 = vector.load %arg2[%c2, %c0_17, %c0_18] : memref<5x128x256xbf16, #tpu.memory_space<vmem>>, vector<1x128x256xbf16>
    %17 = vector.shape_cast %16 : vector<1x128x256xbf16> to vector<128x256xbf16>
    %cst_19 = arith.constant dense<0.000000e+00> : vector<112x256xf32>
    %18 = tpu.matmul %15, %17, %cst_19 {dimension_numbers = #tpu.dot_dimension_numbers<[1], [0], [0], [1], [0, 0, 1, 1], [], []>} : vector<112x128xbf16>, vector<128x256xbf16>, vector<112x256xf32> -> vector<112x256xf32>
    %19 = arith.addf %12, %18 : vector<112x256xf32>
    %c1_20 = arith.constant 1 : index
    %c1_21 = arith.constant 1 : index
    %c0_22 = arith.constant 0 : index
    %c0_23 = arith.constant 0 : index
    %20 = vector.load %arg1[%c1_20, %c1_21, %c0_22, %c0_23] : memref<2x16x8x128xbf16, #tpu.memory_space<vmem>>, vector<1x14x8x128xbf16>
    %21 = vector.shape_cast %20 : vector<1x14x8x128xbf16> to vector<14x8x128xbf16>
    %22 = vector.shape_cast %21 : vector<14x8x128xbf16> to vector<112x128xbf16>
    %c3 = arith.constant 3 : index
    %c0_24 = arith.constant 0 : index
    %c0_25 = arith.constant 0 : index
    %23 = vector.load %arg2[%c3, %c0_24, %c0_25] : memref<5x128x256xbf16, #tpu.memory_space<vmem>>, vector<1x128x256xbf16>
    %24 = vector.shape_cast %23 : vector<1x128x256xbf16> to vector<128x256xbf16>
    %cst_26 = arith.constant dense<0.000000e+00> : vector<112x256xf32>
    %25 = tpu.matmul %22, %24, %cst_26 {dimension_numbers = #tpu.dot_dimension_numbers<[1], [0], [0], [1], [0, 0, 1, 1], [], []>} : vector<112x128xbf16>, vector<128x256xbf16>, vector<112x256xf32> -> vector<112x256xf32>
    %26 = arith.addf %19, %25 : vector<112x256xf32>
    %c0_27 = arith.constant 0 : index
    %c2_28 = arith.constant 2 : index
    %c0_29 = arith.constant 0 : index
    %c0_30 = arith.constant 0 : index
    %27 = vector.load %arg1[%c0_27, %c2_28, %c0_29, %c0_30] : memref<2x16x8x128xbf16, #tpu.memory_space<vmem>>, vector<1x14x8x128xbf16>
    %28 = vector.shape_cast %27 : vector<1x14x8x128xbf16> to vector<14x8x128xbf16>
    %29 = vector.shape_cast %28 : vector<14x8x128xbf16> to vector<112x128xbf16>
    %c4 = arith.constant 4 : index
    %c0_31 = arith.constant 0 : index
    %c0_32 = arith.constant 0 : index
    %30 = vector.load %arg2[%c4, %c0_31, %c0_32] : memref<5x128x256xbf16, #tpu.memory_space<vmem>>, vector<1x128x256xbf16>
    %31 = vector.shape_cast %30 : vector<1x128x256xbf16> to vector<128x256xbf16>
    %cst_33 = arith.constant dense<0.000000e+00> : vector<112x256xf32>
    %32 = tpu.matmul %29, %31, %cst_33 {dimension_numbers = #tpu.dot_dimension_numbers<[1], [0], [0], [1], [0, 0, 1, 1], [], []>} : vector<112x128xbf16>, vector<128x256xbf16>, vector<112x256xf32> -> vector<112x256xf32>
    %33 = arith.addf %26, %32 : vector<112x256xf32>
    %c1_34 = arith.constant 1 : index
    %c0_35 = arith.constant 0 : index
    %c0_36 = arith.constant 0 : index
    %c0_37 = arith.constant 0 : index
    %34 = vector.load %arg1[%c1_34, %c0_35, %c0_36, %c0_37] : memref<2x16x8x128xbf16, #tpu.memory_space<vmem>>, vector<1x14x8x128xbf16>
    %35 = vector.shape_cast %34 : vector<1x14x8x128xbf16> to vector<14x8x128xbf16>
    %36 = vector.shape_cast %35 : vector<14x8x128xbf16> to vector<112x128xbf16>
    %c0_38 = arith.constant 0 : index
    %c0_39 = arith.constant 0 : index
    %c0_40 = arith.constant 0 : index
    %37 = vector.load %arg2[%c0_38, %c0_39, %c0_40] : memref<5x128x256xbf16, #tpu.memory_space<vmem>>, vector<1x128x256xbf16>
    %38 = vector.shape_cast %37 : vector<1x128x256xbf16> to vector<128x256xbf16>
    %cst_41 = arith.constant dense<0.000000e+00> : vector<112x256xf32>
    %39 = tpu.matmul %36, %38, %cst_41 {dimension_numbers = #tpu.dot_dimension_numbers<[1], [0], [0], [1], [0, 0, 1, 1], [], []>} : vector<112x128xbf16>, vector<128x256xbf16>, vector<112x256xf32> -> vector<112x256xf32>
    %c0_42 = arith.constant 0 : index
    %c1_43 = arith.constant 1 : index
    %c0_44 = arith.constant 0 : index
    %c0_45 = arith.constant 0 : index
    %40 = vector.load %arg1[%c0_42, %c1_43, %c0_44, %c0_45] : memref<2x16x8x128xbf16, #tpu.memory_space<vmem>>, vector<1x14x8x128xbf16>
    %41 = vector.shape_cast %40 : vector<1x14x8x128xbf16> to vector<14x8x128xbf16>
    %42 = vector.shape_cast %41 : vector<14x8x128xbf16> to vector<112x128xbf16>
    %c1_46 = arith.constant 1 : index
    %c0_47 = arith.constant 0 : index
    %c0_48 = arith.constant 0 : index
    %43 = vector.load %arg2[%c1_46, %c0_47, %c0_48] : memref<5x128x256xbf16, #tpu.memory_space<vmem>>, vector<1x128x256xbf16>
    %44 = vector.shape_cast %43 : vector<1x128x256xbf16> to vector<128x256xbf16>
    %cst_49 = arith.constant dense<0.000000e+00> : vector<112x256xf32>
    %45 = tpu.matmul %42, %44, %cst_49 {dimension_numbers = #tpu.dot_dimension_numbers<[1], [0], [0], [1], [0, 0, 1, 1], [], []>} : vector<112x128xbf16>, vector<128x256xbf16>, vector<112x256xf32> -> vector<112x256xf32>
    %46 = arith.addf %39, %45 : vector<112x256xf32>
    %c1_50 = arith.constant 1 : index
    %c1_51 = arith.constant 1 : index
    %c0_52 = arith.constant 0 : index
    %c0_53 = arith.constant 0 : index
    %47 = vector.load %arg1[%c1_50, %c1_51, %c0_52, %c0_53] : memref<2x16x8x128xbf16, #tpu.memory_space<vmem>>, vector<1x14x8x128xbf16>
    %48 = vector.shape_cast %47 : vector<1x14x8x128xbf16> to vector<14x8x128xbf16>
    %49 = vector.shape_cast %48 : vector<14x8x128xbf16> to vector<112x128xbf16>
    %c2_54 = arith.constant 2 : index
    %c0_55 = arith.constant 0 : index
    %c0_56 = arith.constant 0 : index
    %50 = vector.load %arg2[%c2_54, %c0_55, %c0_56] : memref<5x128x256xbf16, #tpu.memory_space<vmem>>, vector<1x128x256xbf16>
    %51 = vector.shape_cast %50 : vector<1x128x256xbf16> to vector<128x256xbf16>
    %cst_57 = arith.constant dense<0.000000e+00> : vector<112x256xf32>
    %52 = tpu.matmul %49, %51, %cst_57 {dimension_numbers = #tpu.dot_dimension_numbers<[1], [0], [0], [1], [0, 0, 1, 1], [], []>} : vector<112x128xbf16>, vector<128x256xbf16>, vector<112x256xf32> -> vector<112x256xf32>
    %53 = arith.addf %46, %52 : vector<112x256xf32>
    %c0_58 = arith.constant 0 : index
    %c2_59 = arith.constant 2 : index
    %c0_60 = arith.constant 0 : index
    %c0_61 = arith.constant 0 : index
    %54 = vector.load %arg1[%c0_58, %c2_59, %c0_60, %c0_61] : memref<2x16x8x128xbf16, #tpu.memory_space<vmem>>, vector<1x14x8x128xbf16>
    %55 = vector.shape_cast %54 : vector<1x14x8x128xbf16> to vector<14x8x128xbf16>
    %56 = vector.shape_cast %55 : vector<14x8x128xbf16> to vector<112x128xbf16>
    %c3_62 = arith.constant 3 : index
    %c0_63 = arith.constant 0 : index
    %c0_64 = arith.constant 0 : index
    %57 = vector.load %arg2[%c3_62, %c0_63, %c0_64] : memref<5x128x256xbf16, #tpu.memory_space<vmem>>, vector<1x128x256xbf16>
    %58 = vector.shape_cast %57 : vector<1x128x256xbf16> to vector<128x256xbf16>
    %cst_65 = arith.constant dense<0.000000e+00> : vector<112x256xf32>
    %59 = tpu.matmul %56, %58, %cst_65 {dimension_numbers = #tpu.dot_dimension_numbers<[1], [0], [0], [1], [0, 0, 1, 1], [], []>} : vector<112x128xbf16>, vector<128x256xbf16>, vector<112x256xf32> -> vector<112x256xf32>
    %60 = arith.addf %53, %59 : vector<112x256xf32>
    %c1_66 = arith.constant 1 : index
    %c2_67 = arith.constant 2 : index
    %c0_68 = arith.constant 0 : index
    %c0_69 = arith.constant 0 : index
    %61 = vector.load %arg1[%c1_66, %c2_67, %c0_68, %c0_69] : memref<2x16x8x128xbf16, #tpu.memory_space<vmem>>, vector<1x14x8x128xbf16>
    %62 = vector.shape_cast %61 : vector<1x14x8x128xbf16> to vector<14x8x128xbf16>
    %63 = vector.shape_cast %62 : vector<14x8x128xbf16> to vector<112x128xbf16>
    %c4_70 = arith.constant 4 : index
    %c0_71 = arith.constant 0 : index
    %c0_72 = arith.constant 0 : index
    %64 = vector.load %arg2[%c4_70, %c0_71, %c0_72] : memref<5x128x256xbf16, #tpu.memory_space<vmem>>, vector<1x128x256xbf16>
    %65 = vector.shape_cast %64 : vector<1x128x256xbf16> to vector<128x256xbf16>
    %cst_73 = arith.constant dense<0.000000e+00> : vector<112x256xf32>
    %66 = tpu.matmul %63, %65, %cst_73 {dimension_numbers = #tpu.dot_dimension_numbers<[1], [0], [0], [1], [0, 0, 1, 1], [], []>} : vector<112x128xbf16>, vector<128x256xbf16>, vector<112x256xf32> -> vector<112x256xf32>
    %67 = arith.addf %60, %66 : vector<112x256xf32>
    %68 = arith.maximumf %33, %67 : vector<112x256xf32>
    %69 = vector.extract_strided_slice %68 {offsets = [0, 0], sizes = [112, 128], strides = [1, 1]} : vector<112x256xf32> to vector<112x128xf32>
    %70 = vector.extract_strided_slice %68 {offsets = [0, 128], sizes = [112, 128], strides = [1, 1]} : vector<112x256xf32> to vector<112x128xf32>
    %71 = arith.maximumf %69, %70 : vector<112x128xf32>
    %c0_74 = arith.constant 0 : index
    %c0_75 = arith.constant 0 : index
    %72 = vector.load %arg3[%c0_74, %c0_75] : memref<1x128xf32, #tpu.memory_space<vmem>>, vector<1x128xf32>
    %73 = vector.broadcast %72 : vector<1x128xf32> to vector<112x128xf32>
    %74 = arith.addf %71, %73 : vector<112x128xf32>
    %cst_76 = arith.constant 0.000000e+00 : f32
    %75 = vector.broadcast %cst_76 : f32 to vector<112x128xf32>
    %76 = arith.maximumf %74, %75 : vector<112x128xf32>
    %77 = arith.truncf %76 : vector<112x128xf32> to vector<112x128xbf16>
    %78 = vector.extract_strided_slice %77 {offsets = [0, 0], sizes = [8, 128], strides = [1, 1]} : vector<112x128xbf16> to vector<8x128xbf16>
    %79 = vector.extract_strided_slice %77 {offsets = [16, 0], sizes = [8, 128], strides = [1, 1]} : vector<112x128xbf16> to vector<8x128xbf16>
    %80 = vector.extract_strided_slice %77 {offsets = [32, 0], sizes = [8, 128], strides = [1, 1]} : vector<112x128xbf16> to vector<8x128xbf16>
    %81 = vector.extract_strided_slice %77 {offsets = [48, 0], sizes = [8, 128], strides = [1, 1]} : vector<112x128xbf16> to vector<8x128xbf16>
    %82 = vector.extract_strided_slice %77 {offsets = [64, 0], sizes = [8, 128], strides = [1, 1]} : vector<112x128xbf16> to vector<8x128xbf16>
    %83 = tpu.concatenate %78, %79, %80, %81, %82 in 0 : vector<8x128xbf16>, vector<8x128xbf16>, vector<8x128xbf16>, vector<8x128xbf16>, vector<8x128xbf16> -> vector<40x128xbf16>
    %c0_77 = arith.constant 0 : index
    %c0_78 = arith.constant 0 : index
    %c0_79 = arith.constant 0 : index
    %84 = vector.load %arg4[%c0_77, %c0_78, %c0_79] : memref<5x128x256xbf16, #tpu.memory_space<vmem>>, vector<1x128x256xbf16>
    %85 = vector.shape_cast %84 : vector<1x128x256xbf16> to vector<128x256xbf16>
    %cst_80 = arith.constant dense<0.000000e+00> : vector<40x256xf32>
    %86 = tpu.matmul %83, %85, %cst_80 {dimension_numbers = #tpu.dot_dimension_numbers<[1], [0], [0], [1], [0, 0, 1, 1], [], []>} : vector<40x128xbf16>, vector<128x256xbf16>, vector<40x256xf32> -> vector<40x256xf32>
    %87 = vector.extract_strided_slice %77 {offsets = [8, 0], sizes = [8, 128], strides = [1, 1]} : vector<112x128xbf16> to vector<8x128xbf16>
    %88 = vector.extract_strided_slice %77 {offsets = [24, 0], sizes = [8, 128], strides = [1, 1]} : vector<112x128xbf16> to vector<8x128xbf16>
    %89 = vector.extract_strided_slice %77 {offsets = [40, 0], sizes = [8, 128], strides = [1, 1]} : vector<112x128xbf16> to vector<8x128xbf16>
    %90 = vector.extract_strided_slice %77 {offsets = [56, 0], sizes = [8, 128], strides = [1, 1]} : vector<112x128xbf16> to vector<8x128xbf16>
    %91 = vector.extract_strided_slice %77 {offsets = [72, 0], sizes = [8, 128], strides = [1, 1]} : vector<112x128xbf16> to vector<8x128xbf16>
    %92 = tpu.concatenate %87, %88, %89, %90, %91 in 0 : vector<8x128xbf16>, vector<8x128xbf16>, vector<8x128xbf16>, vector<8x128xbf16>, vector<8x128xbf16> -> vector<40x128xbf16>
    %c1_81 = arith.constant 1 : index
    %c0_82 = arith.constant 0 : index
    %c0_83 = arith.constant 0 : index
    %93 = vector.load %arg4[%c1_81, %c0_82, %c0_83] : memref<5x128x256xbf16, #tpu.memory_space<vmem>>, vector<1x128x256xbf16>
    %94 = vector.shape_cast %93 : vector<1x128x256xbf16> to vector<128x256xbf16>
    %cst_84 = arith.constant dense<0.000000e+00> : vector<40x256xf32>
    %95 = tpu.matmul %92, %94, %cst_84 {dimension_numbers = #tpu.dot_dimension_numbers<[1], [0], [0], [1], [0, 0, 1, 1], [], []>} : vector<40x128xbf16>, vector<128x256xbf16>, vector<40x256xf32> -> vector<40x256xf32>
    %96 = arith.addf %86, %95 : vector<40x256xf32>
    %97 = vector.extract_strided_slice %77 {offsets = [16, 0], sizes = [8, 128], strides = [1, 1]} : vector<112x128xbf16> to vector<8x128xbf16>
    %98 = vector.extract_strided_slice %77 {offsets = [32, 0], sizes = [8, 128], strides = [1, 1]} : vector<112x128xbf16> to vector<8x128xbf16>
    %99 = vector.extract_strided_slice %77 {offsets = [48, 0], sizes = [8, 128], strides = [1, 1]} : vector<112x128xbf16> to vector<8x128xbf16>
    %100 = vector.extract_strided_slice %77 {offsets = [64, 0], sizes = [8, 128], strides = [1, 1]} : vector<112x128xbf16> to vector<8x128xbf16>
    %101 = vector.extract_strided_slice %77 {offsets = [80, 0], sizes = [8, 128], strides = [1, 1]} : vector<112x128xbf16> to vector<8x128xbf16>
    %102 = tpu.concatenate %97, %98, %99, %100, %101 in 0 : vector<8x128xbf16>, vector<8x128xbf16>, vector<8x128xbf16>, vector<8x128xbf16>, vector<8x128xbf16> -> vector<40x128xbf16>
    %c2_85 = arith.constant 2 : index
    %c0_86 = arith.constant 0 : index
    %c0_87 = arith.constant 0 : index
    %103 = vector.load %arg4[%c2_85, %c0_86, %c0_87] : memref<5x128x256xbf16, #tpu.memory_space<vmem>>, vector<1x128x256xbf16>
    %104 = vector.shape_cast %103 : vector<1x128x256xbf16> to vector<128x256xbf16>
    %cst_88 = arith.constant dense<0.000000e+00> : vector<40x256xf32>
    %105 = tpu.matmul %102, %104, %cst_88 {dimension_numbers = #tpu.dot_dimension_numbers<[1], [0], [0], [1], [0, 0, 1, 1], [], []>} : vector<40x128xbf16>, vector<128x256xbf16>, vector<40x256xf32> -> vector<40x256xf32>
    %106 = arith.addf %96, %105 : vector<40x256xf32>
    %107 = vector.extract_strided_slice %77 {offsets = [24, 0], sizes = [8, 128], strides = [1, 1]} : vector<112x128xbf16> to vector<8x128xbf16>
    %108 = vector.extract_strided_slice %77 {offsets = [40, 0], sizes = [8, 128], strides = [1, 1]} : vector<112x128xbf16> to vector<8x128xbf16>
    %109 = vector.extract_strided_slice %77 {offsets = [56, 0], sizes = [8, 128], strides = [1, 1]} : vector<112x128xbf16> to vector<8x128xbf16>
    %110 = vector.extract_strided_slice %77 {offsets = [72, 0], sizes = [8, 128], strides = [1, 1]} : vector<112x128xbf16> to vector<8x128xbf16>
    %111 = vector.extract_strided_slice %77 {offsets = [88, 0], sizes = [8, 128], strides = [1, 1]} : vector<112x128xbf16> to vector<8x128xbf16>
    %112 = tpu.concatenate %107, %108, %109, %110, %111 in 0 : vector<8x128xbf16>, vector<8x128xbf16>, vector<8x128xbf16>, vector<8x128xbf16>, vector<8x128xbf16> -> vector<40x128xbf16>
    %c3_89 = arith.constant 3 : index
    %c0_90 = arith.constant 0 : index
    %c0_91 = arith.constant 0 : index
    %113 = vector.load %arg4[%c3_89, %c0_90, %c0_91] : memref<5x128x256xbf16, #tpu.memory_space<vmem>>, vector<1x128x256xbf16>
    %114 = vector.shape_cast %113 : vector<1x128x256xbf16> to vector<128x256xbf16>
    %cst_92 = arith.constant dense<0.000000e+00> : vector<40x256xf32>
    %115 = tpu.matmul %112, %114, %cst_92 {dimension_numbers = #tpu.dot_dimension_numbers<[1], [0], [0], [1], [0, 0, 1, 1], [], []>} : vector<40x128xbf16>, vector<128x256xbf16>, vector<40x256xf32> -> vector<40x256xf32>
    %116 = arith.addf %106, %115 : vector<40x256xf32>
    %117 = vector.extract_strided_slice %77 {offsets = [32, 0], sizes = [8, 128], strides = [1, 1]} : vector<112x128xbf16> to vector<8x128xbf16>
    %118 = vector.extract_strided_slice %77 {offsets = [48, 0], sizes = [8, 128], strides = [1, 1]} : vector<112x128xbf16> to vector<8x128xbf16>
    %119 = vector.extract_strided_slice %77 {offsets = [64, 0], sizes = [8, 128], strides = [1, 1]} : vector<112x128xbf16> to vector<8x128xbf16>
    %120 = vector.extract_strided_slice %77 {offsets = [80, 0], sizes = [8, 128], strides = [1, 1]} : vector<112x128xbf16> to vector<8x128xbf16>
    %121 = vector.extract_strided_slice %77 {offsets = [96, 0], sizes = [8, 128], strides = [1, 1]} : vector<112x128xbf16> to vector<8x128xbf16>
    %122 = tpu.concatenate %117, %118, %119, %120, %121 in 0 : vector<8x128xbf16>, vector<8x128xbf16>, vector<8x128xbf16>, vector<8x128xbf16>, vector<8x128xbf16> -> vector<40x128xbf16>
    %c4_93 = arith.constant 4 : index
    %c0_94 = arith.constant 0 : index
    %c0_95 = arith.constant 0 : index
    %123 = vector.load %arg4[%c4_93, %c0_94, %c0_95] : memref<5x128x256xbf16, #tpu.memory_space<vmem>>, vector<1x128x256xbf16>
    %124 = vector.shape_cast %123 : vector<1x128x256xbf16> to vector<128x256xbf16>
    %cst_96 = arith.constant dense<0.000000e+00> : vector<40x256xf32>
    %125 = tpu.matmul %122, %124, %cst_96 {dimension_numbers = #tpu.dot_dimension_numbers<[1], [0], [0], [1], [0, 0, 1, 1], [], []>} : vector<40x128xbf16>, vector<128x256xbf16>, vector<40x256xf32> -> vector<40x256xf32>
    %126 = arith.addf %116, %125 : vector<40x256xf32>
    %127 = vector.extract_strided_slice %77 {offsets = [8, 0], sizes = [8, 128], strides = [1, 1]} : vector<112x128xbf16> to vector<8x128xbf16>
    %128 = vector.extract_strided_slice %77 {offsets = [24, 0], sizes = [8, 128], strides = [1, 1]} : vector<112x128xbf16> to vector<8x128xbf16>
    %129 = vector.extract_strided_slice %77 {offsets = [40, 0], sizes = [8, 128], strides = [1, 1]} : vector<112x128xbf16> to vector<8x128xbf16>
    %130 = vector.extract_strided_slice %77 {offsets = [56, 0], sizes = [8, 128], strides = [1, 1]} : vector<112x128xbf16> to vector<8x128xbf16>
    %131 = vector.extract_strided_slice %77 {offsets = [72, 0], sizes = [8, 128], strides = [1, 1]} : vector<112x128xbf16> to vector<8x128xbf16>
    %132 = tpu.concatenate %127, %128, %129, %130, %131 in 0 : vector<8x128xbf16>, vector<8x128xbf16>, vector<8x128xbf16>, vector<8x128xbf16>, vector<8x128xbf16> -> vector<40x128xbf16>
    %c0_97 = arith.constant 0 : index
    %c0_98 = arith.constant 0 : index
    %c0_99 = arith.constant 0 : index
    %133 = vector.load %arg4[%c0_97, %c0_98, %c0_99] : memref<5x128x256xbf16, #tpu.memory_space<vmem>>, vector<1x128x256xbf16>
    %134 = vector.shape_cast %133 : vector<1x128x256xbf16> to vector<128x256xbf16>
    %cst_100 = arith.constant dense<0.000000e+00> : vector<40x256xf32>
    %135 = tpu.matmul %132, %134, %cst_100 {dimension_numbers = #tpu.dot_dimension_numbers<[1], [0], [0], [1], [0, 0, 1, 1], [], []>} : vector<40x128xbf16>, vector<128x256xbf16>, vector<40x256xf32> -> vector<40x256xf32>
    %136 = vector.extract_strided_slice %77 {offsets = [16, 0], sizes = [8, 128], strides = [1, 1]} : vector<112x128xbf16> to vector<8x128xbf16>
    %137 = vector.extract_strided_slice %77 {offsets = [32, 0], sizes = [8, 128], strides = [1, 1]} : vector<112x128xbf16> to vector<8x128xbf16>
    %138 = vector.extract_strided_slice %77 {offsets = [48, 0], sizes = [8, 128], strides = [1, 1]} : vector<112x128xbf16> to vector<8x128xbf16>
    %139 = vector.extract_strided_slice %77 {offsets = [64, 0], sizes = [8, 128], strides = [1, 1]} : vector<112x128xbf16> to vector<8x128xbf16>
    %140 = vector.extract_strided_slice %77 {offsets = [80, 0], sizes = [8, 128], strides = [1, 1]} : vector<112x128xbf16> to vector<8x128xbf16>
    %141 = tpu.concatenate %136, %137, %138, %139, %140 in 0 : vector<8x128xbf16>, vector<8x128xbf16>, vector<8x128xbf16>, vector<8x128xbf16>, vector<8x128xbf16> -> vector<40x128xbf16>
    %c1_101 = arith.constant 1 : index
    %c0_102 = arith.constant 0 : index
    %c0_103 = arith.constant 0 : index
    %142 = vector.load %arg4[%c1_101, %c0_102, %c0_103] : memref<5x128x256xbf16, #tpu.memory_space<vmem>>, vector<1x128x256xbf16>
    %143 = vector.shape_cast %142 : vector<1x128x256xbf16> to vector<128x256xbf16>
    %cst_104 = arith.constant dense<0.000000e+00> : vector<40x256xf32>
    %144 = tpu.matmul %141, %143, %cst_104 {dimension_numbers = #tpu.dot_dimension_numbers<[1], [0], [0], [1], [0, 0, 1, 1], [], []>} : vector<40x128xbf16>, vector<128x256xbf16>, vector<40x256xf32> -> vector<40x256xf32>
    %145 = arith.addf %135, %144 : vector<40x256xf32>
    %146 = vector.extract_strided_slice %77 {offsets = [24, 0], sizes = [8, 128], strides = [1, 1]} : vector<112x128xbf16> to vector<8x128xbf16>
    %147 = vector.extract_strided_slice %77 {offsets = [40, 0], sizes = [8, 128], strides = [1, 1]} : vector<112x128xbf16> to vector<8x128xbf16>
    %148 = vector.extract_strided_slice %77 {offsets = [56, 0], sizes = [8, 128], strides = [1, 1]} : vector<112x128xbf16> to vector<8x128xbf16>
    %149 = vector.extract_strided_slice %77 {offsets = [72, 0], sizes = [8, 128], strides = [1, 1]} : vector<112x128xbf16> to vector<8x128xbf16>
    %150 = vector.extract_strided_slice %77 {offsets = [88, 0], sizes = [8, 128], strides = [1, 1]} : vector<112x128xbf16> to vector<8x128xbf16>
    %151 = tpu.concatenate %146, %147, %148, %149, %150 in 0 : vector<8x128xbf16>, vector<8x128xbf16>, vector<8x128xbf16>, vector<8x128xbf16>, vector<8x128xbf16> -> vector<40x128xbf16>
    %c2_105 = arith.constant 2 : index
    %c0_106 = arith.constant 0 : index
    %c0_107 = arith.constant 0 : index
    %152 = vector.load %arg4[%c2_105, %c0_106, %c0_107] : memref<5x128x256xbf16, #tpu.memory_space<vmem>>, vector<1x128x256xbf16>
    %153 = vector.shape_cast %152 : vector<1x128x256xbf16> to vector<128x256xbf16>
    %cst_108 = arith.constant dense<0.000000e+00> : vector<40x256xf32>
    %154 = tpu.matmul %151, %153, %cst_108 {dimension_numbers = #tpu.dot_dimension_numbers<[1], [0], [0], [1], [0, 0, 1, 1], [], []>} : vector<40x128xbf16>, vector<128x256xbf16>, vector<40x256xf32> -> vector<40x256xf32>
    %155 = arith.addf %145, %154 : vector<40x256xf32>
    %156 = vector.extract_strided_slice %77 {offsets = [32, 0], sizes = [8, 128], strides = [1, 1]} : vector<112x128xbf16> to vector<8x128xbf16>
    %157 = vector.extract_strided_slice %77 {offsets = [48, 0], sizes = [8, 128], strides = [1, 1]} : vector<112x128xbf16> to vector<8x128xbf16>
    %158 = vector.extract_strided_slice %77 {offsets = [64, 0], sizes = [8, 128], strides = [1, 1]} : vector<112x128xbf16> to vector<8x128xbf16>
    %159 = vector.extract_strided_slice %77 {offsets = [80, 0], sizes = [8, 128], strides = [1, 1]} : vector<112x128xbf16> to vector<8x128xbf16>
    %160 = vector.extract_strided_slice %77 {offsets = [96, 0], sizes = [8, 128], strides = [1, 1]} : vector<112x128xbf16> to vector<8x128xbf16>
    %161 = tpu.concatenate %156, %157, %158, %159, %160 in 0 : vector<8x128xbf16>, vector<8x128xbf16>, vector<8x128xbf16>, vector<8x128xbf16>, vector<8x128xbf16> -> vector<40x128xbf16>
    %c3_109 = arith.constant 3 : index
    %c0_110 = arith.constant 0 : index
    %c0_111 = arith.constant 0 : index
    %162 = vector.load %arg4[%c3_109, %c0_110, %c0_111] : memref<5x128x256xbf16, #tpu.memory_space<vmem>>, vector<1x128x256xbf16>
    %163 = vector.shape_cast %162 : vector<1x128x256xbf16> to vector<128x256xbf16>
    %cst_112 = arith.constant dense<0.000000e+00> : vector<40x256xf32>
    %164 = tpu.matmul %161, %163, %cst_112 {dimension_numbers = #tpu.dot_dimension_numbers<[1], [0], [0], [1], [0, 0, 1, 1], [], []>} : vector<40x128xbf16>, vector<128x256xbf16>, vector<40x256xf32> -> vector<40x256xf32>
    %165 = arith.addf %155, %164 : vector<40x256xf32>
    %166 = vector.extract_strided_slice %77 {offsets = [40, 0], sizes = [8, 128], strides = [1, 1]} : vector<112x128xbf16> to vector<8x128xbf16>
    %167 = vector.extract_strided_slice %77 {offsets = [56, 0], sizes = [8, 128], strides = [1, 1]} : vector<112x128xbf16> to vector<8x128xbf16>
    %168 = vector.extract_strided_slice %77 {offsets = [72, 0], sizes = [8, 128], strides = [1, 1]} : vector<112x128xbf16> to vector<8x128xbf16>
    %169 = vector.extract_strided_slice %77 {offsets = [88, 0], sizes = [8, 128], strides = [1, 1]} : vector<112x128xbf16> to vector<8x128xbf16>
    %170 = vector.extract_strided_slice %77 {offsets = [104, 0], sizes = [8, 128], strides = [1, 1]} : vector<112x128xbf16> to vector<8x128xbf16>
    %171 = tpu.concatenate %166, %167, %168, %169, %170 in 0 : vector<8x128xbf16>, vector<8x128xbf16>, vector<8x128xbf16>, vector<8x128xbf16>, vector<8x128xbf16> -> vector<40x128xbf16>
    %c4_113 = arith.constant 4 : index
    %c0_114 = arith.constant 0 : index
    %c0_115 = arith.constant 0 : index
    %172 = vector.load %arg4[%c4_113, %c0_114, %c0_115] : memref<5x128x256xbf16, #tpu.memory_space<vmem>>, vector<1x128x256xbf16>
    %173 = vector.shape_cast %172 : vector<1x128x256xbf16> to vector<128x256xbf16>
    %cst_116 = arith.constant dense<0.000000e+00> : vector<40x256xf32>
    %174 = tpu.matmul %171, %173, %cst_116 {dimension_numbers = #tpu.dot_dimension_numbers<[1], [0], [0], [1], [0, 0, 1, 1], [], []>} : vector<40x128xbf16>, vector<128x256xbf16>, vector<40x256xf32> -> vector<40x256xf32>
    %175 = arith.addf %165, %174 : vector<40x256xf32>
    %176 = arith.maximumf %126, %175 : vector<40x256xf32>
    %177 = vector.extract_strided_slice %176 {offsets = [0, 0], sizes = [40, 128], strides = [1, 1]} : vector<40x256xf32> to vector<40x128xf32>
    %178 = vector.extract_strided_slice %176 {offsets = [0, 128], sizes = [40, 128], strides = [1, 1]} : vector<40x256xf32> to vector<40x128xf32>
    %179 = arith.maximumf %177, %178 : vector<40x128xf32>
    %c0_117 = arith.constant 0 : index
    %c0_118 = arith.constant 0 : index
    %180 = vector.load %arg5[%c0_117, %c0_118] : memref<1x128xf32, #tpu.memory_space<vmem>>, vector<1x128xf32>
    %181 = vector.broadcast %180 : vector<1x128xf32> to vector<40x128xf32>
    %182 = arith.addf %179, %181 : vector<40x128xf32>
    %cst_119 = arith.constant 0.000000e+00 : f32
    %183 = vector.broadcast %cst_119 : f32 to vector<40x128xf32>
    %184 = arith.maximumf %182, %183 : vector<40x128xf32>
    %185 = arith.truncf %184 : vector<40x128xf32> to vector<40x128xbf16>
    %186 = vector.extract_strided_slice %185 {offsets = [0, 0], sizes = [8, 128], strides = [1, 1]} : vector<40x128xbf16> to vector<8x128xbf16>
    %c0_120 = arith.constant 0 : index
    %c0_121 = arith.constant 0 : index
    %c0_122 = arith.constant 0 : index
    %187 = vector.load %arg6[%c0_120, %c0_121, %c0_122] : memref<5x128x128xbf16, #tpu.memory_space<vmem>>, vector<1x128x128xbf16>
    %188 = vector.shape_cast %187 : vector<1x128x128xbf16> to vector<128x128xbf16>
    %cst_123 = arith.constant dense<0.000000e+00> : vector<8x128xf32>
    %189 = tpu.matmul %186, %188, %cst_123 {dimension_numbers = #tpu.dot_dimension_numbers<[1], [0], [0], [1], [0, 0, 1, 1], [], []>} : vector<8x128xbf16>, vector<128x128xbf16>, vector<8x128xf32> -> vector<8x128xf32>
    %190 = vector.extract_strided_slice %185 {offsets = [8, 0], sizes = [8, 128], strides = [1, 1]} : vector<40x128xbf16> to vector<8x128xbf16>
    %c1_124 = arith.constant 1 : index
    %c0_125 = arith.constant 0 : index
    %c0_126 = arith.constant 0 : index
    %191 = vector.load %arg6[%c1_124, %c0_125, %c0_126] : memref<5x128x128xbf16, #tpu.memory_space<vmem>>, vector<1x128x128xbf16>
    %192 = vector.shape_cast %191 : vector<1x128x128xbf16> to vector<128x128xbf16>
    %cst_127 = arith.constant dense<0.000000e+00> : vector<8x128xf32>
    %193 = tpu.matmul %190, %192, %cst_127 {dimension_numbers = #tpu.dot_dimension_numbers<[1], [0], [0], [1], [0, 0, 1, 1], [], []>} : vector<8x128xbf16>, vector<128x128xbf16>, vector<8x128xf32> -> vector<8x128xf32>
    %194 = arith.addf %189, %193 : vector<8x128xf32>
    %195 = vector.extract_strided_slice %185 {offsets = [16, 0], sizes = [8, 128], strides = [1, 1]} : vector<40x128xbf16> to vector<8x128xbf16>
    %c2_128 = arith.constant 2 : index
    %c0_129 = arith.constant 0 : index
    %c0_130 = arith.constant 0 : index
    %196 = vector.load %arg6[%c2_128, %c0_129, %c0_130] : memref<5x128x128xbf16, #tpu.memory_space<vmem>>, vector<1x128x128xbf16>
    %197 = vector.shape_cast %196 : vector<1x128x128xbf16> to vector<128x128xbf16>
    %cst_131 = arith.constant dense<0.000000e+00> : vector<8x128xf32>
    %198 = tpu.matmul %195, %197, %cst_131 {dimension_numbers = #tpu.dot_dimension_numbers<[1], [0], [0], [1], [0, 0, 1, 1], [], []>} : vector<8x128xbf16>, vector<128x128xbf16>, vector<8x128xf32> -> vector<8x128xf32>
    %199 = arith.addf %194, %198 : vector<8x128xf32>
    %200 = vector.extract_strided_slice %185 {offsets = [24, 0], sizes = [8, 128], strides = [1, 1]} : vector<40x128xbf16> to vector<8x128xbf16>
    %c3_132 = arith.constant 3 : index
    %c0_133 = arith.constant 0 : index
    %c0_134 = arith.constant 0 : index
    %201 = vector.load %arg6[%c3_132, %c0_133, %c0_134] : memref<5x128x128xbf16, #tpu.memory_space<vmem>>, vector<1x128x128xbf16>
    %202 = vector.shape_cast %201 : vector<1x128x128xbf16> to vector<128x128xbf16>
    %cst_135 = arith.constant dense<0.000000e+00> : vector<8x128xf32>
    %203 = tpu.matmul %200, %202, %cst_135 {dimension_numbers = #tpu.dot_dimension_numbers<[1], [0], [0], [1], [0, 0, 1, 1], [], []>} : vector<8x128xbf16>, vector<128x128xbf16>, vector<8x128xf32> -> vector<8x128xf32>
    %204 = arith.addf %199, %203 : vector<8x128xf32>
    %205 = vector.extract_strided_slice %185 {offsets = [32, 0], sizes = [8, 128], strides = [1, 1]} : vector<40x128xbf16> to vector<8x128xbf16>
    %c4_136 = arith.constant 4 : index
    %c0_137 = arith.constant 0 : index
    %c0_138 = arith.constant 0 : index
    %206 = vector.load %arg6[%c4_136, %c0_137, %c0_138] : memref<5x128x128xbf16, #tpu.memory_space<vmem>>, vector<1x128x128xbf16>
    %207 = vector.shape_cast %206 : vector<1x128x128xbf16> to vector<128x128xbf16>
    %cst_139 = arith.constant dense<0.000000e+00> : vector<8x128xf32>
    %208 = tpu.matmul %205, %207, %cst_139 {dimension_numbers = #tpu.dot_dimension_numbers<[1], [0], [0], [1], [0, 0, 1, 1], [], []>} : vector<8x128xbf16>, vector<128x128xbf16>, vector<8x128xf32> -> vector<8x128xf32>
    %209 = arith.addf %204, %208 : vector<8x128xf32>
    %c0_140 = arith.constant 0 : index
    %c0_141 = arith.constant 0 : index
    %210 = vector.load %arg7[%c0_140, %c0_141] : memref<1x128xf32, #tpu.memory_space<vmem>>, vector<1x128xf32>
    %211 = vector.broadcast %210 : vector<1x128xf32> to vector<8x128xf32>
    %212 = arith.addf %209, %211 : vector<8x128xf32>
    %cst_142 = arith.constant 0.000000e+00 : f32
    %213 = vector.broadcast %cst_142 : f32 to vector<8x128xf32>
    %214 = arith.maximumf %212, %213 : vector<8x128xf32>
    %215 = arith.truncf %214 : vector<8x128xf32> to vector<8x128xbf16>
    %c0_143 = arith.constant 0 : index
    %c0_144 = arith.constant 0 : index
    %216 = vector.load %arg8[%c0_143, %c0_144] : memref<128x128xbf16, #tpu.memory_space<vmem>>, vector<128x128xbf16>
    %cst_145 = arith.constant dense<0.000000e+00> : vector<8x128xf32>
    %217 = tpu.matmul %215, %216, %cst_145 {dimension_numbers = #tpu.dot_dimension_numbers<[1], [0], [0], [1], [0, 0, 1, 1], [], []>} : vector<8x128xbf16>, vector<128x128xbf16>, vector<8x128xf32> -> vector<8x128xf32>
    %c0_146 = arith.constant 0 : index
    %c0_147 = arith.constant 0 : index
    %218 = vector.load %arg9[%c0_146, %c0_147] : memref<1x128xf32, #tpu.memory_space<vmem>>, vector<1x128xf32>
    %219 = vector.broadcast %218 : vector<1x128xf32> to vector<8x128xf32>
    %220 = arith.addf %217, %219 : vector<8x128xf32>
    %cst_148 = arith.constant 0.000000e+00 : f32
    %221 = vector.broadcast %cst_148 : f32 to vector<8x128xf32>
    %222 = arith.maximumf %220, %221 : vector<8x128xf32>
    %223 = arith.truncf %222 : vector<8x128xf32> to vector<8x128xbf16>
    %c0_149 = arith.constant 0 : index
    %c0_150 = arith.constant 0 : index
    %224 = vector.load %arg10[%c0_149, %c0_150] : memref<128x128xbf16, #tpu.memory_space<vmem>>, vector<128x128xbf16>
    %cst_151 = arith.constant dense<0.000000e+00> : vector<8x128xf32>
    %225 = tpu.matmul %223, %224, %cst_151 {dimension_numbers = #tpu.dot_dimension_numbers<[1], [0], [0], [1], [0, 0, 1, 1], [], []>} : vector<8x128xbf16>, vector<128x128xbf16>, vector<8x128xf32> -> vector<8x128xf32>
    %c0_152 = arith.constant 0 : index
    %c0_153 = arith.constant 0 : index
    %226 = vector.load %arg11[%c0_152, %c0_153] : memref<1x128xf32, #tpu.memory_space<vmem>>, vector<1x128xf32>
    %227 = vector.broadcast %226 : vector<1x128xf32> to vector<8x128xf32>
    %228 = arith.addf %225, %227 : vector<8x128xf32>
    %c0_154 = arith.constant 0 : index
    %c0_155 = arith.constant 0 : index
    %229 = vector.load %arg12[%c0_154, %c0_155] : memref<8x128xf32, #tpu.memory_space<vmem>>, vector<8x128xf32>
    tpu.vector_store %arg12[%c0_154, %c0_155], %228 {strides = array<i32>} : memref<8x128xf32, #tpu.memory_space<vmem>>, vector<8x128xf32>,
    return
  }
  func.func @transform_0(%arg0: i32) -> (i32, i32, i32, i32) {
    %c0_i32 = arith.constant 0 : i32
    %c0_i32_0 = arith.constant 0 : i32
    %c0_i32_1 = arith.constant 0 : i32
    %c0_i32_2 = arith.constant 0 : i32
    return %c0_i32, %c0_i32_0, %arg0, %c0_i32_1 : i32, i32, i32, i32
  }
  func.func @transform_1(%arg0: i32) -> (i32, i32, i32) {
    %c0_i32 = arith.constant 0 : i32
    %c0_i32_0 = arith.constant 0 : i32
    %c0_i32_1 = arith.constant 0 : i32
    %c0_i32_2 = arith.constant 0 : i32
    return %c0_i32, %c0_i32_0, %c0_i32_1 : i32, i32, i32
  }
  func.func @transform_2(%arg0: i32) -> (i32, i32) {
    %c0_i32 = arith.constant 0 : i32
    %c0_i32_0 = arith.constant 0 : i32
    %c0_i32_1 = arith.constant 0 : i32
    return %c0_i32, %c0_i32_0 : i32, i32
  }
  func.func @transform_3(%arg0: i32) -> (i32, i32, i32) {
    %c0_i32 = arith.constant 0 : i32
    %c0_i32_0 = arith.constant 0 : i32
    %c0_i32_1 = arith.constant 0 : i32
    %c0_i32_2 = arith.constant 0 : i32
    return %c0_i32, %c0_i32_0, %c0_i32_1 : i32, i32, i32
  }
  func.func @transform_4(%arg0: i32) -> (i32, i32) {
    %c0_i32 = arith.constant 0 : i32
    %c0_i32_0 = arith.constant 0 : i32
    %c0_i32_1 = arith.constant 0 : i32
    return %c0_i32, %c0_i32_0 : i32, i32
  }
  func.func @transform_5(%arg0: i32) -> (i32, i32, i32) {
    %c0_i32 = arith.constant 0 : i32
    %c0_i32_0 = arith.constant 0 : i32
    %c0_i32_1 = arith.constant 0 : i32
    %c0_i32_2 = arith.constant 0 : i32
    return %c0_i32, %c0_i32_0, %c0_i32_1 : i32, i32, i32
  }
  func.func @transform_6(%arg0: i32) -> (i32, i32) {
    %c0_i32 = arith.constant 0 : i32
    %c0_i32_0 = arith.constant 0 : i32
    %c0_i32_1 = arith.constant 0 : i32
    return %c0_i32, %c0_i32_0 : i32, i32
  }
  func.func @transform_7(%arg0: i32) -> (i32, i32) {
    %c0_i32 = arith.constant 0 : i32
    %c0_i32_0 = arith.constant 0 : i32
    %c0_i32_1 = arith.constant 0 : i32
    return %c0_i32, %c0_i32_0 : i32, i32
  }
  func.func @transform_8(%arg0: i32) -> (i32, i32) {
    %c0_i32 = arith.constant 0 : i32
    %c0_i32_0 = arith.constant 0 : i32
    %c0_i32_1 = arith.constant 0 : i32
    return %c0_i32, %c0_i32_0 : i32, i32
  }
  func.func @transform_9(%arg0: i32) -> (i32, i32) {
    %c0_i32 = arith.constant 0 : i32
    %c0_i32_0 = arith.constant 0 : i32
    %c0_i32_1 = arith.constant 0 : i32
    return %c0_i32, %c0_i32_0 : i32, i32
  }
  func.func @transform_10(%arg0: i32) -> (i32, i32) {
    %c0_i32 = arith.constant 0 : i32
    %c0_i32_0 = arith.constant 0 : i32
    %c0_i32_1 = arith.constant 0 : i32
    return %c0_i32, %c0_i32_0 : i32, i32
  }
  func.func @transform_11(%arg0: i32) -> (i32, i32) {
    %c0_i32 = arith.constant 0 : i32
    %c0_i32_0 = arith.constant 0 : i32
    return %arg0, %c0_i32 : i32, i32
  }
}

</mosaic_0001>

<llo_original>
// kernel: lenet_forward.1
$region0: #{lenet_forward.1}
  #allocation0 [shape = 'u32[]', space=smem, size = 0x4, offset = 0x4, fixed_abs, tag = 'smem constant byte address 0x4 - core index']
  #allocation1 [shape = 'u32[144,128]{1,0:T(1,128)}', space=vmem, size = 0x12000, scoped, tag = 'internal scratch']
  %s0 = inlined_call_operand.vmem [shape: bf16[2,16,8,128], index: 0, kind: input, shape index: {}]
  %s1 = inlined_call_operand.vmem [shape: bf16[5,128,256], index: 1, kind: input, shape index: {}]
  %s2 = inlined_call_operand.vmem [shape: f32[1,128], index: 2, kind: input, shape index: {}]
  %s3 = inlined_call_operand.hbm [shape: bf16[5,128,256], index: 3, kind: input, shape index: {}]
  %s4 = inlined_call_operand.vmem [shape: f32[1,128], index: 4, kind: input, shape index: {}]
  %s5 = inlined_call_operand.vmem [shape: bf16[5,128,128], index: 5, kind: input, shape index: {}]
  %s6 = inlined_call_operand.vmem [shape: f32[1,128], index: 6, kind: input, shape index: {}]
  %s7 = inlined_call_operand.vmem [shape: bf16[128,128], index: 7, kind: input, shape index: {}]
  %s8 = inlined_call_operand.vmem [shape: f32[1,128], index: 8, kind: input, shape index: {}]
  %s9 = inlined_call_operand.hbm [shape: bf16[128,128], index: 9, kind: input, shape index: {}]
  %s10 = inlined_call_operand.vmem [shape: f32[1,128], index: 10, kind: input, shape index: {}]
  %s11 = inlined_call_operand.vmem [shape: f32[8,128], index: 11, kind: output, shape index: {}]
  %s12 = sld [smem:[#allocation0]]
  $region62: #{lenet_forward.1} parent=0
    _
  %s14 = ssub.s32 1, %s12
  %s15 = scalar_select 0, %s14, %s12
  $region1: #{lenet_forward.1} parent=0
    #allocation2 [shape = 'u8[327680]{0}', space=vmem, size = 0x50000, scoped, tag = 'input window, operand 3, single buffered']
    #allocation3 [shape = 's32[1]{0}', space=sflag, size = 0x4, scoped, tag = 'scoped memory for lenet_forward.1']
    #allocation4 [shape = 'u8[32768]{0}', space=vmem, size = 0x8000, scoped, tag = 'input window, operand 9, single buffered']
    #allocation5 [shape = 's32[1]{0}', space=sflag, size = 0x4, scoped, tag = 'scoped memory for lenet_forward.1']
    %16 = vsyncpa [#allocation3], 0
    %17 = vsyncpa [#allocation5], 0
    // Predicated region
    $region2: #{lenet_forward.1} parent=1 // pred_check
      _
    $region3: #{lenet_forward.1} parent=1 // pred_check_branch
      %19 = sbr.rel (0) target = $region5
    $region4: #{lenet_forward.1} parent=1 // pred_region
      _
    $region5: #{lenet_forward.1} parent=1 // pred_fallthru
      _
    // Predicated region
    $region6: #{lenet_forward.1} parent=1 // pred_check
      _
    $region7: #{lenet_forward.1} parent=1 // pred_check_branch
      %21 = sbr.rel (0) target = $region9
    $region8: #{lenet_forward.1} parent=1 // pred_region
      _
    $region9: #{lenet_forward.1} parent=1 // pred_fallthru
      _
    // Predicated region
    $region10: #{lenet_forward.1} parent=1 // pred_check
      _
    $region11: #{lenet_forward.1} parent=1 // pred_check_branch
      %23 = sbr.rel (0) target = $region13
    $region12: #{lenet_forward.1} parent=1 // pred_region
      _
    $region13: #{lenet_forward.1} parent=1 // pred_fallthru
      _
    // Predicated region
    $region14: #{lenet_forward.1} parent=1 // pred_check
      _
    $region15: #{lenet_forward.1} parent=1 // pred_check_branch
      %25 = sbr.rel (0) target = $region17
    $region16: #{lenet_forward.1} parent=1 // pred_region
      %s27 = ssub.s32 10240, 10240
      %28 = vsyncadd [#allocation3], %s27
      %s29 = sshll.u32 [#allocation2], 4
      %s30 = int_to_ptr.vmem [resolvable:$true] %s29
      %35 = dma.hbm_to_vmem [thread:$0]  %s3, 10240, %s30, [#allocation3], 128, 128, 8
    $region17: #{lenet_forward.1} parent=1 // pred_fallthru
      _
    // Predicated region
    $region18: #{lenet_forward.1} parent=1 // pred_check
      _
    $region19: #{lenet_forward.1} parent=1 // pred_check_branch
      %37 = sbr.rel (0) target = $region21
    $region20: #{lenet_forward.1} parent=1 // pred_region
      _
    $region21: #{lenet_forward.1} parent=1 // pred_fallthru
      _
    // Predicated region
    $region22: #{lenet_forward.1} parent=1 // pred_check
      _
    $region23: #{lenet_forward.1} parent=1 // pred_check_branch
      %39 = sbr.rel (0) target = $region25
    $region24: #{lenet_forward.1} parent=1 // pred_region
      _
    $region25: #{lenet_forward.1} parent=1 // pred_fallthru
      _
    // Predicated region
    $region26: #{lenet_forward.1} parent=1 // pred_check
      _
    $region27: #{lenet_forward.1} parent=1 // pred_check_branch
      %41 = sbr.rel (0) target = $region29
    $region28: #{lenet_forward.1} parent=1 // pred_region
      _
    $region29: #{lenet_forward.1} parent=1 // pred_fallthru
      _
    // Predicated region
    $region30: #{lenet_forward.1} parent=1 // pred_check
      _
    $region31: #{lenet_forward.1} parent=1 // pred_check_branch
      %43 = sbr.rel (0) target = $region33
    $region32: #{lenet_forward.1} parent=1 // pred_region
      _
    $region33: #{lenet_forward.1} parent=1 // pred_fallthru
      _
    // Predicated region
    $region34: #{lenet_forward.1} parent=1 // pred_check
      _
    $region35: #{lenet_forward.1} parent=1 // pred_check_branch
      %45 = sbr.rel (0) target = $region37
    $region36: #{lenet_forward.1} parent=1 // pred_region
      _
    $region37: #{lenet_forward.1} parent=1 // pred_fallthru
      _
    // Predicated region
    $region38: #{lenet_forward.1} parent=1 // pred_check
      _
    $region39: #{lenet_forward.1} parent=1 // pred_check_branch
      %47 = sbr.rel (0) target = $region41
    $region40: #{lenet_forward.1} parent=1 // pred_region
      %s49 = ssub.s32 1024, 1024
      %50 = vsyncadd [#allocation5], %s49
      %s51 = sshll.u32 [#allocation4], 4
      %s52 = int_to_ptr.vmem [resolvable:$true] %s51
      %57 = dma.hbm_to_vmem [thread:$0]  %s9, 1024, %s52, [#allocation5], 64, 64, 4
    $region41: #{lenet_forward.1} parent=1 // pred_fallthru
      _
    // Predicated region
    $region42: #{lenet_forward.1} parent=1 // pred_check
      _
    $region43: #{lenet_forward.1} parent=1 // pred_check_branch
      %59 = sbr.rel (0) target = $region45
    $region44: #{lenet_forward.1} parent=1 // pred_region
      _
    $region45: #{lenet_forward.1} parent=1 // pred_fallthru
      _
    // Predicated region
    $region46: #{lenet_forward.1} parent=1 // pred_check
      _
    $region47: #{lenet_forward.1} parent=1 // pred_check_branch
      %61 = sbr.rel (0) target = $region49
    $region48: #{lenet_forward.1} parent=1 // pred_region
      %62 = dma.done [#allocation3], 10240
    $region49: #{lenet_forward.1} parent=1 // pred_fallthru
      _
    // Predicated region
    $region50: #{lenet_forward.1} parent=1 // pred_check
      _
    $region51: #{lenet_forward.1} parent=1 // pred_check_branch
      %64 = sbr.rel (0) target = $region53
    $region52: #{lenet_forward.1} parent=1 // pred_region
      %65 = dma.done [#allocation5], 1024
    $region53: #{lenet_forward.1} parent=1 // pred_fallthru
      _
    %v67 = vld [vmem:[%s0] sm:$0xf]
    %v68 = vld [vmem:[%s0 + $0x4] sm:$0xf]
    %v69 = vld [vmem:[%s0 + $0x8] sm:$0xf]
    %v70 = vld [vmem:[%s0 + $0xc] sm:$0xf]
    %v71 = vld [vmem:[%s0 + $0x10] sm:$0xf]
    %v72 = vld [vmem:[%s0 + $0x14] sm:$0xf]
    %v73 = vld [vmem:[%s0 + $0x18] sm:$0xf]
    %v74 = vld [vmem:[%s0 + $0x1c] sm:$0xf]
    %v75 = vld [vmem:[%s0 + $0x20] sm:$0xf]
    %v76 = vld [vmem:[%s0 + $0x24] sm:$0xf]
    %v77 = vld [vmem:[%s0 + $0x28] sm:$0xf]
    %v78 = vld [vmem:[%s0 + $0x2c] sm:$0xf]
    %v79 = vld [vmem:[%s0 + $0x30] sm:$0xf]
    %v80 = vld [vmem:[%s0 + $0x34] sm:$0xf]
    %v81 = vld [vmem:[%s1] sm:$0xff]
    %v82 = vld [vmem:[%s1 + $0x8] sm:$0xff]
    %v83 = vld [vmem:[%s1 + $0x10] sm:$0xff]
    %v84 = vld [vmem:[%s1 + $0x18] sm:$0xff]
    %v85 = vld [vmem:[%s1 + $0x20] sm:$0xff]
    %v86 = vld [vmem:[%s1 + $0x28] sm:$0xff]
    %v87 = vld [vmem:[%s1 + $0x30] sm:$0xff]
    %v88 = vld [vmem:[%s1 + $0x38] sm:$0xff]
    %v89 = vld [vmem:[%s1 + $0x40] sm:$0xff]
    %v90 = vld [vmem:[%s1 + $0x48] sm:$0xff]
    %v91 = vld [vmem:[%s1 + $0x50] sm:$0xff]
    %v92 = vld [vmem:[%s1 + $0x58] sm:$0xff]
    %v93 = vld [vmem:[%s1 + $0x60] sm:$0xff]
    %v94 = vld [vmem:[%s1 + $0x68] sm:$0xff]
    %v95 = vld [vmem:[%s1 + $0x70] sm:$0xff]
    %v96 = vld [vmem:[%s1 + $0x78] sm:$0xff]
    %s97 = scalar_lea.vmem %s0, 64
    %v98 = vld [vmem:[%s97] sm:$0xf]
    %v99 = vld [vmem:[%s97 + $0x4] sm:$0xf]
    %v100 = vld [vmem:[%s97 + $0x8] sm:$0xf]
    %v101 = vld [vmem:[%s97 + $0xc] sm:$0xf]
    %v102 = vld [vmem:[%s97 + $0x10] sm:$0xf]
    %v103 = vld [vmem:[%s97 + $0x14] sm:$0xf]
    %v104 = vld [vmem:[%s97 + $0x18] sm:$0xf]
    %v105 = vld [vmem:[%s97 + $0x1c] sm:$0xf]
    %v106 = vld [vmem:[%s97 + $0x20] sm:$0xf]
    %v107 = vld [vmem:[%s97 + $0x24] sm:$0xf]
    %v108 = vld [vmem:[%s97 + $0x28] sm:$0xf]
    %v109 = vld [vmem:[%s97 + $0x2c] sm:$0xf]
    %v110 = vld [vmem:[%s97 + $0x30] sm:$0xf]
    %v111 = vld [vmem:[%s97 + $0x34] sm:$0xf]
    %s112 = scalar_lea.vmem %s1, 128
    %v113 = vld [vmem:[%s112] sm:$0xff]
    %v114 = vld [vmem:[%s112 + $0x8] sm:$0xff]
    %v115 = vld [vmem:[%s112 + $0x10] sm:$0xff]
    %v116 = vld [vmem:[%s112 + $0x18] sm:$0xff]
    %v117 = vld [vmem:[%s112 + $0x20] sm:$0xff]
    %v118 = vld [vmem:[%s112 + $0x28] sm:$0xff]
    %v119 = vld [vmem:[%s112 + $0x30] sm:$0xff]
    %v120 = vld [vmem:[%s112 + $0x38] sm:$0xff]
    %v121 = vld [vmem:[%s112 + $0x40] sm:$0xff]
    %v122 = vld [vmem:[%s112 + $0x48] sm:$0xff]
    %v123 = vld [vmem:[%s112 + $0x50] sm:$0xff]
    %v124 = vld [vmem:[%s112 + $0x58] sm:$0xff]
    %v125 = vld [vmem:[%s112 + $0x60] sm:$0xff]
    %v126 = vld [vmem:[%s112 + $0x68] sm:$0xff]
    %v127 = vld [vmem:[%s112 + $0x70] sm:$0xff]
    %v128 = vld [vmem:[%s112 + $0x78] sm:$0xff]
    %v143 = vunpack.c.l.b16 %v98
    %v144 = vunpack.c.l.b16 %v99
    %v145 = vunpack.c.l.b16 %v100
    %v146 = vunpack.c.l.b16 %v101
    %v147 = vunpack.c.l.b16 %v102
    %v148 = vunpack.c.l.b16 %v103
    %v149 = vunpack.c.l.b16 %v104
    %v150 = vunpack.c.l.b16 %v105
    %v151 = vunpack.c.l.b16 %v106
    %v152 = vunpack.c.l.b16 %v107
    %v153 = vunpack.c.l.b16 %v108
    %v154 = vunpack.c.l.b16 %v109
    %v155 = vunpack.c.l.b16 %v110
    %v156 = vunpack.c.l.b16 %v111
    %v157 = vpack.c.b16 %v144, %v143
    %v158 = vpack.c.b16 %v146, %v145
    %v159 = vpack.c.b16 %v148, %v147
    %v160 = vpack.c.b16 %v150, %v149
    %v161 = vpack.c.b16 %v152, %v151
    %v162 = vpack.c.b16 %v154, %v153
    %v163 = vpack.c.b16 %v156, %v155
    %v187 = vunpack.c.l.b16 %v113
    %v188 = vunpack.c.h.b16 %v113
    %v189 = vunpack.c.l.b16 %v114
    %v190 = vunpack.c.h.b16 %v114
    %v191 = vunpack.c.l.b16 %v115
    %v192 = vunpack.c.h.b16 %v115
    %v193 = vunpack.c.l.b16 %v116
    %v194 = vunpack.c.h.b16 %v116
    %v195 = vunpack.c.l.b16 %v117
    %v196 = vunpack.c.h.b16 %v117
    %v197 = vunpack.c.l.b16 %v118
    %v198 = vunpack.c.h.b16 %v118
    %v199 = vunpack.c.l.b16 %v119
    %v200 = vunpack.c.h.b16 %v119
    %v201 = vunpack.c.l.b16 %v120
    %v202 = vunpack.c.h.b16 %v120
    %v203 = vunpack.c.l.b16 %v121
    %v204 = vunpack.c.h.b16 %v121
    %v205 = vunpack.c.l.b16 %v122
    %v206 = vunpack.c.h.b16 %v122
    %v207 = vunpack.c.l.b16 %v123
    %v208 = vunpack.c.h.b16 %v123
    %v209 = vunpack.c.l.b16 %v124
    %v210 = vunpack.c.h.b16 %v124
    %v211 = vunpack.c.l.b16 %v125
    %v212 = vunpack.c.h.b16 %v125
    %v213 = vunpack.c.l.b16 %v126
    %v214 = vunpack.c.h.b16 %v126
    %v215 = vunpack.c.l.b16 %v127
    %v216 = vunpack.c.h.b16 %v127
    %v217 = vunpack.c.l.b16 %v128
    %v218 = vunpack.c.h.b16 %v128
    %v219 = vpack.c.b16 %v189, %v187
    %v220 = vpack.c.b16 %v190, %v188
    %v221 = vpack.c.b16 %v193, %v191
    %v222 = vpack.c.b16 %v194, %v192
    %v223 = vpack.c.b16 %v197, %v195
    %v224 = vpack.c.b16 %v198, %v196
    %v225 = vpack.c.b16 %v201, %v199
    %v226 = vpack.c.b16 %v202, %v200
    %v227 = vpack.c.b16 %v205, %v203
    %v228 = vpack.c.b16 %v206, %v204
    %v229 = vpack.c.b16 %v209, %v207
    %v230 = vpack.c.b16 %v210, %v208
    %v231 = vpack.c.b16 %v213, %v211
    %v232 = vpack.c.b16 %v214, %v212
    %v233 = vpack.c.b16 %v217, %v215
    %v234 = vpack.c.b16 %v218, %v216
    %251 = vmatprep.subr.bf16.mxu0 %v220
    %252 = vmatpush1.bf16.msra.mxu0 %v219
    %253 = vmatprep.subr.bf16.mxu0 %v222
    %254 = vmatpush1.bf16.msra.mxu0 %v221
    %255 = vmatprep.subr.bf16.mxu0 %v224
    %256 = vmatpush1.bf16.msra.mxu0 %v223
    %257 = vmatprep.subr.bf16.mxu0 %v226
    %258 = vmatpush1.bf16.msra.mxu0 %v225
    %259 = vmatprep.subr.bf16.mxu0 %v228
    %260 = vmatpush1.bf16.msra.mxu0 %v227
    %261 = vmatprep.subr.bf16.mxu0 %v230
    %262 = vmatpush1.bf16.msra.mxu0 %v229
    %263 = vmatprep.subr.bf16.mxu0 %v232
    %264 = vmatpush1.bf16.msra.mxu0 %v231
    %265 = vmatprep.subr.bf16.mxu0 %v234
    %266 = vmatpush1.bf16.msra.mxu0 %v233
    %267 = vmatprep.subr.bf16.mxu0 0
    %268 = vmatpush1.bf16.msra.mxu0 0
    %269 = vmatprep.subr.bf16.mxu0 0
    %270 = vmatpush1.bf16.msra.mxu0 0
    %271 = vmatprep.subr.bf16.mxu0 0
    %272 = vmatpush1.bf16.msra.mxu0 0
    %273 = vmatprep.subr.bf16.mxu0 0
    %274 = vmatpush1.bf16.msra.mxu0 0
    %275 = vmatprep.subr.bf16.mxu0 0
    %276 = vmatpush1.bf16.msra.mxu0 0
    %277 = vmatprep.subr.bf16.mxu0 0
    %278 = vmatpush1.bf16.msra.mxu0 0
    %279 = vmatprep.subr.bf16.mxu0 0
    %280 = vmatpush1.bf16.msra.mxu0 0
    %281 = vmatprep.subr.bf16.mxu0 0
    %282 = vmatpush1.bf16.msra.mxu0 0
    %283 = vmatprep.mubr.bf16.mxu0 0
    %284 = vmatmul.mubr.bf16.gmra.mrb[0].mxu0 %v157
    %v285 = vpop.f32.mrb[0].mxu0
    %v286 = vadd.f32 0.0, %v285
    %v287 = vpop.f32.mrb[0].mxu0
    %v288 = vadd.f32 0.0, %v287
    %v289 = vpop.f32.mrb[0].mxu0
    %v290 = vadd.f32 0.0, %v289
    %v291 = vpop.f32.mrb[0].mxu0
    %v292 = vadd.f32 0.0, %v291
    %293 = vmatprep.mubr.bf16.mxu0 0
    %294 = vmatmul.mubr.bf16.gmra.mrb[0].mxu0 %v158
    %v295 = vpop.f32.mrb[0].mxu0
    %v296 = vadd.f32 0.0, %v295
    %v297 = vpop.f32.mrb[0].mxu0
    %v298 = vadd.f32 0.0, %v297
    %v299 = vpop.f32.mrb[0].mxu0
    %v300 = vadd.f32 0.0, %v299
    %v301 = vpop.f32.mrb[0].mxu0
    %v302 = vadd.f32 0.0, %v301
    %303 = vmatprep.mubr.bf16.mxu0 0
    %304 = vmatmul.mubr.bf16.gmra.mrb[0].mxu0 %v159
    %v305 = vpop.f32.mrb[0].mxu0
    %v306 = vadd.f32 0.0, %v305
    %v307 = vpop.f32.mrb[0].mxu0
    %v308 = vadd.f32 0.0, %v307
    %v309 = vpop.f32.mrb[0].mxu0
    %v310 = vadd.f32 0.0, %v309
    %v311 = vpop.f32.mrb[0].mxu0
    %v312 = vadd.f32 0.0, %v311
    %313 = vmatprep.mubr.bf16.mxu0 0
    %314 = vmatmul.mubr.bf16.gmra.mrb[0].mxu0 %v160
    %v315 = vpop.f32.mrb[0].mxu0
    %v316 = vadd.f32 0.0, %v315
    %v317 = vpop.f32.mrb[0].mxu0
    %v318 = vadd.f32 0.0, %v317
    %v319 = vpop.f32.mrb[0].mxu0
    %v320 = vadd.f32 0.0, %v319
    %v321 = vpop.f32.mrb[0].mxu0
    %v322 = vadd.f32 0.0, %v321
    %323 = vmatprep.mubr.bf16.mxu0 0
    %324 = vmatmul.mubr.bf16.gmra.mrb[0].mxu0 %v161
    %v325 = vpop.f32.mrb[0].mxu0
    %v326 = vadd.f32 0.0, %v325
    %v327 = vpop.f32.mrb[0].mxu0
    %v328 = vadd.f32 0.0, %v327
    %v329 = vpop.f32.mrb[0].mxu0
    %v330 = vadd.f32 0.0, %v329
    %v331 = vpop.f32.mrb[0].mxu0
    %v332 = vadd.f32 0.0, %v331
    %333 = vmatprep.mubr.bf16.mxu0 0
    %334 = vmatmul.mubr.bf16.gmra.mrb[0].mxu0 %v162
    %v335 = vpop.f32.mrb[0].mxu0
    %v336 = vadd.f32 0.0, %v335
    %v337 = vpop.f32.mrb[0].mxu0
    %v338 = vadd.f32 0.0, %v337
    %v339 = vpop.f32.mrb[0].mxu0
    %v340 = vadd.f32 0.0, %v339
    %v341 = vpop.f32.mrb[0].mxu0
    %v342 = vadd.f32 0.0, %v341
    %343 = vmatprep.mubr.bf16.mxu0 0
    %344 = vmatmul.mubr.bf16.gmra.mrb[0].mxu0 %v163
    %v345 = vpop.f32.mrb[0].mxu0
    %v346 = vadd.f32 0.0, %v345
    %v347 = vpop.f32.mrb[0].mxu0
    %v348 = vadd.f32 0.0, %v347
    %v349 = vpop.f32.mrb[0].mxu0
    %v350 = vadd.f32 0.0, %v349
    %v351 = vpop.f32.mrb[0].mxu0
    %v352 = vadd.f32 0.0, %v351
    %353 = vdwg.mxu0
    %v368 = vunpack.c.l.b16 %v67
    %v369 = vunpack.c.l.b16 %v68
    %v370 = vunpack.c.l.b16 %v69
    %v371 = vunpack.c.l.b16 %v70
    %v372 = vunpack.c.l.b16 %v71
    %v373 = vunpack.c.l.b16 %v72
    %v374 = vunpack.c.l.b16 %v73
    %v375 = vunpack.c.l.b16 %v74
    %v376 = vunpack.c.l.b16 %v75
    %v377 = vunpack.c.l.b16 %v76
    %v378 = vunpack.c.l.b16 %v77
    %v379 = vunpack.c.l.b16 %v78
    %v380 = vunpack.c.l.b16 %v79
    %v381 = vunpack.c.l.b16 %v80
    %v382 = vpack.c.b16 %v369, %v368
    %v383 = vpack.c.b16 %v371, %v370
    %v384 = vpack.c.b16 %v373, %v372
    %v385 = vpack.c.b16 %v375, %v374
    %v386 = vpack.c.b16 %v377, %v376
    %v387 = vpack.c.b16 %v379, %v378
    %v388 = vpack.c.b16 %v381, %v380
    %v412 = vunpack.c.l.b16 %v81
    %v413 = vunpack.c.h.b16 %v81
    %v414 = vunpack.c.l.b16 %v82
    %v415 = vunpack.c.h.b16 %v82
    %v416 = vunpack.c.l.b16 %v83
    %v417 = vunpack.c.h.b16 %v83
    %v418 = vunpack.c.l.b16 %v84
    %v419 = vunpack.c.h.b16 %v84
    %v420 = vunpack.c.l.b16 %v85
    %v421 = vunpack.c.h.b16 %v85
    %v422 = vunpack.c.l.b16 %v86
    %v423 = vunpack.c.h.b16 %v86
    %v424 = vunpack.c.l.b16 %v87
    %v425 = vunpack.c.h.b16 %v87
    %v426 = vunpack.c.l.b16 %v88
    %v427 = vunpack.c.h.b16 %v88
    %v428 = vunpack.c.l.b16 %v89
    %v429 = vunpack.c.h.b16 %v89
    %v430 = vunpack.c.l.b16 %v90
    %v431 = vunpack.c.h.b16 %v90
    %v432 = vunpack.c.l.b16 %v91
    %v433 = vunpack.c.h.b16 %v91
    %v434 = vunpack.c.l.b16 %v92
    %v435 = vunpack.c.h.b16 %v92
    %v436 = vunpack.c.l.b16 %v93
    %v437 = vunpack.c.h.b16 %v93
    %v438 = vunpack.c.l.b16 %v94
    %v439 = vunpack.c.h.b16 %v94
    %v440 = vunpack.c.l.b16 %v95
    %v441 = vunpack.c.h.b16 %v95
    %v442 = vunpack.c.l.b16 %v96
    %v443 = vunpack.c.h.b16 %v96
    %v444 = vpack.c.b16 %v414, %v412
    %v445 = vpack.c.b16 %v415, %v413
    %v446 = vpack.c.b16 %v418, %v416
    %v447 = vpack.c.b16 %v419, %v417
    %v448 = vpack.c.b16 %v422, %v420
    %v449 = vpack.c.b16 %v423, %v421
    %v450 = vpack.c.b16 %v426, %v424
    %v451 = vpack.c.b16 %v427, %v425
    %v452 = vpack.c.b16 %v430, %v428
    %v453 = vpack.c.b16 %v431, %v429
    %v454 = vpack.c.b16 %v434, %v432
    %v455 = vpack.c.b16 %v435, %v433
    %v456 = vpack.c.b16 %v438, %v436
    %v457 = vpack.c.b16 %v439, %v437
    %v458 = vpack.c.b16 %v442, %v440
    %v459 = vpack.c.b16 %v443, %v441
    %476 = vmatprep.subr.bf16.mxu0 %v445
    %477 = vmatpush1.bf16.msra.mxu0 %v444
    %478 = vmatprep.subr.bf16.mxu0 %v447
    %479 = vmatpush1.bf16.msra.mxu0 %v446
    %480 = vmatprep.subr.bf16.mxu0 %v449
    %481 = vmatpush1.bf16.msra.mxu0 %v448
    %482 = vmatprep.subr.bf16.mxu0 %v451
    %483 = vmatpush1.bf16.msra.mxu0 %v450
    %484 = vmatprep.subr.bf16.mxu0 %v453
    %485 = vmatpush1.bf16.msra.mxu0 %v452
    %486 = vmatprep.subr.bf16.mxu0 %v455
    %487 = vmatpush1.bf16.msra.mxu0 %v454
    %488 = vmatprep.subr.bf16.mxu0 %v457
    %489 = vmatpush1.bf16.msra.mxu0 %v456
    %490 = vmatprep.subr.bf16.mxu0 %v459
    %491 = vmatpush1.bf16.msra.mxu0 %v458
    %492 = vmatprep.subr.bf16.mxu0 0
    %493 = vmatpush1.bf16.msra.mxu0 0
    %494 = vmatprep.subr.bf16.mxu0 0
    %495 = vmatpush1.bf16.msra.mxu0 0
    %496 = vmatprep.subr.bf16.mxu0 0
    %497 = vmatpush1.bf16.msra.mxu0 0
    %498 = vmatprep.subr.bf16.mxu0 0
    %499 = vmatpush1.bf16.msra.mxu0 0
    %500 = vmatprep.subr.bf16.mxu0 0
    %501 = vmatpush1.bf16.msra.mxu0 0
    %502 = vmatprep.subr.bf16.mxu0 0
    %503 = vmatpush1.bf16.msra.mxu0 0
    %504 = vmatprep.subr.bf16.mxu0 0
    %505 = vmatpush1.bf16.msra.mxu0 0
    %506 = vmatprep.subr.bf16.mxu0 0
    %507 = vmatpush1.bf16.msra.mxu0 0
    %508 = vmatprep.mubr.bf16.mxu0 0
    %509 = vmatmul.mubr.bf16.gmra.mrb[0].mxu0 %v382
    %v510 = vpop.f32.mrb[0].mxu0
    %v511 = vadd.f32 %v286, %v510
    %v512 = vpop.f32.mrb[0].mxu0
    %v513 = vadd.f32 %v288, %v512
    %v514 = vpop.f32.mrb[0].mxu0
    %v515 = vadd.f32 %v290, %v514
    %v516 = vpop.f32.mrb[0].mxu0
    %v517 = vadd.f32 %v292, %v516
    %518 = vmatprep.mubr.bf16.mxu0 0
    %519 = vmatmul.mubr.bf16.gmra.mrb[0].mxu0 %v383
    %v520 = vpop.f32.mrb[0].mxu0
    %v521 = vadd.f32 %v296, %v520
    %v522 = vpop.f32.mrb[0].mxu0
    %v523 = vadd.f32 %v298, %v522
    %v524 = vpop.f32.mrb[0].mxu0
    %v525 = vadd.f32 %v300, %v524
    %v526 = vpop.f32.mrb[0].mxu0
    %v527 = vadd.f32 %v302, %v526
    %528 = vmatprep.mubr.bf16.mxu0 0
    %529 = vmatmul.mubr.bf16.gmra.mrb[0].mxu0 %v384
    %v530 = vpop.f32.mrb[0].mxu0
    %v531 = vadd.f32 %v306, %v530
    %v532 = vpop.f32.mrb[0].mxu0
    %v533 = vadd.f32 %v308, %v532
    %v534 = vpop.f32.mrb[0].mxu0
    %v535 = vadd.f32 %v310, %v534
    %v536 = vpop.f32.mrb[0].mxu0
    %v537 = vadd.f32 %v312, %v536
    %538 = vmatprep.mubr.bf16.mxu0 0
    %539 = vmatmul.mubr.bf16.gmra.mrb[0].mxu0 %v385
    %v540 = vpop.f32.mrb[0].mxu0
    %v541 = vadd.f32 %v316, %v540
    %v542 = vpop.f32.mrb[0].mxu0
    %v543 = vadd.f32 %v318, %v542
    %v544 = vpop.f32.mrb[0].mxu0
    %v545 = vadd.f32 %v320, %v544
    %v546 = vpop.f32.mrb[0].mxu0
    %v547 = vadd.f32 %v322, %v546
    %548 = vmatprep.mubr.bf16.mxu0 0
    %549 = vmatmul.mubr.bf16.gmra.mrb[0].mxu0 %v386
    %v550 = vpop.f32.mrb[0].mxu0
    %v551 = vadd.f32 %v326, %v550
    %v552 = vpop.f32.mrb[0].mxu0
    %v553 = vadd.f32 %v328, %v552
    %v554 = vpop.f32.mrb[0].mxu0
    %v555 = vadd.f32 %v330, %v554
    %v556 = vpop.f32.mrb[0].mxu0
    %v557 = vadd.f32 %v332, %v556
    %558 = vmatprep.mubr.bf16.mxu0 0
    %559 = vmatmul.mubr.bf16.gmra.mrb[0].mxu0 %v387
    %v560 = vpop.f32.mrb[0].mxu0
    %v561 = vadd.f32 %v336, %v560
    %v562 = vpop.f32.mrb[0].mxu0
    %v563 = vadd.f32 %v338, %v562
    %v564 = vpop.f32.mrb[0].mxu0
    %v565 = vadd.f32 %v340, %v564
    %v566 = vpop.f32.mrb[0].mxu0
    %v567 = vadd.f32 %v342, %v566
    %568 = vmatprep.mubr.bf16.mxu0 0
    %569 = vmatmul.mubr.bf16.gmra.mrb[0].mxu0 %v388
    %v570 = vpop.f32.mrb[0].mxu0
    %v571 = vadd.f32 %v346, %v570
    %v572 = vpop.f32.mrb[0].mxu0
    %v573 = vadd.f32 %v348, %v572
    %v574 = vpop.f32.mrb[0].mxu0
    %v575 = vadd.f32 %v350, %v574
    %v576 = vpop.f32.mrb[0].mxu0
    %v577 = vadd.f32 %v352, %v576
    %578 = vdwg.mxu0
    %s579 = scalar_lea.vmem %s0, 4
    %v580 = vld [vmem:[%s579] sm:$0xf]
    %v581 = vld [vmem:[%s579 + $0x4] sm:$0xf]
    %v582 = vld [vmem:[%s579 + $0x8] sm:$0xf]
    %v583 = vld [vmem:[%s579 + $0xc] sm:$0xf]
    %v584 = vld [vmem:[%s579 + $0x10] sm:$0xf]
    %v585 = vld [vmem:[%s579 + $0x14] sm:$0xf]
    %v586 = vld [vmem:[%s579 + $0x18] sm:$0xf]
    %v587 = vld [vmem:[%s579 + $0x1c] sm:$0xf]
    %v588 = vld [vmem:[%s579 + $0x20] sm:$0xf]
    %v589 = vld [vmem:[%s579 + $0x24] sm:$0xf]
    %v590 = vld [vmem:[%s579 + $0x28] sm:$0xf]
    %v591 = vld [vmem:[%s579 + $0x2c] sm:$0xf]
    %v592 = vld [vmem:[%s579 + $0x30] sm:$0xf]
    %v593 = vld [vmem:[%s579 + $0x34] sm:$0xf]
    %s594 = scalar_lea.vmem %s1, 256
    %v595 = vld [vmem:[%s594] sm:$0xff]
    %v596 = vld [vmem:[%s594 + $0x8] sm:$0xff]
    %v597 = vld [vmem:[%s594 + $0x10] sm:$0xff]
    %v598 = vld [vmem:[%s594 + $0x18] sm:$0xff]
    %v599 = vld [vmem:[%s594 + $0x20] sm:$0xff]
    %v600 = vld [vmem:[%s594 + $0x28] sm:$0xff]
    %v601 = vld [vmem:[%s594 + $0x30] sm:$0xff]
    %v602 = vld [vmem:[%s594 + $0x38] sm:$0xff]
    %v603 = vld [vmem:[%s594 + $0x40] sm:$0xff]
    %v604 = vld [vmem:[%s594 + $0x48] sm:$0xff]
    %v605 = vld [vmem:[%s594 + $0x50] sm:$0xff]
    %v606 = vld [vmem:[%s594 + $0x58] sm:$0xff]
    %v607 = vld [vmem:[%s594 + $0x60] sm:$0xff]
    %v608 = vld [vmem:[%s594 + $0x68] sm:$0xff]
    %v609 = vld [vmem:[%s594 + $0x70] sm:$0xff]
    %v610 = vld [vmem:[%s594 + $0x78] sm:$0xff]
    %v625 = vunpack.c.l.b16 %v580
    %v626 = vunpack.c.l.b16 %v581
    %v627 = vunpack.c.l.b16 %v582
    %v628 = vunpack.c.l.b16 %v583
    %v629 = vunpack.c.l.b16 %v584
    %v630 = vunpack.c.l.b16 %v585
    %v631 = vunpack.c.l.b16 %v586
    %v632 = vunpack.c.l.b16 %v587
    %v633 = vunpack.c.l.b16 %v588
    %v634 = vunpack.c.l.b16 %v589
    %v635 = vunpack.c.l.b16 %v590
    %v636 = vunpack.c.l.b16 %v591
    %v637 = vunpack.c.l.b16 %v592
    %v638 = vunpack.c.l.b16 %v593
    %v639 = vpack.c.b16 %v626, %v625
    %v640 = vpack.c.b16 %v628, %v627
    %v641 = vpack.c.b16 %v630, %v629
    %v642 = vpack.c.b16 %v632, %v631
    %v643 = vpack.c.b16 %v634, %v633
    %v644 = vpack.c.b16 %v636, %v635
    %v645 = vpack.c.b16 %v638, %v637
    %v669 = vunpack.c.l.b16 %v595
    %v670 = vunpack.c.h.b16 %v595
    %v671 = vunpack.c.l.b16 %v596
    %v672 = vunpack.c.h.b16 %v596
    %v673 = vunpack.c.l.b16 %v597
    %v674 = vunpack.c.h.b16 %v597
    %v675 = vunpack.c.l.b16 %v598
    %v676 = vunpack.c.h.b16 %v598
    %v677 = vunpack.c.l.b16 %v599
    %v678 = vunpack.c.h.b16 %v599
    %v679 = vunpack.c.l.b16 %v600
    %v680 = vunpack.c.h.b16 %v600
    %v681 = vunpack.c.l.b16 %v601
    %v682 = vunpack.c.h.b16 %v601
    %v683 = vunpack.c.l.b16 %v602
    %v684 = vunpack.c.h.b16 %v602
    %v685 = vunpack.c.l.b16 %v603
    %v686 = vunpack.c.h.b16 %v603
    %v687 = vunpack.c.l.b16 %v604
    %v688 = vunpack.c.h.b16 %v604
    %v689 = vunpack.c.l.b16 %v605
    %v690 = vunpack.c.h.b16 %v605
    %v691 = vunpack.c.l.b16 %v606
    %v692 = vunpack.c.h.b16 %v606
    %v693 = vunpack.c.l.b16 %v607
    %v694 = vunpack.c.h.b16 %v607
    %v695 = vunpack.c.l.b16 %v608
    %v696 = vunpack.c.h.b16 %v608
    %v697 = vunpack.c.l.b16 %v609
    %v698 = vunpack.c.h.b16 %v609
    %v699 = vunpack.c.l.b16 %v610
    %v700 = vunpack.c.h.b16 %v610
    %v701 = vpack.c.b16 %v671, %v669
    %v702 = vpack.c.b16 %v672, %v670
    %v703 = vpack.c.b16 %v675, %v673
    %v704 = vpack.c.b16 %v676, %v674
    %v705 = vpack.c.b16 %v679, %v677
    %v706 = vpack.c.b16 %v680, %v678
    %v707 = vpack.c.b16 %v683, %v681
    %v708 = vpack.c.b16 %v684, %v682
    %v709 = vpack.c.b16 %v687, %v685
    %v710 = vpack.c.b16 %v688, %v686
    %v711 = vpack.c.b16 %v691, %v689
    %v712 = vpack.c.b16 %v692, %v690
    %v713 = vpack.c.b16 %v695, %v693
    %v714 = vpack.c.b16 %v696, %v694
    %v715 = vpack.c.b16 %v699, %v697
    %v716 = vpack.c.b16 %v700, %v698
    %733 = vmatprep.subr.bf16.mxu0 %v702
    %734 = vmatpush1.bf16.msra.mxu0 %v701
    %735 = vmatprep.subr.bf16.mxu0 %v704
    %736 = vmatpush1.bf16.msra.mxu0 %v703
    %737 = vmatprep.subr.bf16.mxu0 %v706
    %738 = vmatpush1.bf16.msra.mxu0 %v705
    %739 = vmatprep.subr.bf16.mxu0 %v708
    %740 = vmatpush1.bf16.msra.mxu0 %v707
    %741 = vmatprep.subr.bf16.mxu0 %v710
    %742 = vmatpush1.bf16.msra.mxu0 %v709
    %743 = vmatprep.subr.bf16.mxu0 %v712
    %744 = vmatpush1.bf16.msra.mxu0 %v711
    %745 = vmatprep.subr.bf16.mxu0 %v714
    %746 = vmatpush1.bf16.msra.mxu0 %v713
    %747 = vmatprep.subr.bf16.mxu0 %v716
    %748 = vmatpush1.bf16.msra.mxu0 %v715
    %749 = vmatprep.subr.bf16.mxu0 0
    %750 = vmatpush1.bf16.msra.mxu0 0
    %751 = vmatprep.subr.bf16.mxu0 0
    %752 = vmatpush1.bf16.msra.mxu0 0
    %753 = vmatprep.subr.bf16.mxu0 0
    %754 = vmatpush1.bf16.msra.mxu0 0
    %755 = vmatprep.subr.bf16.mxu0 0
    %756 = vmatpush1.bf16.msra.mxu0 0
    %757 = vmatprep.subr.bf16.mxu0 0
    %758 = vmatpush1.bf16.msra.mxu0 0
    %759 = vmatprep.subr.bf16.mxu0 0
    %760 = vmatpush1.bf16.msra.mxu0 0
    %761 = vmatprep.subr.bf16.mxu0 0
    %762 = vmatpush1.bf16.msra.mxu0 0
    %763 = vmatprep.subr.bf16.mxu0 0
    %764 = vmatpush1.bf16.msra.mxu0 0
    %765 = vmatprep.mubr.bf16.mxu0 0
    %766 = vmatmul.mubr.bf16.gmra.mrb[0].mxu0 %v639
    %v767 = vpop.f32.mrb[0].mxu0
    %v768 = vadd.f32 0.0, %v767
    %v769 = vpop.f32.mrb[0].mxu0
    %v770 = vadd.f32 0.0, %v769
    %v771 = vpop.f32.mrb[0].mxu0
    %v772 = vadd.f32 0.0, %v771
    %v773 = vpop.f32.mrb[0].mxu0
    %v774 = vadd.f32 0.0, %v773
    %775 = vmatprep.mubr.bf16.mxu0 0
    %776 = vmatmul.mubr.bf16.gmra.mrb[0].mxu0 %v640
    %v777 = vpop.f32.mrb[0].mxu0
    %v778 = vadd.f32 0.0, %v777
    %v779 = vpop.f32.mrb[0].mxu0
    %v780 = vadd.f32 0.0, %v779
    %v781 = vpop.f32.mrb[0].mxu0
    %v782 = vadd.f32 0.0, %v781
    %v783 = vpop.f32.mrb[0].mxu0
    %v784 = vadd.f32 0.0, %v783
    %785 = vmatprep.mubr.bf16.mxu0 0
    %786 = vmatmul.mubr.bf16.gmra.mrb[0].mxu0 %v641
    %v787 = vpop.f32.mrb[0].mxu0
    %v788 = vadd.f32 0.0, %v787
    %v789 = vpop.f32.mrb[0].mxu0
    %v790 = vadd.f32 0.0, %v789
    %v791 = vpop.f32.mrb[0].mxu0
    %v792 = vadd.f32 0.0, %v791
    %v793 = vpop.f32.mrb[0].mxu0
    %v794 = vadd.f32 0.0, %v793
    %795 = vmatprep.mubr.bf16.mxu0 0
    %796 = vmatmul.mubr.bf16.gmra.mrb[0].mxu0 %v642
    %v797 = vpop.f32.mrb[0].mxu0
    %v798 = vadd.f32 0.0, %v797
    %v799 = vpop.f32.mrb[0].mxu0
    %v800 = vadd.f32 0.0, %v799
    %v801 = vpop.f32.mrb[0].mxu0
    %v802 = vadd.f32 0.0, %v801
    %v803 = vpop.f32.mrb[0].mxu0
    %v804 = vadd.f32 0.0, %v803
    %805 = vmatprep.mubr.bf16.mxu0 0
    %806 = vmatmul.mubr.bf16.gmra.mrb[0].mxu0 %v643
    %v807 = vpop.f32.mrb[0].mxu0
    %v808 = vadd.f32 0.0, %v807
    %v809 = vpop.f32.mrb[0].mxu0
    %v810 = vadd.f32 0.0, %v809
    %v811 = vpop.f32.mrb[0].mxu0
    %v812 = vadd.f32 0.0, %v811
    %v813 = vpop.f32.mrb[0].mxu0
    %v814 = vadd.f32 0.0, %v813
    %815 = vmatprep.mubr.bf16.mxu0 0
    %816 = vmatmul.mubr.bf16.gmra.mrb[0].mxu0 %v644
    %v817 = vpop.f32.mrb[0].mxu0
    %v818 = vadd.f32 0.0, %v817
    %v819 = vpop.f32.mrb[0].mxu0
    %v820 = vadd.f32 0.0, %v819
    %v821 = vpop.f32.mrb[0].mxu0
    %v822 = vadd.f32 0.0, %v821
    %v823 = vpop.f32.mrb[0].mxu0
    %v824 = vadd.f32 0.0, %v823
    %825 = vmatprep.mubr.bf16.mxu0 0
    %826 = vmatmul.mubr.bf16.gmra.mrb[0].mxu0 %v645
    %v827 = vpop.f32.mrb[0].mxu0
    %v828 = vadd.f32 0.0, %v827
    %v829 = vpop.f32.mrb[0].mxu0
    %v830 = vadd.f32 0.0, %v829
    %v831 = vpop.f32.mrb[0].mxu0
    %v832 = vadd.f32 0.0, %v831
    %v833 = vpop.f32.mrb[0].mxu0
    %v834 = vadd.f32 0.0, %v833
    %835 = vdwg.mxu0
    %v836 = vadd.f32 %v511, %v768
    %v837 = vadd.f32 %v513, %v770
    %v838 = vadd.f32 %v515, %v772
    %v839 = vadd.f32 %v517, %v774
    %v840 = vadd.f32 %v521, %v778
    %v841 = vadd.f32 %v523, %v780
    %v842 = vadd.f32 %v525, %v782
    %v843 = vadd.f32 %v527, %v784
    %v844 = vadd.f32 %v531, %v788
    %v845 = vadd.f32 %v533, %v790
    %v846 = vadd.f32 %v535, %v792
    %v847 = vadd.f32 %v537, %v794
    %v848 = vadd.f32 %v541, %v798
    %v849 = vadd.f32 %v543, %v800
    %v850 = vadd.f32 %v545, %v802
    %v851 = vadd.f32 %v547, %v804
    %v852 = vadd.f32 %v551, %v808
    %v853 = vadd.f32 %v553, %v810
    %v854 = vadd.f32 %v555, %v812
    %v855 = vadd.f32 %v557, %v814
    %v856 = vadd.f32 %v561, %v818
    %v857 = vadd.f32 %v563, %v820
    %v858 = vadd.f32 %v565, %v822
    %v859 = vadd.f32 %v567, %v824
    %v860 = vadd.f32 %v571, %v828
    %v861 = vadd.f32 %v573, %v830
    %v862 = vadd.f32 %v575, %v832
    %v863 = vadd.f32 %v577, %v834
    %s864 = scalar_lea.vmem %s0, 68
    %v865 = vld [vmem:[%s864] sm:$0xf]
    %v866 = vld [vmem:[%s864 + $0x4] sm:$0xf]
    %v867 = vld [vmem:[%s864 + $0x8] sm:$0xf]
    %v868 = vld [vmem:[%s864 + $0xc] sm:$0xf]
    %v869 = vld [vmem:[%s864 + $0x10] sm:$0xf]
    %v870 = vld [vmem:[%s864 + $0x14] sm:$0xf]
    %v871 = vld [vmem:[%s864 + $0x18] sm:$0xf]
    %v872 = vld [vmem:[%s864 + $0x1c] sm:$0xf]
    %v873 = vld [vmem:[%s864 + $0x20] sm:$0xf]
    %v874 = vld [vmem:[%s864 + $0x24] sm:$0xf]
    %v875 = vld [vmem:[%s864 + $0x28] sm:$0xf]
    %v876 = vld [vmem:[%s864 + $0x2c] sm:$0xf]
    %v877 = vld [vmem:[%s864 + $0x30] sm:$0xf]
    %v878 = vld [vmem:[%s864 + $0x34] sm:$0xf]
    %s879 = scalar_lea.vmem %s1, 384
    %v880 = vld [vmem:[%s879] sm:$0xff]
    %v881 = vld [vmem:[%s879 + $0x8] sm:$0xff]
    %v882 = vld [vmem:[%s879 + $0x10] sm:$0xff]
    %v883 = vld [vmem:[%s879 + $0x18] sm:$0xff]
    %v884 = vld [vmem:[%s879 + $0x20] sm:$0xff]
    %v885 = vld [vmem:[%s879 + $0x28] sm:$0xff]
    %v886 = vld [vmem:[%s879 + $0x30] sm:$0xff]
    %v887 = vld [vmem:[%s879 + $0x38] sm:$0xff]
    %v888 = vld [vmem:[%s879 + $0x40] sm:$0xff]
    %v889 = vld [vmem:[%s879 + $0x48] sm:$0xff]
    %v890 = vld [vmem:[%s879 + $0x50] sm:$0xff]
    %v891 = vld [vmem:[%s879 + $0x58] sm:$0xff]
    %v892 = vld [vmem:[%s879 + $0x60] sm:$0xff]
    %v893 = vld [vmem:[%s879 + $0x68] sm:$0xff]
    %v894 = vld [vmem:[%s879 + $0x70] sm:$0xff]
    %v895 = vld [vmem:[%s879 + $0x78] sm:$0xff]
    %v910 = vunpack.c.l.b16 %v865
    %v911 = vunpack.c.l.b16 %v866
    %v912 = vunpack.c.l.b16 %v867
    %v913 = vunpack.c.l.b16 %v868
    %v914 = vunpack.c.l.b16 %v869
    %v915 = vunpack.c.l.b16 %v870
    %v916 = vunpack.c.l.b16 %v871
    %v917 = vunpack.c.l.b16 %v872
    %v918 = vunpack.c.l.b16 %v873
    %v919 = vunpack.c.l.b16 %v874
    %v920 = vunpack.c.l.b16 %v875
    %v921 = vunpack.c.l.b16 %v876
    %v922 = vunpack.c.l.b16 %v877
    %v923 = vunpack.c.l.b16 %v878
    %v924 = vpack.c.b16 %v911, %v910
    %v925 = vpack.c.b16 %v913, %v912
    %v926 = vpack.c.b16 %v915, %v914
    %v927 = vpack.c.b16 %v917, %v916
    %v928 = vpack.c.b16 %v919, %v918
    %v929 = vpack.c.b16 %v921, %v920
    %v930 = vpack.c.b16 %v923, %v922
    %v954 = vunpack.c.l.b16 %v880
    %v955 = vunpack.c.h.b16 %v880
    %v956 = vunpack.c.l.b16 %v881
    %v957 = vunpack.c.h.b16 %v881
    %v958 = vunpack.c.l.b16 %v882
    %v959 = vunpack.c.h.b16 %v882
    %v960 = vunpack.c.l.b16 %v883
    %v961 = vunpack.c.h.b16 %v883
    %v962 = vunpack.c.l.b16 %v884
    %v963 = vunpack.c.h.b16 %v884
    %v964 = vunpack.c.l.b16 %v885
    %v965 = vunpack.c.h.b16 %v885
    %v966 = vunpack.c.l.b16 %v886
    %v967 = vunpack.c.h.b16 %v886
    %v968 = vunpack.c.l.b16 %v887
    %v969 = vunpack.c.h.b16 %v887
    %v970 = vunpack.c.l.b16 %v888
    %v971 = vunpack.c.h.b16 %v888
    %v972 = vunpack.c.l.b16 %v889
    %v973 = vunpack.c.h.b16 %v889
    %v974 = vunpack.c.l.b16 %v890
    %v975 = vunpack.c.h.b16 %v890
    %v976 = vunpack.c.l.b16 %v891
    %v977 = vunpack.c.h.b16 %v891
    %v978 = vunpack.c.l.b16 %v892
    %v979 = vunpack.c.h.b16 %v892
    %v980 = vunpack.c.l.b16 %v893
    %v981 = vunpack.c.h.b16 %v893
    %v982 = vunpack.c.l.b16 %v894
    %v983 = vunpack.c.h.b16 %v894
    %v984 = vunpack.c.l.b16 %v895
    %v985 = vunpack.c.h.b16 %v895
    %v986 = vpack.c.b16 %v956, %v954
    %v987 = vpack.c.b16 %v957, %v955
    %v988 = vpack.c.b16 %v960, %v958
    %v989 = vpack.c.b16 %v961, %v959
    %v990 = vpack.c.b16 %v964, %v962
    %v991 = vpack.c.b16 %v965, %v963
    %v992 = vpack.c.b16 %v968, %v966
    %v993 = vpack.c.b16 %v969, %v967
    %v994 = vpack.c.b16 %v972, %v970
    %v995 = vpack.c.b16 %v973, %v971
    %v996 = vpack.c.b16 %v976, %v974
    %v997 = vpack.c.b16 %v977, %v975
    %v998 = vpack.c.b16 %v980, %v978
    %v999 = vpack.c.b16 %v981, %v979
    %v1000 = vpack.c.b16 %v984, %v982
    %v1001 = vpack.c.b16 %v985, %v983
    %1018 = vmatprep.subr.bf16.mxu0 %v987
    %1019 = vmatpush1.bf16.msra.mxu0 %v986
    %1020 = vmatprep.subr.bf16.mxu0 %v989
    %1021 = vmatpush1.bf16.msra.mxu0 %v988
    %1022 = vmatprep.subr.bf16.mxu0 %v991
    %1023 = vmatpush1.bf16.msra.mxu0 %v990
    %1024 = vmatprep.subr.bf16.mxu0 %v993
    %1025 = vmatpush1.bf16.msra.mxu0 %v992
    %1026 = vmatprep.subr.bf16.mxu0 %v995
    %1027 = vmatpush1.bf16.msra.mxu0 %v994
    %1028 = vmatprep.subr.bf16.mxu0 %v997
    %1029 = vmatpush1.bf16.msra.mxu0 %v996
    %1030 = vmatprep.subr.bf16.mxu0 %v999
    %1031 = vmatpush1.bf16.msra.mxu0 %v998
    %1032 = vmatprep.subr.bf16.mxu0 %v1001
    %1033 = vmatpush1.bf16.msra.mxu0 %v1000
    %1034 = vmatprep.subr.bf16.mxu0 0
    %1035 = vmatpush1.bf16.msra.mxu0 0
    %1036 = vmatprep.subr.bf16.mxu0 0
    %1037 = vmatpush1.bf16.msra.mxu0 0
    %1038 = vmatprep.subr.bf16.mxu0 0
    %1039 = vmatpush1.bf16.msra.mxu0 0
    %1040 = vmatprep.subr.bf16.mxu0 0
    %1041 = vmatpush1.bf16.msra.mxu0 0
    %1042 = vmatprep.subr.bf16.mxu0 0
    %1043 = vmatpush1.bf16.msra.mxu0 0
    %1044 = vmatprep.subr.bf16.mxu0 0
    %1045 = vmatpush1.bf16.msra.mxu0 0
    %1046 = vmatprep.subr.bf16.mxu0 0
    %1047 = vmatpush1.bf16.msra.mxu0 0
    %1048 = vmatprep.subr.bf16.mxu0 0
    %1049 = vmatpush1.bf16.msra.mxu0 0
    %1050 = vmatprep.mubr.bf16.mxu0 0
    %1051 = vmatmul.mubr.bf16.gmra.mrb[0].mxu0 %v924
    %v1052 = vpop.f32.mrb[0].mxu0
    %v1053 = vadd.f32 0.0, %v1052
    %v1054 = vpop.f32.mrb[0].mxu0
    %v1055 = vadd.f32 0.0, %v1054
    %v1056 = vpop.f32.mrb[0].mxu0
    %v1057 = vadd.f32 0.0, %v1056
    %v1058 = vpop.f32.mrb[0].mxu0
    %v1059 = vadd.f32 0.0, %v1058
    %1060 = vmatprep.mubr.bf16.mxu0 0
    %1061 = vmatmul.mubr.bf16.gmra.mrb[0].mxu0 %v925
    %v1062 = vpop.f32.mrb[0].mxu0
    %v1063 = vadd.f32 0.0, %v1062
    %v1064 = vpop.f32.mrb[0].mxu0
    %v1065 = vadd.f32 0.0, %v1064
    %v1066 = vpop.f32.mrb[0].mxu0
    %v1067 = vadd.f32 0.0, %v1066
    %v1068 = vpop.f32.mrb[0].mxu0
    %v1069 = vadd.f32 0.0, %v1068
    %1070 = vmatprep.mubr.bf16.mxu0 0
    %1071 = vmatmul.mubr.bf16.gmra.mrb[0].mxu0 %v926
    %v1072 = vpop.f32.mrb[0].mxu0
    %v1073 = vadd.f32 0.0, %v1072
    %v1074 = vpop.f32.mrb[0].mxu0
    %v1075 = vadd.f32 0.0, %v1074
    %v1076 = vpop.f32.mrb[0].mxu0
    %v1077 = vadd.f32 0.0, %v1076
    %v1078 = vpop.f32.mrb[0].mxu0
    %v1079 = vadd.f32 0.0, %v1078
    %1080 = vmatprep.mubr.bf16.mxu0 0
    %1081 = vmatmul.mubr.bf16.gmra.mrb[0].mxu0 %v927
    %v1082 = vpop.f32.mrb[0].mxu0
    %v1083 = vadd.f32 0.0, %v1082
    %v1084 = vpop.f32.mrb[0].mxu0
    %v1085 = vadd.f32 0.0, %v1084
    %v1086 = vpop.f32.mrb[0].mxu0
    %v1087 = vadd.f32 0.0, %v1086
    %v1088 = vpop.f32.mrb[0].mxu0
    %v1089 = vadd.f32 0.0, %v1088
    %1090 = vmatprep.mubr.bf16.mxu0 0
    %1091 = vmatmul.mubr.bf16.gmra.mrb[0].mxu0 %v928
    %v1092 = vpop.f32.mrb[0].mxu0
    %v1093 = vadd.f32 0.0, %v1092
    %v1094 = vpop.f32.mrb[0].mxu0
    %v1095 = vadd.f32 0.0, %v1094
    %v1096 = vpop.f32.mrb[0].mxu0
    %v1097 = vadd.f32 0.0, %v1096
    %v1098 = vpop.f32.mrb[0].mxu0
    %v1099 = vadd.f32 0.0, %v1098
    %1100 = vmatprep.mubr.bf16.mxu0 0
    %1101 = vmatmul.mubr.bf16.gmra.mrb[0].mxu0 %v929
    %v1102 = vpop.f32.mrb[0].mxu0
    %v1103 = vadd.f32 0.0, %v1102
    %v1104 = vpop.f32.mrb[0].mxu0
    %v1105 = vadd.f32 0.0, %v1104
    %v1106 = vpop.f32.mrb[0].mxu0
    %v1107 = vadd.f32 0.0, %v1106
    %v1108 = vpop.f32.mrb[0].mxu0
    %v1109 = vadd.f32 0.0, %v1108
    %1110 = vmatprep.mubr.bf16.mxu0 0
    %1111 = vmatmul.mubr.bf16.gmra.mrb[0].mxu0 %v930
    %v1112 = vpop.f32.mrb[0].mxu0
    %v1113 = vadd.f32 0.0, %v1112
    %v1114 = vpop.f32.mrb[0].mxu0
    %v1115 = vadd.f32 0.0, %v1114
    %v1116 = vpop.f32.mrb[0].mxu0
    %v1117 = vadd.f32 0.0, %v1116
    %v1118 = vpop.f32.mrb[0].mxu0
    %v1119 = vadd.f32 0.0, %v1118
    %1120 = vdwg.mxu0
    %v1121 = vadd.f32 %v836, %v1053
    %v1122 = vadd.f32 %v837, %v1055
    %v1123 = vadd.f32 %v838, %v1057
    %v1124 = vadd.f32 %v839, %v1059
    %v1125 = vadd.f32 %v840, %v1063
    %v1126 = vadd.f32 %v841, %v1065
    %v1127 = vadd.f32 %v842, %v1067
    %v1128 = vadd.f32 %v843, %v1069
    %v1129 = vadd.f32 %v844, %v1073
    %v1130 = vadd.f32 %v845, %v1075
    %v1131 = vadd.f32 %v846, %v1077
    %v1132 = vadd.f32 %v847, %v1079
    %v1133 = vadd.f32 %v848, %v1083
    %v1134 = vadd.f32 %v849, %v1085
    %v1135 = vadd.f32 %v850, %v1087
    %v1136 = vadd.f32 %v851, %v1089
    %v1137 = vadd.f32 %v852, %v1093
    %v1138 = vadd.f32 %v853, %v1095
    %v1139 = vadd.f32 %v854, %v1097
    %v1140 = vadd.f32 %v855, %v1099
    %v1141 = vadd.f32 %v856, %v1103
    %v1142 = vadd.f32 %v857, %v1105
    %v1143 = vadd.f32 %v858, %v1107
    %v1144 = vadd.f32 %v859, %v1109
    %v1145 = vadd.f32 %v860, %v1113
    %v1146 = vadd.f32 %v861, %v1115
    %v1147 = vadd.f32 %v862, %v1117
    %v1148 = vadd.f32 %v863, %v1119
    %s1149 = scalar_lea.vmem %s0, 8
    %v1150 = vld [vmem:[%s1149] sm:$0xf]
    %v1151 = vld [vmem:[%s1149 + $0x4] sm:$0xf]
    %v1152 = vld [vmem:[%s1149 + $0x8] sm:$0xf]
    %v1153 = vld [vmem:[%s1149 + $0xc] sm:$0xf]
    %v1154 = vld [vmem:[%s1149 + $0x10] sm:$0xf]
    %v1155 = vld [vmem:[%s1149 + $0x14] sm:$0xf]
    %v1156 = vld [vmem:[%s1149 + $0x18] sm:$0xf]
    %v1157 = vld [vmem:[%s1149 + $0x1c] sm:$0xf]
    %v1158 = vld [vmem:[%s1149 + $0x20] sm:$0xf]
    %v1159 = vld [vmem:[%s1149 + $0x24] sm:$0xf]
    %v1160 = vld [vmem:[%s1149 + $0x28] sm:$0xf]
    %v1161 = vld [vmem:[%s1149 + $0x2c] sm:$0xf]
    %v1162 = vld [vmem:[%s1149 + $0x30] sm:$0xf]
    %v1163 = vld [vmem:[%s1149 + $0x34] sm:$0xf]
    %s1164 = scalar_lea.vmem %s1, 512
    %v1165 = vld [vmem:[%s1164] sm:$0xff]
    %v1166 = vld [vmem:[%s1164 + $0x8] sm:$0xff]
    %v1167 = vld [vmem:[%s1164 + $0x10] sm:$0xff]
    %v1168 = vld [vmem:[%s1164 + $0x18] sm:$0xff]
    %v1169 = vld [vmem:[%s1164 + $0x20] sm:$0xff]
    %v1170 = vld [vmem:[%s1164 + $0x28] sm:$0xff]
    %v1171 = vld [vmem:[%s1164 + $0x30] sm:$0xff]
    %v1172 = vld [vmem:[%s1164 + $0x38] sm:$0xff]
    %v1173 = vld [vmem:[%s1164 + $0x40] sm:$0xff]
    %v1174 = vld [vmem:[%s1164 + $0x48] sm:$0xff]
    %v1175 = vld [vmem:[%s1164 + $0x50] sm:$0xff]
    %v1176 = vld [vmem:[%s1164 + $0x58] sm:$0xff]
    %v1177 = vld [vmem:[%s1164 + $0x60] sm:$0xff]
    %v1178 = vld [vmem:[%s1164 + $0x68] sm:$0xff]
    %v1179 = vld [vmem:[%s1164 + $0x70] sm:$0xff]
    %v1180 = vld [vmem:[%s1164 + $0x78] sm:$0xff]
    %v1195 = vunpack.c.l.b16 %v1150
    %v1196 = vunpack.c.l.b16 %v1151
    %v1197 = vunpack.c.l.b16 %v1152
    %v1198 = vunpack.c.l.b16 %v1153
    %v1199 = vunpack.c.l.b16 %v1154
    %v1200 = vunpack.c.l.b16 %v1155
    %v1201 = vunpack.c.l.b16 %v1156
    %v1202 = vunpack.c.l.b16 %v1157
    %v1203 = vunpack.c.l.b16 %v1158
    %v1204 = vunpack.c.l.b16 %v1159
    %v1205 = vunpack.c.l.b16 %v1160
    %v1206 = vunpack.c.l.b16 %v1161
    %v1207 = vunpack.c.l.b16 %v1162
    %v1208 = vunpack.c.l.b16 %v1163
    %v1209 = vpack.c.b16 %v1196, %v1195
    %v1210 = vpack.c.b16 %v1198, %v1197
    %v1211 = vpack.c.b16 %v1200, %v1199
    %v1212 = vpack.c.b16 %v1202, %v1201
    %v1213 = vpack.c.b16 %v1204, %v1203
    %v1214 = vpack.c.b16 %v1206, %v1205
    %v1215 = vpack.c.b16 %v1208, %v1207
    %v1239 = vunpack.c.l.b16 %v1165
    %v1240 = vunpack.c.h.b16 %v1165
    %v1241 = vunpack.c.l.b16 %v1166
    %v1242 = vunpack.c.h.b16 %v1166
    %v1243 = vunpack.c.l.b16 %v1167
    %v1244 = vunpack.c.h.b16 %v1167
    %v1245 = vunpack.c.l.b16 %v1168
    %v1246 = vunpack.c.h.b16 %v1168
    %v1247 = vunpack.c.l.b16 %v1169
    %v1248 = vunpack.c.h.b16 %v1169
    %v1249 = vunpack.c.l.b16 %v1170
    %v1250 = vunpack.c.h.b16 %v1170
    %v1251 = vunpack.c.l.b16 %v1171
    %v1252 = vunpack.c.h.b16 %v1171
    %v1253 = vunpack.c.l.b16 %v1172
    %v1254 = vunpack.c.h.b16 %v1172
    %v1255 = vunpack.c.l.b16 %v1173
    %v1256 = vunpack.c.h.b16 %v1173
    %v1257 = vunpack.c.l.b16 %v1174
    %v1258 = vunpack.c.h.b16 %v1174
    %v1259 = vunpack.c.l.b16 %v1175
    %v1260 = vunpack.c.h.b16 %v1175
    %v1261 = vunpack.c.l.b16 %v1176
    %v1262 = vunpack.c.h.b16 %v1176
    %v1263 = vunpack.c.l.b16 %v1177
    %v1264 = vunpack.c.h.b16 %v1177
    %v1265 = vunpack.c.l.b16 %v1178
    %v1266 = vunpack.c.h.b16 %v1178
    %v1267 = vunpack.c.l.b16 %v1179
    %v1268 = vunpack.c.h.b16 %v1179
    %v1269 = vunpack.c.l.b16 %v1180
    %v1270 = vunpack.c.h.b16 %v1180
    %v1271 = vpack.c.b16 %v1241, %v1239
    %v1272 = vpack.c.b16 %v1242, %v1240
    %v1273 = vpack.c.b16 %v1245, %v1243
    %v1274 = vpack.c.b16 %v1246, %v1244
    %v1275 = vpack.c.b16 %v1249, %v1247
    %v1276 = vpack.c.b16 %v1250, %v1248
    %v1277 = vpack.c.b16 %v1253, %v1251
    %v1278 = vpack.c.b16 %v1254, %v1252
    %v1279 = vpack.c.b16 %v1257, %v1255
    %v1280 = vpack.c.b16 %v1258, %v1256
    %v1281 = vpack.c.b16 %v1261, %v1259
    %v1282 = vpack.c.b16 %v1262, %v1260
    %v1283 = vpack.c.b16 %v1265, %v1263
    %v1284 = vpack.c.b16 %v1266, %v1264
    %v1285 = vpack.c.b16 %v1269, %v1267
    %v1286 = vpack.c.b16 %v1270, %v1268
    %1303 = vmatprep.subr.bf16.mxu0 %v1272
    %1304 = vmatpush1.bf16.msra.mxu0 %v1271
    %1305 = vmatprep.subr.bf16.mxu0 %v1274
    %1306 = vmatpush1.bf16.msra.mxu0 %v1273
    %1307 = vmatprep.subr.bf16.mxu0 %v1276
    %1308 = vmatpush1.bf16.msra.mxu0 %v1275
    %1309 = vmatprep.subr.bf16.mxu0 %v1278
    %1310 = vmatpush1.bf16.msra.mxu0 %v1277
    %1311 = vmatprep.subr.bf16.mxu0 %v1280
    %1312 = vmatpush1.bf16.msra.mxu0 %v1279
    %1313 = vmatprep.subr.bf16.mxu0 %v1282
    %1314 = vmatpush1.bf16.msra.mxu0 %v1281
    %1315 = vmatprep.subr.bf16.mxu0 %v1284
    %1316 = vmatpush1.bf16.msra.mxu0 %v1283
    %1317 = vmatprep.subr.bf16.mxu0 %v1286
    %1318 = vmatpush1.bf16.msra.mxu0 %v1285
    %1319 = vmatprep.subr.bf16.mxu0 0
    %1320 = vmatpush1.bf16.msra.mxu0 0
    %1321 = vmatprep.subr.bf16.mxu0 0
    %1322 = vmatpush1.bf16.msra.mxu0 0
    %1323 = vmatprep.subr.bf16.mxu0 0
    %1324 = vmatpush1.bf16.msra.mxu0 0
    %1325 = vmatprep.subr.bf16.mxu0 0
    %1326 = vmatpush1.bf16.msra.mxu0 0
    %1327 = vmatprep.subr.bf16.mxu0 0
    %1328 = vmatpush1.bf16.msra.mxu0 0
    %1329 = vmatprep.subr.bf16.mxu0 0
    %1330 = vmatpush1.bf16.msra.mxu0 0
    %1331 = vmatprep.subr.bf16.mxu0 0
    %1332 = vmatpush1.bf16.msra.mxu0 0
    %1333 = vmatprep.subr.bf16.mxu0 0
    %1334 = vmatpush1.bf16.msra.mxu0 0
    %1335 = vmatprep.mubr.bf16.mxu0 0
    %1336 = vmatmul.mubr.bf16.gmra.mrb[0].mxu0 %v1209
    %v1337 = vpop.f32.mrb[0].mxu0
    %v1338 = vadd.f32 0.0, %v1337
    %v1339 = vpop.f32.mrb[0].mxu0
    %v1340 = vadd.f32 0.0, %v1339
    %v1341 = vpop.f32.mrb[0].mxu0
    %v1342 = vadd.f32 0.0, %v1341
    %v1343 = vpop.f32.mrb[0].mxu0
    %v1344 = vadd.f32 0.0, %v1343
    %1345 = vmatprep.mubr.bf16.mxu0 0
    %1346 = vmatmul.mubr.bf16.gmra.mrb[0].mxu0 %v1210
    %v1347 = vpop.f32.mrb[0].mxu0
    %v1348 = vadd.f32 0.0, %v1347
    %v1349 = vpop.f32.mrb[0].mxu0
    %v1350 = vadd.f32 0.0, %v1349
    %v1351 = vpop.f32.mrb[0].mxu0
    %v1352 = vadd.f32 0.0, %v1351
    %v1353 = vpop.f32.mrb[0].mxu0
    %v1354 = vadd.f32 0.0, %v1353
    %1355 = vmatprep.mubr.bf16.mxu0 0
    %1356 = vmatmul.mubr.bf16.gmra.mrb[0].mxu0 %v1211
    %v1357 = vpop.f32.mrb[0].mxu0
    %v1358 = vadd.f32 0.0, %v1357
    %v1359 = vpop.f32.mrb[0].mxu0
    %v1360 = vadd.f32 0.0, %v1359
    %v1361 = vpop.f32.mrb[0].mxu0
    %v1362 = vadd.f32 0.0, %v1361
    %v1363 = vpop.f32.mrb[0].mxu0
    %v1364 = vadd.f32 0.0, %v1363
    %1365 = vmatprep.mubr.bf16.mxu0 0
    %1366 = vmatmul.mubr.bf16.gmra.mrb[0].mxu0 %v1212
    %v1367 = vpop.f32.mrb[0].mxu0
    %v1368 = vadd.f32 0.0, %v1367
    %v1369 = vpop.f32.mrb[0].mxu0
    %v1370 = vadd.f32 0.0, %v1369
    %v1371 = vpop.f32.mrb[0].mxu0
    %v1372 = vadd.f32 0.0, %v1371
    %v1373 = vpop.f32.mrb[0].mxu0
    %v1374 = vadd.f32 0.0, %v1373
    %1375 = vmatprep.mubr.bf16.mxu0 0
    %1376 = vmatmul.mubr.bf16.gmra.mrb[0].mxu0 %v1213
    %v1377 = vpop.f32.mrb[0].mxu0
    %v1378 = vadd.f32 0.0, %v1377
    %v1379 = vpop.f32.mrb[0].mxu0
    %v1380 = vadd.f32 0.0, %v1379
    %v1381 = vpop.f32.mrb[0].mxu0
    %v1382 = vadd.f32 0.0, %v1381
    %v1383 = vpop.f32.mrb[0].mxu0
    %v1384 = vadd.f32 0.0, %v1383
    %1385 = vmatprep.mubr.bf16.mxu0 0
    %1386 = vmatmul.mubr.bf16.gmra.mrb[0].mxu0 %v1214
    %v1387 = vpop.f32.mrb[0].mxu0
    %v1388 = vadd.f32 0.0, %v1387
    %v1389 = vpop.f32.mrb[0].mxu0
    %v1390 = vadd.f32 0.0, %v1389
    %v1391 = vpop.f32.mrb[0].mxu0
    %v1392 = vadd.f32 0.0, %v1391
    %v1393 = vpop.f32.mrb[0].mxu0
    %v1394 = vadd.f32 0.0, %v1393
    %1395 = vmatprep.mubr.bf16.mxu0 0
    %1396 = vmatmul.mubr.bf16.gmra.mrb[0].mxu0 %v1215
    %v1397 = vpop.f32.mrb[0].mxu0
    %v1398 = vadd.f32 0.0, %v1397
    %v1399 = vpop.f32.mrb[0].mxu0
    %v1400 = vadd.f32 0.0, %v1399
    %v1401 = vpop.f32.mrb[0].mxu0
    %v1402 = vadd.f32 0.0, %v1401
    %v1403 = vpop.f32.mrb[0].mxu0
    %v1404 = vadd.f32 0.0, %v1403
    %1405 = vdwg.mxu0
    %v1406 = vadd.f32 %v1121, %v1338
    %v1407 = vadd.f32 %v1122, %v1340
    %v1408 = vadd.f32 %v1123, %v1342
    %v1409 = vadd.f32 %v1124, %v1344
    %v1410 = vadd.f32 %v1125, %v1348
    %v1411 = vadd.f32 %v1126, %v1350
    %v1412 = vadd.f32 %v1127, %v1352
    %v1413 = vadd.f32 %v1128, %v1354
    %v1414 = vadd.f32 %v1129, %v1358
    %v1415 = vadd.f32 %v1130, %v1360
    %v1416 = vadd.f32 %v1131, %v1362
    %v1417 = vadd.f32 %v1132, %v1364
    %v1418 = vadd.f32 %v1133, %v1368
    %v1419 = vadd.f32 %v1134, %v1370
    %v1420 = vadd.f32 %v1135, %v1372
    %v1421 = vadd.f32 %v1136, %v1374
    %v1422 = vadd.f32 %v1137, %v1378
    %v1423 = vadd.f32 %v1138, %v1380
    %v1424 = vadd.f32 %v1139, %v1382
    %v1425 = vadd.f32 %v1140, %v1384
    %v1426 = vadd.f32 %v1141, %v1388
    %v1427 = vadd.f32 %v1142, %v1390
    %v1428 = vadd.f32 %v1143, %v1392
    %v1429 = vadd.f32 %v1144, %v1394
    %v1430 = vadd.f32 %v1145, %v1398
    %v1431 = vadd.f32 %v1146, %v1400
    %v1432 = vadd.f32 %v1147, %v1402
    %v1433 = vadd.f32 %v1148, %v1404
    %1434 = vmatprep.subr.bf16.mxu0 %v220
    %1435 = vmatpush1.bf16.msra.mxu0 %v219
    %1436 = vmatprep.subr.bf16.mxu0 %v222
    %1437 = vmatpush1.bf16.msra.mxu0 %v221
    %1438 = vmatprep.subr.bf16.mxu0 %v224
    %1439 = vmatpush1.bf16.msra.mxu0 %v223
    %1440 = vmatprep.subr.bf16.mxu0 %v226
    %1441 = vmatpush1.bf16.msra.mxu0 %v225
    %1442 = vmatprep.subr.bf16.mxu0 %v228
    %1443 = vmatpush1.bf16.msra.mxu0 %v227
    %1444 = vmatprep.subr.bf16.mxu0 %v230
    %1445 = vmatpush1.bf16.msra.mxu0 %v229
    %1446 = vmatprep.subr.bf16.mxu0 %v232
    %1447 = vmatpush1.bf16.msra.mxu0 %v231
    %1448 = vmatprep.subr.bf16.mxu0 %v234
    %1449 = vmatpush1.bf16.msra.mxu0 %v233
    %1450 = vmatprep.subr.bf16.mxu0 0
    %1451 = vmatpush1.bf16.msra.mxu0 0
    %1452 = vmatprep.subr.bf16.mxu0 0
    %1453 = vmatpush1.bf16.msra.mxu0 0
    %1454 = vmatprep.subr.bf16.mxu0 0
    %1455 = vmatpush1.bf16.msra.mxu0 0
    %1456 = vmatprep.subr.bf16.mxu0 0
    %1457 = vmatpush1.bf16.msra.mxu0 0
    %1458 = vmatprep.subr.bf16.mxu0 0
    %1459 = vmatpush1.bf16.msra.mxu0 0
    %1460 = vmatprep.subr.bf16.mxu0 0
    %1461 = vmatpush1.bf16.msra.mxu0 0
    %1462 = vmatprep.subr.bf16.mxu0 0
    %1463 = vmatpush1.bf16.msra.mxu0 0
    %1464 = vmatprep.subr.bf16.mxu0 0
    %1465 = vmatpush1.bf16.msra.mxu0 0
    %1466 = vmatprep.mubr.bf16.mxu0 0
    %1467 = vmatmul.mubr.bf16.gmra.mrb[0].mxu0 %v639
    %v1468 = vpop.f32.mrb[0].mxu0
    %v1469 = vadd.f32 0.0, %v1468
    %v1470 = vpop.f32.mrb[0].mxu0
    %v1471 = vadd.f32 0.0, %v1470
    %v1472 = vpop.f32.mrb[0].mxu0
    %v1473 = vadd.f32 0.0, %v1472
    %v1474 = vpop.f32.mrb[0].mxu0
    %v1475 = vadd.f32 0.0, %v1474
    %1476 = vmatprep.mubr.bf16.mxu0 0
    %1477 = vmatmul.mubr.bf16.gmra.mrb[0].mxu0 %v640
    %v1478 = vpop.f32.mrb[0].mxu0
    %v1479 = vadd.f32 0.0, %v1478
    %v1480 = vpop.f32.mrb[0].mxu0
    %v1481 = vadd.f32 0.0, %v1480
    %v1482 = vpop.f32.mrb[0].mxu0
    %v1483 = vadd.f32 0.0, %v1482
    %v1484 = vpop.f32.mrb[0].mxu0
    %v1485 = vadd.f32 0.0, %v1484
    %1486 = vmatprep.mubr.bf16.mxu0 0
    %1487 = vmatmul.mubr.bf16.gmra.mrb[0].mxu0 %v641
    %v1488 = vpop.f32.mrb[0].mxu0
    %v1489 = vadd.f32 0.0, %v1488
    %v1490 = vpop.f32.mrb[0].mxu0
    %v1491 = vadd.f32 0.0, %v1490
    %v1492 = vpop.f32.mrb[0].mxu0
    %v1493 = vadd.f32 0.0, %v1492
    %v1494 = vpop.f32.mrb[0].mxu0
    %v1495 = vadd.f32 0.0, %v1494
    %1496 = vmatprep.mubr.bf16.mxu0 0
    %1497 = vmatmul.mubr.bf16.gmra.mrb[0].mxu0 %v642
    %v1498 = vpop.f32.mrb[0].mxu0
    %v1499 = vadd.f32 0.0, %v1498
    %v1500 = vpop.f32.mrb[0].mxu0
    %v1501 = vadd.f32 0.0, %v1500
    %v1502 = vpop.f32.mrb[0].mxu0
    %v1503 = vadd.f32 0.0, %v1502
    %v1504 = vpop.f32.mrb[0].mxu0
    %v1505 = vadd.f32 0.0, %v1504
    %1506 = vmatprep.mubr.bf16.mxu0 0
    %1507 = vmatmul.mubr.bf16.gmra.mrb[0].mxu0 %v643
    %v1508 = vpop.f32.mrb[0].mxu0
    %v1509 = vadd.f32 0.0, %v1508
    %v1510 = vpop.f32.mrb[0].mxu0
    %v1511 = vadd.f32 0.0, %v1510
    %v1512 = vpop.f32.mrb[0].mxu0
    %v1513 = vadd.f32 0.0, %v1512
    %v1514 = vpop.f32.mrb[0].mxu0
    %v1515 = vadd.f32 0.0, %v1514
    %1516 = vmatprep.mubr.bf16.mxu0 0
    %1517 = vmatmul.mubr.bf16.gmra.mrb[0].mxu0 %v644
    %v1518 = vpop.f32.mrb[0].mxu0
    %v1519 = vadd.f32 0.0, %v1518
    %v1520 = vpop.f32.mrb[0].mxu0
    %v1521 = vadd.f32 0.0, %v1520
    %v1522 = vpop.f32.mrb[0].mxu0
    %v1523 = vadd.f32 0.0, %v1522
    %v1524 = vpop.f32.mrb[0].mxu0
    %v1525 = vadd.f32 0.0, %v1524
    %1526 = vmatprep.mubr.bf16.mxu0 0
    %1527 = vmatmul.mubr.bf16.gmra.mrb[0].mxu0 %v645
    %v1528 = vpop.f32.mrb[0].mxu0
    %v1529 = vadd.f32 0.0, %v1528
    %v1530 = vpop.f32.mrb[0].mxu0
    %v1531 = vadd.f32 0.0, %v1530
    %v1532 = vpop.f32.mrb[0].mxu0
    %v1533 = vadd.f32 0.0, %v1532
    %v1534 = vpop.f32.mrb[0].mxu0
    %v1535 = vadd.f32 0.0, %v1534
    %1536 = vdwg.mxu0
    %1537 = vmatprep.subr.bf16.mxu0 %v445
    %1538 = vmatpush1.bf16.msra.mxu0 %v444
    %1539 = vmatprep.subr.bf16.mxu0 %v447
    %1540 = vmatpush1.bf16.msra.mxu0 %v446
    %1541 = vmatprep.subr.bf16.mxu0 %v449
    %1542 = vmatpush1.bf16.msra.mxu0 %v448
    %1543 = vmatprep.subr.bf16.mxu0 %v451
    %1544 = vmatpush1.bf16.msra.mxu0 %v450
    %1545 = vmatprep.subr.bf16.mxu0 %v453
    %1546 = vmatpush1.bf16.msra.mxu0 %v452
    %1547 = vmatprep.subr.bf16.mxu0 %v455
    %1548 = vmatpush1.bf16.msra.mxu0 %v454
    %1549 = vmatprep.subr.bf16.mxu0 %v457
    %1550 = vmatpush1.bf16.msra.mxu0 %v456
    %1551 = vmatprep.subr.bf16.mxu0 %v459
    %1552 = vmatpush1.bf16.msra.mxu0 %v458
    %1553 = vmatprep.subr.bf16.mxu0 0
    %1554 = vmatpush1.bf16.msra.mxu0 0
    %1555 = vmatprep.subr.bf16.mxu0 0
    %1556 = vmatpush1.bf16.msra.mxu0 0
    %1557 = vmatprep.subr.bf16.mxu0 0
    %1558 = vmatpush1.bf16.msra.mxu0 0
    %1559 = vmatprep.subr.bf16.mxu0 0
    %1560 = vmatpush1.bf16.msra.mxu0 0
    %1561 = vmatprep.subr.bf16.mxu0 0
    %1562 = vmatpush1.bf16.msra.mxu0 0
    %1563 = vmatprep.subr.bf16.mxu0 0
    %1564 = vmatpush1.bf16.msra.mxu0 0
    %1565 = vmatprep.subr.bf16.mxu0 0
    %1566 = vmatpush1.bf16.msra.mxu0 0
    %1567 = vmatprep.subr.bf16.mxu0 0
    %1568 = vmatpush1.bf16.msra.mxu0 0
    %1569 = vmatprep.mubr.bf16.mxu0 0
    %1570 = vmatmul.mubr.bf16.gmra.mrb[0].mxu0 %v157
    %v1571 = vpop.f32.mrb[0].mxu0
    %v1572 = vadd.f32 %v1469, %v1571
    %v1573 = vpop.f32.mrb[0].mxu0
    %v1574 = vadd.f32 %v1471, %v1573
    %v1575 = vpop.f32.mrb[0].mxu0
    %v1576 = vadd.f32 %v1473, %v1575
    %v1577 = vpop.f32.mrb[0].mxu0
    %v1578 = vadd.f32 %v1475, %v1577
    %1579 = vmatprep.mubr.bf16.mxu0 0
    %1580 = vmatmul.mubr.bf16.gmra.mrb[0].mxu0 %v158
    %v1581 = vpop.f32.mrb[0].mxu0
    %v1582 = vadd.f32 %v1479, %v1581
    %v1583 = vpop.f32.mrb[0].mxu0
    %v1584 = vadd.f32 %v1481, %v1583
    %v1585 = vpop.f32.mrb[0].mxu0
    %v1586 = vadd.f32 %v1483, %v1585
    %v1587 = vpop.f32.mrb[0].mxu0
    %v1588 = vadd.f32 %v1485, %v1587
    %1589 = vmatprep.mubr.bf16.mxu0 0
    %1590 = vmatmul.mubr.bf16.gmra.mrb[0].mxu0 %v159
    %v1591 = vpop.f32.mrb[0].mxu0
    %v1592 = vadd.f32 %v1489, %v1591
    %v1593 = vpop.f32.mrb[0].mxu0
    %v1594 = vadd.f32 %v1491, %v1593
    %v1595 = vpop.f32.mrb[0].mxu0
    %v1596 = vadd.f32 %v1493, %v1595
    %v1597 = vpop.f32.mrb[0].mxu0
    %v1598 = vadd.f32 %v1495, %v1597
    %1599 = vmatprep.mubr.bf16.mxu0 0
    %1600 = vmatmul.mubr.bf16.gmra.mrb[0].mxu0 %v160
    %v1601 = vpop.f32.mrb[0].mxu0
    %v1602 = vadd.f32 %v1499, %v1601
    %v1603 = vpop.f32.mrb[0].mxu0
    %v1604 = vadd.f32 %v1501, %v1603
    %v1605 = vpop.f32.mrb[0].mxu0
    %v1606 = vadd.f32 %v1503, %v1605
    %v1607 = vpop.f32.mrb[0].mxu0
    %v1608 = vadd.f32 %v1505, %v1607
    %1609 = vmatprep.mubr.bf16.mxu0 0
    %1610 = vmatmul.mubr.bf16.gmra.mrb[0].mxu0 %v161
    %v1611 = vpop.f32.mrb[0].mxu0
    %v1612 = vadd.f32 %v1509, %v1611
    %v1613 = vpop.f32.mrb[0].mxu0
    %v1614 = vadd.f32 %v1511, %v1613
    %v1615 = vpop.f32.mrb[0].mxu0
    %v1616 = vadd.f32 %v1513, %v1615
    %v1617 = vpop.f32.mrb[0].mxu0
    %v1618 = vadd.f32 %v1515, %v1617
    %1619 = vmatprep.mubr.bf16.mxu0 0
    %1620 = vmatmul.mubr.bf16.gmra.mrb[0].mxu0 %v162
    %v1621 = vpop.f32.mrb[0].mxu0
    %v1622 = vadd.f32 %v1519, %v1621
    %v1623 = vpop.f32.mrb[0].mxu0
    %v1624 = vadd.f32 %v1521, %v1623
    %v1625 = vpop.f32.mrb[0].mxu0
    %v1626 = vadd.f32 %v1523, %v1625
    %v1627 = vpop.f32.mrb[0].mxu0
    %v1628 = vadd.f32 %v1525, %v1627
    %1629 = vmatprep.mubr.bf16.mxu0 0
    %1630 = vmatmul.mubr.bf16.gmra.mrb[0].mxu0 %v163
    %v1631 = vpop.f32.mrb[0].mxu0
    %v1632 = vadd.f32 %v1529, %v1631
    %v1633 = vpop.f32.mrb[0].mxu0
    %v1634 = vadd.f32 %v1531, %v1633
    %v1635 = vpop.f32.mrb[0].mxu0
    %v1636 = vadd.f32 %v1533, %v1635
    %v1637 = vpop.f32.mrb[0].mxu0
    %v1638 = vadd.f32 %v1535, %v1637
    %1639 = vdwg.mxu0
    %1640 = vmatprep.subr.bf16.mxu0 %v702
    %1641 = vmatpush1.bf16.msra.mxu0 %v701
    %1642 = vmatprep.subr.bf16.mxu0 %v704
    %1643 = vmatpush1.bf16.msra.mxu0 %v703
    %1644 = vmatprep.subr.bf16.mxu0 %v706
    %1645 = vmatpush1.bf16.msra.mxu0 %v705
    %1646 = vmatprep.subr.bf16.mxu0 %v708
    %1647 = vmatpush1.bf16.msra.mxu0 %v707
    %1648 = vmatprep.subr.bf16.mxu0 %v710
    %1649 = vmatpush1.bf16.msra.mxu0 %v709
    %1650 = vmatprep.subr.bf16.mxu0 %v712
    %1651 = vmatpush1.bf16.msra.mxu0 %v711
    %1652 = vmatprep.subr.bf16.mxu0 %v714
    %1653 = vmatpush1.bf16.msra.mxu0 %v713
    %1654 = vmatprep.subr.bf16.mxu0 %v716
    %1655 = vmatpush1.bf16.msra.mxu0 %v715
    %1656 = vmatprep.subr.bf16.mxu0 0
    %1657 = vmatpush1.bf16.msra.mxu0 0
    %1658 = vmatprep.subr.bf16.mxu0 0
    %1659 = vmatpush1.bf16.msra.mxu0 0
    %1660 = vmatprep.subr.bf16.mxu0 0
    %1661 = vmatpush1.bf16.msra.mxu0 0
    %1662 = vmatprep.subr.bf16.mxu0 0
    %1663 = vmatpush1.bf16.msra.mxu0 0
    %1664 = vmatprep.subr.bf16.mxu0 0
    %1665 = vmatpush1.bf16.msra.mxu0 0
    %1666 = vmatprep.subr.bf16.mxu0 0
    %1667 = vmatpush1.bf16.msra.mxu0 0
    %1668 = vmatprep.subr.bf16.mxu0 0
    %1669 = vmatpush1.bf16.msra.mxu0 0
    %1670 = vmatprep.subr.bf16.mxu0 0
    %1671 = vmatpush1.bf16.msra.mxu0 0
    %1672 = vmatprep.mubr.bf16.mxu0 0
    %1673 = vmatmul.mubr.bf16.gmra.mrb[0].mxu0 %v924
    %v1674 = vpop.f32.mrb[0].mxu0
    %v1675 = vadd.f32 0.0, %v1674
    %v1676 = vpop.f32.mrb[0].mxu0
    %v1677 = vadd.f32 0.0, %v1676
    %v1678 = vpop.f32.mrb[0].mxu0
    %v1679 = vadd.f32 0.0, %v1678
    %v1680 = vpop.f32.mrb[0].mxu0
    %v1681 = vadd.f32 0.0, %v1680
    %1682 = vmatprep.mubr.bf16.mxu0 0
    %1683 = vmatmul.mubr.bf16.gmra.mrb[0].mxu0 %v925
    %v1684 = vpop.f32.mrb[0].mxu0
    %v1685 = vadd.f32 0.0, %v1684
    %v1686 = vpop.f32.mrb[0].mxu0
    %v1687 = vadd.f32 0.0, %v1686
    %v1688 = vpop.f32.mrb[0].mxu0
    %v1689 = vadd.f32 0.0, %v1688
    %v1690 = vpop.f32.mrb[0].mxu0
    %v1691 = vadd.f32 0.0, %v1690
    %1692 = vmatprep.mubr.bf16.mxu0 0
    %1693 = vmatmul.mubr.bf16.gmra.mrb[0].mxu0 %v926
    %v1694 = vpop.f32.mrb[0].mxu0
    %v1695 = vadd.f32 0.0, %v1694
    %v1696 = vpop.f32.mrb[0].mxu0
    %v1697 = vadd.f32 0.0, %v1696
    %v1698 = vpop.f32.mrb[0].mxu0
    %v1699 = vadd.f32 0.0, %v1698
    %v1700 = vpop.f32.mrb[0].mxu0
    %v1701 = vadd.f32 0.0, %v1700
    %1702 = vmatprep.mubr.bf16.mxu0 0
    %1703 = vmatmul.mubr.bf16.gmra.mrb[0].mxu0 %v927
    %v1704 = vpop.f32.mrb[0].mxu0
    %v1705 = vadd.f32 0.0, %v1704
    %v1706 = vpop.f32.mrb[0].mxu0
    %v1707 = vadd.f32 0.0, %v1706
    %v1708 = vpop.f32.mrb[0].mxu0
    %v1709 = vadd.f32 0.0, %v1708
    %v1710 = vpop.f32.mrb[0].mxu0
    %v1711 = vadd.f32 0.0, %v1710
    %1712 = vmatprep.mubr.bf16.mxu0 0
    %1713 = vmatmul.mubr.bf16.gmra.mrb[0].mxu0 %v928
    %v1714 = vpop.f32.mrb[0].mxu0
    %v1715 = vadd.f32 0.0, %v1714
    %v1716 = vpop.f32.mrb[0].mxu0
    %v1717 = vadd.f32 0.0, %v1716
    %v1718 = vpop.f32.mrb[0].mxu0
    %v1719 = vadd.f32 0.0, %v1718
    %v1720 = vpop.f32.mrb[0].mxu0
    %v1721 = vadd.f32 0.0, %v1720
    %1722 = vmatprep.mubr.bf16.mxu0 0
    %1723 = vmatmul.mubr.bf16.gmra.mrb[0].mxu0 %v929
    %v1724 = vpop.f32.mrb[0].mxu0
    %v1725 = vadd.f32 0.0, %v1724
    %v1726 = vpop.f32.mrb[0].mxu0
    %v1727 = vadd.f32 0.0, %v1726
    %v1728 = vpop.f32.mrb[0].mxu0
    %v1729 = vadd.f32 0.0, %v1728
    %v1730 = vpop.f32.mrb[0].mxu0
    %v1731 = vadd.f32 0.0, %v1730
    %1732 = vmatprep.mubr.bf16.mxu0 0
    %1733 = vmatmul.mubr.bf16.gmra.mrb[0].mxu0 %v930
    %v1734 = vpop.f32.mrb[0].mxu0
    %v1735 = vadd.f32 0.0, %v1734
    %v1736 = vpop.f32.mrb[0].mxu0
    %v1737 = vadd.f32 0.0, %v1736
    %v1738 = vpop.f32.mrb[0].mxu0
    %v1739 = vadd.f32 0.0, %v1738
    %v1740 = vpop.f32.mrb[0].mxu0
    %v1741 = vadd.f32 0.0, %v1740
    %1742 = vdwg.mxu0
    %v1743 = vadd.f32 %v1572, %v1675
    %v1744 = vadd.f32 %v1574, %v1677
    %v1745 = vadd.f32 %v1576, %v1679
    %v1746 = vadd.f32 %v1578, %v1681
    %v1747 = vadd.f32 %v1582, %v1685
    %v1748 = vadd.f32 %v1584, %v1687
    %v1749 = vadd.f32 %v1586, %v1689
    %v1750 = vadd.f32 %v1588, %v1691
    %v1751 = vadd.f32 %v1592, %v1695
    %v1752 = vadd.f32 %v1594, %v1697
    %v1753 = vadd.f32 %v1596, %v1699
    %v1754 = vadd.f32 %v1598, %v1701
    %v1755 = vadd.f32 %v1602, %v1705
    %v1756 = vadd.f32 %v1604, %v1707
    %v1757 = vadd.f32 %v1606, %v1709
    %v1758 = vadd.f32 %v1608, %v1711
    %v1759 = vadd.f32 %v1612, %v1715
    %v1760 = vadd.f32 %v1614, %v1717
    %v1761 = vadd.f32 %v1616, %v1719
    %v1762 = vadd.f32 %v1618, %v1721
    %v1763 = vadd.f32 %v1622, %v1725
    %v1764 = vadd.f32 %v1624, %v1727
    %v1765 = vadd.f32 %v1626, %v1729
    %v1766 = vadd.f32 %v1628, %v1731
    %v1767 = vadd.f32 %v1632, %v1735
    %v1768 = vadd.f32 %v1634, %v1737
    %v1769 = vadd.f32 %v1636, %v1739
    %v1770 = vadd.f32 %v1638, %v1741
    %1771 = vmatprep.subr.bf16.mxu0 %v987
    %1772 = vmatpush1.bf16.msra.mxu0 %v986
    %1773 = vmatprep.subr.bf16.mxu0 %v989
    %1774 = vmatpush1.bf16.msra.mxu0 %v988
    %1775 = vmatprep.subr.bf16.mxu0 %v991
    %1776 = vmatpush1.bf16.msra.mxu0 %v990
    %1777 = vmatprep.subr.bf16.mxu0 %v993
    %1778 = vmatpush1.bf16.msra.mxu0 %v992
    %1779 = vmatprep.subr.bf16.mxu0 %v995
    %1780 = vmatpush1.bf16.msra.mxu0 %v994
    %1781 = vmatprep.subr.bf16.mxu0 %v997
    %1782 = vmatpush1.bf16.msra.mxu0 %v996
    %1783 = vmatprep.subr.bf16.mxu0 %v999
    %1784 = vmatpush1.bf16.msra.mxu0 %v998
    %1785 = vmatprep.subr.bf16.mxu0 %v1001
    %1786 = vmatpush1.bf16.msra.mxu0 %v1000
    %1787 = vmatprep.subr.bf16.mxu0 0
    %1788 = vmatpush1.bf16.msra.mxu0 0
    %1789 = vmatprep.subr.bf16.mxu0 0
    %1790 = vmatpush1.bf16.msra.mxu0 0
    %1791 = vmatprep.subr.bf16.mxu0 0
    %1792 = vmatpush1.bf16.msra.mxu0 0
    %1793 = vmatprep.subr.bf16.mxu0 0
    %1794 = vmatpush1.bf16.msra.mxu0 0
    %1795 = vmatprep.subr.bf16.mxu0 0
    %1796 = vmatpush1.bf16.msra.mxu0 0
    %1797 = vmatprep.subr.bf16.mxu0 0
    %1798 = vmatpush1.bf16.msra.mxu0 0
    %1799 = vmatprep.subr.bf16.mxu0 0
    %1800 = vmatpush1.bf16.msra.mxu0 0
    %1801 = vmatprep.subr.bf16.mxu0 0
    %1802 = vmatpush1.bf16.msra.mxu0 0
    %1803 = vmatprep.mubr.bf16.mxu0 0
    %1804 = vmatmul.mubr.bf16.gmra.mrb[0].mxu0 %v1209
    %v1805 = vpop.f32.mrb[0].mxu0
    %v1806 = vadd.f32 0.0, %v1805
    %v1807 = vpop.f32.mrb[0].mxu0
    %v1808 = vadd.f32 0.0, %v1807
    %v1809 = vpop.f32.mrb[0].mxu0
    %v1810 = vadd.f32 0.0, %v1809
    %v1811 = vpop.f32.mrb[0].mxu0
    %v1812 = vadd.f32 0.0, %v1811
    %1813 = vmatprep.mubr.bf16.mxu0 0
    %1814 = vmatmul.mubr.bf16.gmra.mrb[0].mxu0 %v1210
    %v1815 = vpop.f32.mrb[0].mxu0
    %v1816 = vadd.f32 0.0, %v1815
    %v1817 = vpop.f32.mrb[0].mxu0
    %v1818 = vadd.f32 0.0, %v1817
    %v1819 = vpop.f32.mrb[0].mxu0
    %v1820 = vadd.f32 0.0, %v1819
    %v1821 = vpop.f32.mrb[0].mxu0
    %v1822 = vadd.f32 0.0, %v1821
    %1823 = vmatprep.mubr.bf16.mxu0 0
    %1824 = vmatmul.mubr.bf16.gmra.mrb[0].mxu0 %v1211
    %v1825 = vpop.f32.mrb[0].mxu0
    %v1826 = vadd.f32 0.0, %v1825
    %v1827 = vpop.f32.mrb[0].mxu0
    %v1828 = vadd.f32 0.0, %v1827
    %v1829 = vpop.f32.mrb[0].mxu0
    %v1830 = vadd.f32 0.0, %v1829
    %v1831 = vpop.f32.mrb[0].mxu0
    %v1832 = vadd.f32 0.0, %v1831
    %1833 = vmatprep.mubr.bf16.mxu0 0
    %1834 = vmatmul.mubr.bf16.gmra.mrb[0].mxu0 %v1212
    %v1835 = vpop.f32.mrb[0].mxu0
    %v1836 = vadd.f32 0.0, %v1835
    %v1837 = vpop.f32.mrb[0].mxu0
    %v1838 = vadd.f32 0.0, %v1837
    %v1839 = vpop.f32.mrb[0].mxu0
    %v1840 = vadd.f32 0.0, %v1839
    %v1841 = vpop.f32.mrb[0].mxu0
    %v1842 = vadd.f32 0.0, %v1841
    %1843 = vmatprep.mubr.bf16.mxu0 0
    %1844 = vmatmul.mubr.bf16.gmra.mrb[0].mxu0 %v1213
    %v1845 = vpop.f32.mrb[0].mxu0
    %v1846 = vadd.f32 0.0, %v1845
    %v1847 = vpop.f32.mrb[0].mxu0
    %v1848 = vadd.f32 0.0, %v1847
    %v1849 = vpop.f32.mrb[0].mxu0
    %v1850 = vadd.f32 0.0, %v1849
    %v1851 = vpop.f32.mrb[0].mxu0
    %v1852 = vadd.f32 0.0, %v1851
    %1853 = vmatprep.mubr.bf16.mxu0 0
    %1854 = vmatmul.mubr.bf16.gmra.mrb[0].mxu0 %v1214
    %v1855 = vpop.f32.mrb[0].mxu0
    %v1856 = vadd.f32 0.0, %v1855
    %v1857 = vpop.f32.mrb[0].mxu0
    %v1858 = vadd.f32 0.0, %v1857
    %v1859 = vpop.f32.mrb[0].mxu0
    %v1860 = vadd.f32 0.0, %v1859
    %v1861 = vpop.f32.mrb[0].mxu0
    %v1862 = vadd.f32 0.0, %v1861
    %1863 = vmatprep.mubr.bf16.mxu0 0
    %1864 = vmatmul.mubr.bf16.gmra.mrb[0].mxu0 %v1215
    %v1865 = vpop.f32.mrb[0].mxu0
    %v1866 = vadd.f32 0.0, %v1865
    %v1867 = vpop.f32.mrb[0].mxu0
    %v1868 = vadd.f32 0.0, %v1867
    %v1869 = vpop.f32.mrb[0].mxu0
    %v1870 = vadd.f32 0.0, %v1869
    %v1871 = vpop.f32.mrb[0].mxu0
    %v1872 = vadd.f32 0.0, %v1871
    %1873 = vdwg.mxu0
    %v1874 = vadd.f32 %v1743, %v1806
    %v1875 = vadd.f32 %v1744, %v1808
    %v1876 = vadd.f32 %v1745, %v1810
    %v1877 = vadd.f32 %v1746, %v1812
    %v1878 = vadd.f32 %v1747, %v1816
    %v1879 = vadd.f32 %v1748, %v1818
    %v1880 = vadd.f32 %v1749, %v1820
    %v1881 = vadd.f32 %v1750, %v1822
    %v1882 = vadd.f32 %v1751, %v1826
    %v1883 = vadd.f32 %v1752, %v1828
    %v1884 = vadd.f32 %v1753, %v1830
    %v1885 = vadd.f32 %v1754, %v1832
    %v1886 = vadd.f32 %v1755, %v1836
    %v1887 = vadd.f32 %v1756, %v1838
    %v1888 = vadd.f32 %v1757, %v1840
    %v1889 = vadd.f32 %v1758, %v1842
    %v1890 = vadd.f32 %v1759, %v1846
    %v1891 = vadd.f32 %v1760, %v1848
    %v1892 = vadd.f32 %v1761, %v1850
    %v1893 = vadd.f32 %v1762, %v1852
    %v1894 = vadd.f32 %v1763, %v1856
    %v1895 = vadd.f32 %v1764, %v1858
    %v1896 = vadd.f32 %v1765, %v1860
    %v1897 = vadd.f32 %v1766, %v1862
    %v1898 = vadd.f32 %v1767, %v1866
    %v1899 = vadd.f32 %v1768, %v1868
    %v1900 = vadd.f32 %v1769, %v1870
    %v1901 = vadd.f32 %v1770, %v1872
    %s1902 = scalar_lea.vmem %s0, 72
    %v1903 = vld [vmem:[%s1902] sm:$0xf]
    %v1904 = vld [vmem:[%s1902 + $0x4] sm:$0xf]
    %v1905 = vld [vmem:[%s1902 + $0x8] sm:$0xf]
    %v1906 = vld [vmem:[%s1902 + $0xc] sm:$0xf]
    %v1907 = vld [vmem:[%s1902 + $0x10] sm:$0xf]
    %v1908 = vld [vmem:[%s1902 + $0x14] sm:$0xf]
    %v1909 = vld [vmem:[%s1902 + $0x18] sm:$0xf]
    %v1910 = vld [vmem:[%s1902 + $0x1c] sm:$0xf]
    %v1911 = vld [vmem:[%s1902 + $0x20] sm:$0xf]
    %v1912 = vld [vmem:[%s1902 + $0x24] sm:$0xf]
    %v1913 = vld [vmem:[%s1902 + $0x28] sm:$0xf]
    %v1914 = vld [vmem:[%s1902 + $0x2c] sm:$0xf]
    %v1915 = vld [vmem:[%s1902 + $0x30] sm:$0xf]
    %v1916 = vld [vmem:[%s1902 + $0x34] sm:$0xf]
    %v1931 = vunpack.c.l.b16 %v1903
    %v1932 = vunpack.c.l.b16 %v1904
    %v1933 = vunpack.c.l.b16 %v1905
    %v1934 = vunpack.c.l.b16 %v1906
    %v1935 = vunpack.c.l.b16 %v1907
    %v1936 = vunpack.c.l.b16 %v1908
    %v1937 = vunpack.c.l.b16 %v1909
    %v1938 = vunpack.c.l.b16 %v1910
    %v1939 = vunpack.c.l.b16 %v1911
    %v1940 = vunpack.c.l.b16 %v1912
    %v1941 = vunpack.c.l.b16 %v1913
    %v1942 = vunpack.c.l.b16 %v1914
    %v1943 = vunpack.c.l.b16 %v1915
    %v1944 = vunpack.c.l.b16 %v1916
    %v1945 = vpack.c.b16 %v1932, %v1931
    %v1946 = vpack.c.b16 %v1934, %v1933
    %v1947 = vpack.c.b16 %v1936, %v1935
    %v1948 = vpack.c.b16 %v1938, %v1937
    %v1949 = vpack.c.b16 %v1940, %v1939
    %v1950 = vpack.c.b16 %v1942, %v1941
    %v1951 = vpack.c.b16 %v1944, %v1943
    %1959 = vmatprep.subr.bf16.mxu0 %v1272
    %1960 = vmatpush1.bf16.msra.mxu0 %v1271
    %1961 = vmatprep.subr.bf16.mxu0 %v1274
    %1962 = vmatpush1.bf16.msra.mxu0 %v1273
    %1963 = vmatprep.subr.bf16.mxu0 %v1276
    %1964 = vmatpush1.bf16.msra.mxu0 %v1275
    %1965 = vmatprep.subr.bf16.mxu0 %v1278
    %1966 = vmatpush1.bf16.msra.mxu0 %v1277
    %1967 = vmatprep.subr.bf16.mxu0 %v1280
    %1968 = vmatpush1.bf16.msra.mxu0 %v1279
    %1969 = vmatprep.subr.bf16.mxu0 %v1282
    %1970 = vmatpush1.bf16.msra.mxu0 %v1281
    %1971 = vmatprep.subr.bf16.mxu0 %v1284
    %1972 = vmatpush1.bf16.msra.mxu0 %v1283
    %1973 = vmatprep.subr.bf16.mxu0 %v1286
    %1974 = vmatpush1.bf16.msra.mxu0 %v1285
    %1975 = vmatprep.subr.bf16.mxu0 0
    %1976 = vmatpush1.bf16.msra.mxu0 0
    %1977 = vmatprep.subr.bf16.mxu0 0
    %1978 = vmatpush1.bf16.msra.mxu0 0
    %1979 = vmatprep.subr.bf16.mxu0 0
    %1980 = vmatpush1.bf16.msra.mxu0 0
    %1981 = vmatprep.subr.bf16.mxu0 0
    %1982 = vmatpush1.bf16.msra.mxu0 0
    %1983 = vmatprep.subr.bf16.mxu0 0
    %1984 = vmatpush1.bf16.msra.mxu0 0
    %1985 = vmatprep.subr.bf16.mxu0 0
    %1986 = vmatpush1.bf16.msra.mxu0 0
    %1987 = vmatprep.subr.bf16.mxu0 0
    %1988 = vmatpush1.bf16.msra.mxu0 0
    %1989 = vmatprep.subr.bf16.mxu0 0
    %1990 = vmatpush1.bf16.msra.mxu0 0
    %1991 = vmatprep.mubr.bf16.mxu0 0
    %1992 = vmatmul.mubr.bf16.gmra.mrb[0].mxu0 %v1945
    %v1993 = vpop.f32.mrb[0].mxu0
    %v1994 = vadd.f32 0.0, %v1993
    %v1995 = vpop.f32.mrb[0].mxu0
    %v1996 = vadd.f32 0.0, %v1995
    %v1997 = vpop.f32.mrb[0].mxu0
    %v1998 = vadd.f32 0.0, %v1997
    %v1999 = vpop.f32.mrb[0].mxu0
    %v2000 = vadd.f32 0.0, %v1999
    %2001 = vmatprep.mubr.bf16.mxu0 0
    %2002 = vmatmul.mubr.bf16.gmra.mrb[0].mxu0 %v1946
    %v2003 = vpop.f32.mrb[0].mxu0
    %v2004 = vadd.f32 0.0, %v2003
    %v2005 = vpop.f32.mrb[0].mxu0
    %v2006 = vadd.f32 0.0, %v2005
    %v2007 = vpop.f32.mrb[0].mxu0
    %v2008 = vadd.f32 0.0, %v2007
    %v2009 = vpop.f32.mrb[0].mxu0
    %v2010 = vadd.f32 0.0, %v2009
    %2011 = vmatprep.mubr.bf16.mxu0 0
    %2012 = vmatmul.mubr.bf16.gmra.mrb[0].mxu0 %v1947
    %v2013 = vpop.f32.mrb[0].mxu0
    %v2014 = vadd.f32 0.0, %v2013
    %v2015 = vpop.f32.mrb[0].mxu0
    %v2016 = vadd.f32 0.0, %v2015
    %v2017 = vpop.f32.mrb[0].mxu0
    %v2018 = vadd.f32 0.0, %v2017
    %v2019 = vpop.f32.mrb[0].mxu0
    %v2020 = vadd.f32 0.0, %v2019
    %2021 = vmatprep.mubr.bf16.mxu0 0
    %2022 = vmatmul.mubr.bf16.gmra.mrb[0].mxu0 %v1948
    %v2023 = vpop.f32.mrb[0].mxu0
    %v2024 = vadd.f32 0.0, %v2023
    %v2025 = vpop.f32.mrb[0].mxu0
    %v2026 = vadd.f32 0.0, %v2025
    %v2027 = vpop.f32.mrb[0].mxu0
    %v2028 = vadd.f32 0.0, %v2027
    %v2029 = vpop.f32.mrb[0].mxu0
    %v2030 = vadd.f32 0.0, %v2029
    %2031 = vmatprep.mubr.bf16.mxu0 0
    %2032 = vmatmul.mubr.bf16.gmra.mrb[0].mxu0 %v1949
    %v2033 = vpop.f32.mrb[0].mxu0
    %v2034 = vadd.f32 0.0, %v2033
    %v2035 = vpop.f32.mrb[0].mxu0
    %v2036 = vadd.f32 0.0, %v2035
    %v2037 = vpop.f32.mrb[0].mxu0
    %v2038 = vadd.f32 0.0, %v2037
    %v2039 = vpop.f32.mrb[0].mxu0
    %v2040 = vadd.f32 0.0, %v2039
    %2041 = vmatprep.mubr.bf16.mxu0 0
    %2042 = vmatmul.mubr.bf16.gmra.mrb[0].mxu0 %v1950
    %v2043 = vpop.f32.mrb[0].mxu0
    %v2044 = vadd.f32 0.0, %v2043
    %v2045 = vpop.f32.mrb[0].mxu0
    %v2046 = vadd.f32 0.0, %v2045
    %v2047 = vpop.f32.mrb[0].mxu0
    %v2048 = vadd.f32 0.0, %v2047
    %v2049 = vpop.f32.mrb[0].mxu0
    %v2050 = vadd.f32 0.0, %v2049
    %2051 = vmatprep.mubr.bf16.mxu0 0
    %2052 = vmatmul.mubr.bf16.gmra.mrb[0].mxu0 %v1951
    %v2053 = vpop.f32.mrb[0].mxu0
    %v2054 = vadd.f32 0.0, %v2053
    %v2055 = vpop.f32.mrb[0].mxu0
    %v2056 = vadd.f32 0.0, %v2055
    %v2057 = vpop.f32.mrb[0].mxu0
    %v2058 = vadd.f32 0.0, %v2057
    %v2059 = vpop.f32.mrb[0].mxu0
    %v2060 = vadd.f32 0.0, %v2059
    %2061 = vdwg.mxu0
    %v2062 = vadd.f32 %v1874, %v1994
    %v2063 = vadd.f32 %v1875, %v1996
    %v2064 = vadd.f32 %v1876, %v1998
    %v2065 = vadd.f32 %v1877, %v2000
    %v2066 = vadd.f32 %v1878, %v2004
    %v2067 = vadd.f32 %v1879, %v2006
    %v2068 = vadd.f32 %v1880, %v2008
    %v2069 = vadd.f32 %v1881, %v2010
    %v2070 = vadd.f32 %v1882, %v2014
    %v2071 = vadd.f32 %v1883, %v2016
    %v2072 = vadd.f32 %v1884, %v2018
    %v2073 = vadd.f32 %v1885, %v2020
    %v2074 = vadd.f32 %v1886, %v2024
    %v2075 = vadd.f32 %v1887, %v2026
    %v2076 = vadd.f32 %v1888, %v2028
    %v2077 = vadd.f32 %v1889, %v2030
    %v2078 = vadd.f32 %v1890, %v2034
    %v2079 = vadd.f32 %v1891, %v2036
    %v2080 = vadd.f32 %v1892, %v2038
    %v2081 = vadd.f32 %v1893, %v2040
    %v2082 = vadd.f32 %v1894, %v2044
    %v2083 = vadd.f32 %v1895, %v2046
    %v2084 = vadd.f32 %v1896, %v2048
    %v2085 = vadd.f32 %v1897, %v2050
    %v2086 = vadd.f32 %v1898, %v2054
    %v2087 = vadd.f32 %v1899, %v2056
    %v2088 = vadd.f32 %v1900, %v2058
    %v2089 = vadd.f32 %v1901, %v2060
    %v2090 = vmax.f32 %v1406, %v2062
    %v2091 = vmax.f32 %v1407, %v2063
    %v2092 = vmax.f32 %v1408, %v2064
    %v2093 = vmax.f32 %v1409, %v2065
    %v2094 = vmax.f32 %v1410, %v2066
    %v2095 = vmax.f32 %v1411, %v2067
    %v2096 = vmax.f32 %v1412, %v2068
    %v2097 = vmax.f32 %v1413, %v2069
    %v2098 = vmax.f32 %v1414, %v2070
    %v2099 = vmax.f32 %v1415, %v2071
    %v2100 = vmax.f32 %v1416, %v2072
    %v2101 = vmax.f32 %v1417, %v2073
    %v2102 = vmax.f32 %v1418, %v2074
    %v2103 = vmax.f32 %v1419, %v2075
    %v2104 = vmax.f32 %v1420, %v2076
    %v2105 = vmax.f32 %v1421, %v2077
    %v2106 = vmax.f32 %v1422, %v2078
    %v2107 = vmax.f32 %v1423, %v2079
    %v2108 = vmax.f32 %v1424, %v2080
    %v2109 = vmax.f32 %v1425, %v2081
    %v2110 = vmax.f32 %v1426, %v2082
    %v2111 = vmax.f32 %v1427, %v2083
    %v2112 = vmax.f32 %v1428, %v2084
    %v2113 = vmax.f32 %v1429, %v2085
    %v2114 = vmax.f32 %v1430, %v2086
    %v2115 = vmax.f32 %v1431, %v2087
    %v2116 = vmax.f32 %v1432, %v2088
    %v2117 = vmax.f32 %v1433, %v2089
    %v2118 = vmax.f32 %v2090, %v2091
    %v2119 = vmax.f32 %v2092, %v2093
    %v2120 = vmax.f32 %v2094, %v2095
    %v2121 = vmax.f32 %v2096, %v2097
    %v2122 = vmax.f32 %v2098, %v2099
    %v2123 = vmax.f32 %v2100, %v2101
    %v2124 = vmax.f32 %v2102, %v2103
    %v2125 = vmax.f32 %v2104, %v2105
    %v2126 = vmax.f32 %v2106, %v2107
    %v2127 = vmax.f32 %v2108, %v2109
    %v2128 = vmax.f32 %v2110, %v2111
    %v2129 = vmax.f32 %v2112, %v2113
    %v2130 = vmax.f32 %v2114, %v2115
    %v2131 = vmax.f32 %v2116, %v2117
    %v2132 = vld [vmem:[%s2] sm:$0x1]
    %v2134 = vlaneseq
    %v2135 = vshrl.u32 %v2134, 7
    %v2136 = vsub.s32 0, %v2135
    %v2137 = vrot.slane %v2132, %v2136
    %v2139 = vadd.f32 %v2118, %v2137
    %v2140 = vadd.f32 %v2119, %v2137
    %v2141 = vadd.f32 %v2120, %v2137
    %v2142 = vadd.f32 %v2121, %v2137
    %v2143 = vadd.f32 %v2122, %v2137
    %v2144 = vadd.f32 %v2123, %v2137
    %v2145 = vadd.f32 %v2124, %v2137
    %v2146 = vadd.f32 %v2125, %v2137
    %v2147 = vadd.f32 %v2126, %v2137
    %v2148 = vadd.f32 %v2127, %v2137
    %v2149 = vadd.f32 %v2128, %v2137
    %v2150 = vadd.f32 %v2129, %v2137
    %v2151 = vadd.f32 %v2130, %v2137
    %v2152 = vadd.f32 %v2131, %v2137
    %v2153 = vmax.f32 %v2139, 0.0
    %v2154 = vmax.f32 %v2140, 0.0
    %v2155 = vmax.f32 %v2141, 0.0
    %v2156 = vmax.f32 %v2142, 0.0
    %v2157 = vmax.f32 %v2143, 0.0
    %v2158 = vmax.f32 %v2144, 0.0
    %v2159 = vmax.f32 %v2145, 0.0
    %v2160 = vmax.f32 %v2146, 0.0
    %v2161 = vmax.f32 %v2147, 0.0
    %v2162 = vmax.f32 %v2148, 0.0
    %v2163 = vmax.f32 %v2149, 0.0
    %v2164 = vmax.f32 %v2150, 0.0
    %v2165 = vmax.f32 %v2151, 0.0
    %v2166 = vmax.f32 %v2152, 0.0
    %v2167 = vpack.c.bf16 %v2154, %v2153
    %v2168 = vpack.c.bf16 %v2156, %v2155
    %v2169 = vpack.c.bf16 %v2158, %v2157
    %v2170 = vpack.c.bf16 %v2160, %v2159
    %v2171 = vpack.c.bf16 %v2162, %v2161
    %v2172 = vpack.c.bf16 %v2164, %v2163
    %v2173 = vpack.c.bf16 %v2166, %v2165
    %v2175 = vrot.slane %v2168, 4
    %v2177 = vrot.slane %v2170, 4
    %vm2178 = vcmask 1043456
    %v2181 = vsel %vm2178, %v2167, %v2175
    %v2185 = vsel %vm2178, %v2169, %v2177
    %v2187 = vld [vmem:[#allocation2] sm:$0xff]
    %v2188 = vld [vmem:[#allocation2 + $0x8] sm:$0xff]
    %v2189 = vld [vmem:[#allocation2 + $0x10] sm:$0xff]
    %v2190 = vld [vmem:[#allocation2 + $0x18] sm:$0xff]
    %v2191 = vld [vmem:[#allocation2 + $0x20] sm:$0xff]
    %v2192 = vld [vmem:[#allocation2 + $0x28] sm:$0xff]
    %v2193 = vld [vmem:[#allocation2 + $0x30] sm:$0xff]
    %v2194 = vld [vmem:[#allocation2 + $0x38] sm:$0xff]
    %v2195 = vld [vmem:[#allocation2 + $0x40] sm:$0xff]
    %v2196 = vld [vmem:[#allocation2 + $0x48] sm:$0xff]
    %v2197 = vld [vmem:[#allocation2 + $0x50] sm:$0xff]
    %v2198 = vld [vmem:[#allocation2 + $0x58] sm:$0xff]
    %v2199 = vld [vmem:[#allocation2 + $0x60] sm:$0xff]
    %v2200 = vld [vmem:[#allocation2 + $0x68] sm:$0xff]
    %v2201 = vld [vmem:[#allocation2 + $0x70] sm:$0xff]
    %v2202 = vld [vmem:[#allocation2 + $0x78] sm:$0xff]
    %v2204 = vrot.slane %v2167, 4
    %v2206 = vrot.slane %v2169, 4
    %v2208 = vrot.slane %v2171, 4
    %v2212 = vsel %vm2178, %v2204, %v2168
    %v2216 = vsel %vm2178, %v2206, %v2170
    %s2218 = scalar_lea.vmem [#allocation2], 128
    %v2219 = vld [vmem:[%s2218] sm:$0xff]
    %v2220 = vld [vmem:[%s2218 + $0x8] sm:$0xff]
    %v2221 = vld [vmem:[%s2218 + $0x10] sm:$0xff]
    %v2222 = vld [vmem:[%s2218 + $0x18] sm:$0xff]
    %v2223 = vld [vmem:[%s2218 + $0x20] sm:$0xff]
    %v2224 = vld [vmem:[%s2218 + $0x28] sm:$0xff]
    %v2225 = vld [vmem:[%s2218 + $0x30] sm:$0xff]
    %v2226 = vld [vmem:[%s2218 + $0x38] sm:$0xff]
    %v2227 = vld [vmem:[%s2218 + $0x40] sm:$0xff]
    %v2228 = vld [vmem:[%s2218 + $0x48] sm:$0xff]
    %v2229 = vld [vmem:[%s2218 + $0x50] sm:$0xff]
    %v2230 = vld [vmem:[%s2218 + $0x58] sm:$0xff]
    %v2231 = vld [vmem:[%s2218 + $0x60] sm:$0xff]
    %v2232 = vld [vmem:[%s2218 + $0x68] sm:$0xff]
    %v2233 = vld [vmem:[%s2218 + $0x70] sm:$0xff]
    %v2234 = vld [vmem:[%s2218 + $0x78] sm:$0xff]
    %v2251 = vunpack.c.l.b16 %v2219
    %v2252 = vunpack.c.h.b16 %v2219
    %v2253 = vunpack.c.l.b16 %v2220
    %v2254 = vunpack.c.h.b16 %v2220
    %v2255 = vunpack.c.l.b16 %v2221
    %v2256 = vunpack.c.h.b16 %v2221
    %v2257 = vunpack.c.l.b16 %v2222
    %v2258 = vunpack.c.h.b16 %v2222
    %v2259 = vunpack.c.l.b16 %v2223
    %v2260 = vunpack.c.h.b16 %v2223
    %v2261 = vunpack.c.l.b16 %v2224
    %v2262 = vunpack.c.h.b16 %v2224
    %v2263 = vunpack.c.l.b16 %v2225
    %v2264 = vunpack.c.h.b16 %v2225
    %v2265 = vunpack.c.l.b16 %v2226
    %v2266 = vunpack.c.h.b16 %v2226
    %v2267 = vunpack.c.l.b16 %v2227
    %v2268 = vunpack.c.h.b16 %v2227
    %v2269 = vunpack.c.l.b16 %v2228
    %v2270 = vunpack.c.h.b16 %v2228
    %v2271 = vunpack.c.l.b16 %v2229
    %v2272 = vunpack.c.h.b16 %v2229
    %v2273 = vunpack.c.l.b16 %v2230
    %v2274 = vunpack.c.h.b16 %v2230
    %v2275 = vunpack.c.l.b16 %v2231
    %v2276 = vunpack.c.h.b16 %v2231
    %v2277 = vunpack.c.l.b16 %v2232
    %v2278 = vunpack.c.h.b16 %v2232
    %v2279 = vunpack.c.l.b16 %v2233
    %v2280 = vunpack.c.h.b16 %v2233
    %v2281 = vunpack.c.l.b16 %v2234
    %v2282 = vunpack.c.h.b16 %v2234
    %v2283 = vpack.c.b16 %v2253, %v2251
    %v2284 = vpack.c.b16 %v2254, %v2252
    %v2285 = vpack.c.b16 %v2257, %v2255
    %v2286 = vpack.c.b16 %v2258, %v2256
    %v2287 = vpack.c.b16 %v2261, %v2259
    %v2288 = vpack.c.b16 %v2262, %v2260
    %v2289 = vpack.c.b16 %v2265, %v2263
    %v2290 = vpack.c.b16 %v2266, %v2264
    %v2291 = vpack.c.b16 %v2269, %v2267
    %v2292 = vpack.c.b16 %v2270, %v2268
    %v2293 = vpack.c.b16 %v2273, %v2271
    %v2294 = vpack.c.b16 %v2274, %v2272
    %v2295 = vpack.c.b16 %v2277, %v2275
    %v2296 = vpack.c.b16 %v2278, %v2276
    %v2297 = vpack.c.b16 %v2281, %v2279
    %v2298 = vpack.c.b16 %v2282, %v2280
    %2315 = vmatprep.subr.bf16.mxu0 %v2284
    %2316 = vmatpush1.bf16.msra.mxu0 %v2283
    %2317 = vmatprep.subr.bf16.mxu0 %v2286
    %2318 = vmatpush1.bf16.msra.mxu0 %v2285
    %2319 = vmatprep.subr.bf16.mxu0 %v2288
    %2320 = vmatpush1.bf16.msra.mxu0 %v2287
    %2321 = vmatprep.subr.bf16.mxu0 %v2290
    %2322 = vmatpush1.bf16.msra.mxu0 %v2289
    %2323 = vmatprep.subr.bf16.mxu0 %v2292
    %2324 = vmatpush1.bf16.msra.mxu0 %v2291
    %2325 = vmatprep.subr.bf16.mxu0 %v2294
    %2326 = vmatpush1.bf16.msra.mxu0 %v2293
    %2327 = vmatprep.subr.bf16.mxu0 %v2296
    %2328 = vmatpush1.bf16.msra.mxu0 %v2295
    %2329 = vmatprep.subr.bf16.mxu0 %v2298
    %2330 = vmatpush1.bf16.msra.mxu0 %v2297
    %2331 = vmatprep.subr.bf16.mxu0 0
    %2332 = vmatpush1.bf16.msra.mxu0 0
    %2333 = vmatprep.subr.bf16.mxu0 0
    %2334 = vmatpush1.bf16.msra.mxu0 0
    %2335 = vmatprep.subr.bf16.mxu0 0
    %2336 = vmatpush1.bf16.msra.mxu0 0
    %2337 = vmatprep.subr.bf16.mxu0 0
    %2338 = vmatpush1.bf16.msra.mxu0 0
    %2339 = vmatprep.subr.bf16.mxu0 0
    %2340 = vmatpush1.bf16.msra.mxu0 0
    %2341 = vmatprep.subr.bf16.mxu0 0
    %2342 = vmatpush1.bf16.msra.mxu0 0
    %2343 = vmatprep.subr.bf16.mxu0 0
    %2344 = vmatpush1.bf16.msra.mxu0 0
    %2345 = vmatprep.subr.bf16.mxu0 0
    %2346 = vmatpush1.bf16.msra.mxu0 0
    %2347 = vmatprep.mubr.bf16.mxu0 0
    %2348 = vmatmul.mubr.bf16.gmra.mrb[0].mxu0 %v2212
    %v2349 = vpop.f32.mrb[0].mxu0
    %v2350 = vadd.f32 0.0, %v2349
    %v2351 = vpop.f32.mrb[0].mxu0
    %v2352 = vadd.f32 0.0, %v2351
    %v2353 = vpop.f32.mrb[0].mxu0
    %v2354 = vadd.f32 0.0, %v2353
    %v2355 = vpop.f32.mrb[0].mxu0
    %v2356 = vadd.f32 0.0, %v2355
    %2357 = vmatprep.mubr.bf16.mxu0 0
    %2358 = vmatmul.mubr.bf16.gmra.mrb[0].mxu0 %v2216
    %v2359 = vpop.f32.mrb[0].mxu0
    %v2360 = vadd.f32 0.0, %v2359
    %v2361 = vpop.f32.mrb[0].mxu0
    %v2362 = vadd.f32 0.0, %v2361
    %v2363 = vpop.f32.mrb[0].mxu0
    %v2364 = vadd.f32 0.0, %v2363
    %v2365 = vpop.f32.mrb[0].mxu0
    %v2366 = vadd.f32 0.0, %v2365
    %2367 = vmatprep.mubr.bf16.mxu0 0
    %2368 = vmatmul.mubr.bf16.gmra.mrb[0].mxu0 %v2208
    %v2369 = vpop.f32.mrb[0].mxu0
    %v2370 = vadd.f32 0.0, %v2369
    %v2371 = vpop.f32.mrb[0].mxu0
    %v2372 = vadd.f32 0.0, %v2371
    %v2373 = vpop.f32.mrb[0].mxu0
    %v2374 = vpop.f32.mrb[0].mxu0
    %2375 = vdwg.mxu0
    %v2392 = vunpack.c.l.b16 %v2187
    %v2393 = vunpack.c.h.b16 %v2187
    %v2394 = vunpack.c.l.b16 %v2188
    %v2395 = vunpack.c.h.b16 %v2188
    %v2396 = vunpack.c.l.b16 %v2189
    %v2397 = vunpack.c.h.b16 %v2189
    %v2398 = vunpack.c.l.b16 %v2190
    %v2399 = vunpack.c.h.b16 %v2190
    %v2400 = vunpack.c.l.b16 %v2191
    %v2401 = vunpack.c.h.b16 %v2191
    %v2402 = vunpack.c.l.b16 %v2192
    %v2403 = vunpack.c.h.b16 %v2192
    %v2404 = vunpack.c.l.b16 %v2193
    %v2405 = vunpack.c.h.b16 %v2193
    %v2406 = vunpack.c.l.b16 %v2194
    %v2407 = vunpack.c.h.b16 %v2194
    %v2408 = vunpack.c.l.b16 %v2195
    %v2409 = vunpack.c.h.b16 %v2195
    %v2410 = vunpack.c.l.b16 %v2196
    %v2411 = vunpack.c.h.b16 %v2196
    %v2412 = vunpack.c.l.b16 %v2197
    %v2413 = vunpack.c.h.b16 %v2197
    %v2414 = vunpack.c.l.b16 %v2198
    %v2415 = vunpack.c.h.b16 %v2198
    %v2416 = vunpack.c.l.b16 %v2199
    %v2417 = vunpack.c.h.b16 %v2199
    %v2418 = vunpack.c.l.b16 %v2200
    %v2419 = vunpack.c.h.b16 %v2200
    %v2420 = vunpack.c.l.b16 %v2201
    %v2421 = vunpack.c.h.b16 %v2201
    %v2422 = vunpack.c.l.b16 %v2202
    %v2423 = vunpack.c.h.b16 %v2202
    %v2424 = vpack.c.b16 %v2394, %v2392
    %v2425 = vpack.c.b16 %v2395, %v2393
    %v2426 = vpack.c.b16 %v2398, %v2396
    %v2427 = vpack.c.b16 %v2399, %v2397
    %v2428 = vpack.c.b16 %v2402, %v2400
    %v2429 = vpack.c.b16 %v2403, %v2401
    %v2430 = vpack.c.b16 %v2406, %v2404
    %v2431 = vpack.c.b16 %v2407, %v2405
    %v2432 = vpack.c.b16 %v2410, %v2408
    %v2433 = vpack.c.b16 %v2411, %v2409
    %v2434 = vpack.c.b16 %v2414, %v2412
    %v2435 = vpack.c.b16 %v2415, %v2413
    %v2436 = vpack.c.b16 %v2418, %v2416
    %v2437 = vpack.c.b16 %v2419, %v2417
    %v2438 = vpack.c.b16 %v2422, %v2420
    %v2439 = vpack.c.b16 %v2423, %v2421
    %2456 = vmatprep.subr.bf16.mxu0 %v2425
    %2457 = vmatpush1.bf16.msra.mxu0 %v2424
    %2458 = vmatprep.subr.bf16.mxu0 %v2427
    %2459 = vmatpush1.bf16.msra.mxu0 %v2426
    %2460 = vmatprep.subr.bf16.mxu0 %v2429
    %2461 = vmatpush1.bf16.msra.mxu0 %v2428
    %2462 = vmatprep.subr.bf16.mxu0 %v2431
    %2463 = vmatpush1.bf16.msra.mxu0 %v2430
    %2464 = vmatprep.subr.bf16.mxu0 %v2433
    %2465 = vmatpush1.bf16.msra.mxu0 %v2432
    %2466 = vmatprep.subr.bf16.mxu0 %v2435
    %2467 = vmatpush1.bf16.msra.mxu0 %v2434
    %2468 = vmatprep.subr.bf16.mxu0 %v2437
    %2469 = vmatpush1.bf16.msra.mxu0 %v2436
    %2470 = vmatprep.subr.bf16.mxu0 %v2439
    %2471 = vmatpush1.bf16.msra.mxu0 %v2438
    %2472 = vmatprep.subr.bf16.mxu0 0
    %2473 = vmatpush1.bf16.msra.mxu0 0
    %2474 = vmatprep.subr.bf16.mxu0 0
    %2475 = vmatpush1.bf16.msra.mxu0 0
    %2476 = vmatprep.subr.bf16.mxu0 0
    %2477 = vmatpush1.bf16.msra.mxu0 0
    %2478 = vmatprep.subr.bf16.mxu0 0
    %2479 = vmatpush1.bf16.msra.mxu0 0
    %2480 = vmatprep.subr.bf16.mxu0 0
    %2481 = vmatpush1.bf16.msra.mxu0 0
    %2482 = vmatprep.subr.bf16.mxu0 0
    %2483 = vmatpush1.bf16.msra.mxu0 0
    %2484 = vmatprep.subr.bf16.mxu0 0
    %2485 = vmatpush1.bf16.msra.mxu0 0
    %2486 = vmatprep.subr.bf16.mxu0 0
    %2487 = vmatpush1.bf16.msra.mxu0 0
    %2488 = vmatprep.mubr.bf16.mxu0 0
    %2489 = vmatmul.mubr.bf16.gmra.mrb[0].mxu0 %v2181
    %v2490 = vpop.f32.mrb[0].mxu0
    %v2491 = vadd.f32 %v2350, %v2490
    %v2492 = vpop.f32.mrb[0].mxu0
    %v2493 = vadd.f32 %v2352, %v2492
    %v2494 = vpop.f32.mrb[0].mxu0
    %v2495 = vadd.f32 %v2354, %v2494
    %v2496 = vpop.f32.mrb[0].mxu0
    %v2497 = vadd.f32 %v2356, %v2496
    %2498 = vmatprep.mubr.bf16.mxu0 0
    %2499 = vmatmul.mubr.bf16.gmra.mrb[0].mxu0 %v2185
    %v2500 = vpop.f32.mrb[0].mxu0
    %v2501 = vadd.f32 %v2360, %v2500
    %v2502 = vpop.f32.mrb[0].mxu0
    %v2503 = vadd.f32 %v2362, %v2502
    %v2504 = vpop.f32.mrb[0].mxu0
    %v2505 = vadd.f32 %v2364, %v2504
    %v2506 = vpop.f32.mrb[0].mxu0
    %v2507 = vadd.f32 %v2366, %v2506
    %2508 = vmatprep.mubr.bf16.mxu0 0
    %2509 = vmatmul.mubr.bf16.gmra.mrb[0].mxu0 %v2171
    %v2510 = vpop.f32.mrb[0].mxu0
    %v2511 = vadd.f32 %v2370, %v2510
    %v2512 = vpop.f32.mrb[0].mxu0
    %v2513 = vadd.f32 %v2372, %v2512
    %v2514 = vpop.f32.mrb[0].mxu0
    %v2515 = vpop.f32.mrb[0].mxu0
    %2516 = vdwg.mxu0
    %v2517 = vsel %vm2178, %v2168, %v2206
    %v2520 = vsel %vm2178, %v2170, %v2208
    %s2522 = scalar_lea.vmem [#allocation2], 256
    %v2523 = vld [vmem:[%s2522] sm:$0xff]
    %v2524 = vld [vmem:[%s2522 + $0x8] sm:$0xff]
    %v2525 = vld [vmem:[%s2522 + $0x10] sm:$0xff]
    %v2526 = vld [vmem:[%s2522 + $0x18] sm:$0xff]
    %v2527 = vld [vmem:[%s2522 + $0x20] sm:$0xff]
    %v2528 = vld [vmem:[%s2522 + $0x28] sm:$0xff]
    %v2529 = vld [vmem:[%s2522 + $0x30] sm:$0xff]
    %v2530 = vld [vmem:[%s2522 + $0x38] sm:$0xff]
    %v2531 = vld [vmem:[%s2522 + $0x40] sm:$0xff]
    %v2532 = vld [vmem:[%s2522 + $0x48] sm:$0xff]
    %v2533 = vld [vmem:[%s2522 + $0x50] sm:$0xff]
    %v2534 = vld [vmem:[%s2522 + $0x58] sm:$0xff]
    %v2535 = vld [vmem:[%s2522 + $0x60] sm:$0xff]
    %v2536 = vld [vmem:[%s2522 + $0x68] sm:$0xff]
    %v2537 = vld [vmem:[%s2522 + $0x70] sm:$0xff]
    %v2538 = vld [vmem:[%s2522 + $0x78] sm:$0xff]
    %v2555 = vunpack.c.l.b16 %v2523
    %v2556 = vunpack.c.h.b16 %v2523
    %v2557 = vunpack.c.l.b16 %v2524
    %v2558 = vunpack.c.h.b16 %v2524
    %v2559 = vunpack.c.l.b16 %v2525
    %v2560 = vunpack.c.h.b16 %v2525
    %v2561 = vunpack.c.l.b16 %v2526
    %v2562 = vunpack.c.h.b16 %v2526
    %v2563 = vunpack.c.l.b16 %v2527
    %v2564 = vunpack.c.h.b16 %v2527
    %v2565 = vunpack.c.l.b16 %v2528
    %v2566 = vunpack.c.h.b16 %v2528
    %v2567 = vunpack.c.l.b16 %v2529
    %v2568 = vunpack.c.h.b16 %v2529
    %v2569 = vunpack.c.l.b16 %v2530
    %v2570 = vunpack.c.h.b16 %v2530
    %v2571 = vunpack.c.l.b16 %v2531
    %v2572 = vunpack.c.h.b16 %v2531
    %v2573 = vunpack.c.l.b16 %v2532
    %v2574 = vunpack.c.h.b16 %v2532
    %v2575 = vunpack.c.l.b16 %v2533
    %v2576 = vunpack.c.h.b16 %v2533
    %v2577 = vunpack.c.l.b16 %v2534
    %v2578 = vunpack.c.h.b16 %v2534
    %v2579 = vunpack.c.l.b16 %v2535
    %v2580 = vunpack.c.h.b16 %v2535
    %v2581 = vunpack.c.l.b16 %v2536
    %v2582 = vunpack.c.h.b16 %v2536
    %v2583 = vunpack.c.l.b16 %v2537
    %v2584 = vunpack.c.h.b16 %v2537
    %v2585 = vunpack.c.l.b16 %v2538
    %v2586 = vunpack.c.h.b16 %v2538
    %v2587 = vpack.c.b16 %v2557, %v2555
    %v2588 = vpack.c.b16 %v2558, %v2556
    %v2589 = vpack.c.b16 %v2561, %v2559
    %v2590 = vpack.c.b16 %v2562, %v2560
    %v2591 = vpack.c.b16 %v2565, %v2563
    %v2592 = vpack.c.b16 %v2566, %v2564
    %v2593 = vpack.c.b16 %v2569, %v2567
    %v2594 = vpack.c.b16 %v2570, %v2568
    %v2595 = vpack.c.b16 %v2573, %v2571
    %v2596 = vpack.c.b16 %v2574, %v2572
    %v2597 = vpack.c.b16 %v2577, %v2575
    %v2598 = vpack.c.b16 %v2578, %v2576
    %v2599 = vpack.c.b16 %v2581, %v2579
    %v2600 = vpack.c.b16 %v2582, %v2580
    %v2601 = vpack.c.b16 %v2585, %v2583
    %v2602 = vpack.c.b16 %v2586, %v2584
    %2619 = vmatprep.subr.bf16.mxu0 %v2588
    %2620 = vmatpush1.bf16.msra.mxu0 %v2587
    %2621 = vmatprep.subr.bf16.mxu0 %v2590
    %2622 = vmatpush1.bf16.msra.mxu0 %v2589
    %2623 = vmatprep.subr.bf16.mxu0 %v2592
    %2624 = vmatpush1.bf16.msra.mxu0 %v2591
    %2625 = vmatprep.subr.bf16.mxu0 %v2594
    %2626 = vmatpush1.bf16.msra.mxu0 %v2593
    %2627 = vmatprep.subr.bf16.mxu0 %v2596
    %2628 = vmatpush1.bf16.msra.mxu0 %v2595
    %2629 = vmatprep.subr.bf16.mxu0 %v2598
    %2630 = vmatpush1.bf16.msra.mxu0 %v2597
    %2631 = vmatprep.subr.bf16.mxu0 %v2600
    %2632 = vmatpush1.bf16.msra.mxu0 %v2599
    %2633 = vmatprep.subr.bf16.mxu0 %v2602
    %2634 = vmatpush1.bf16.msra.mxu0 %v2601
    %2635 = vmatprep.subr.bf16.mxu0 0
    %2636 = vmatpush1.bf16.msra.mxu0 0
    %2637 = vmatprep.subr.bf16.mxu0 0
    %2638 = vmatpush1.bf16.msra.mxu0 0
    %2639 = vmatprep.subr.bf16.mxu0 0
    %2640 = vmatpush1.bf16.msra.mxu0 0
    %2641 = vmatprep.subr.bf16.mxu0 0
    %2642 = vmatpush1.bf16.msra.mxu0 0
    %2643 = vmatprep.subr.bf16.mxu0 0
    %2644 = vmatpush1.bf16.msra.mxu0 0
    %2645 = vmatprep.subr.bf16.mxu0 0
    %2646 = vmatpush1.bf16.msra.mxu0 0
    %2647 = vmatprep.subr.bf16.mxu0 0
    %2648 = vmatpush1.bf16.msra.mxu0 0
    %2649 = vmatprep.subr.bf16.mxu0 0
    %2650 = vmatpush1.bf16.msra.mxu0 0
    %2651 = vmatprep.mubr.bf16.mxu0 0
    %2652 = vmatmul.mubr.bf16.gmra.mrb[0].mxu0 %v2517
    %v2653 = vpop.f32.mrb[0].mxu0
    %v2654 = vadd.f32 0.0, %v2653
    %v2655 = vpop.f32.mrb[0].mxu0
    %v2656 = vadd.f32 0.0, %v2655
    %v2657 = vpop.f32.mrb[0].mxu0
    %v2658 = vadd.f32 0.0, %v2657
    %v2659 = vpop.f32.mrb[0].mxu0
    %v2660 = vadd.f32 0.0, %v2659
    %2661 = vmatprep.mubr.bf16.mxu0 0
    %2662 = vmatmul.mubr.bf16.gmra.mrb[0].mxu0 %v2520
    %v2663 = vpop.f32.mrb[0].mxu0
    %v2664 = vadd.f32 0.0, %v2663
    %v2665 = vpop.f32.mrb[0].mxu0
    %v2666 = vadd.f32 0.0, %v2665
    %v2667 = vpop.f32.mrb[0].mxu0
    %v2668 = vadd.f32 0.0, %v2667
    %v2669 = vpop.f32.mrb[0].mxu0
    %v2670 = vadd.f32 0.0, %v2669
    %2671 = vmatprep.mubr.bf16.mxu0 0
    %2672 = vmatmul.mubr.bf16.gmra.mrb[0].mxu0 %v2172
    %v2673 = vpop.f32.mrb[0].mxu0
    %v2674 = vadd.f32 0.0, %v2673
    %v2675 = vpop.f32.mrb[0].mxu0
    %v2676 = vadd.f32 0.0, %v2675
    %v2677 = vpop.f32.mrb[0].mxu0
    %v2678 = vpop.f32.mrb[0].mxu0
    %2679 = vdwg.mxu0
    %v2680 = vadd.f32 %v2491, %v2654
    %v2681 = vadd.f32 %v2493, %v2656
    %v2682 = vadd.f32 %v2495, %v2658
    %v2683 = vadd.f32 %v2497, %v2660
    %v2684 = vadd.f32 %v2501, %v2664
    %v2685 = vadd.f32 %v2503, %v2666
    %v2686 = vadd.f32 %v2505, %v2668
    %v2687 = vadd.f32 %v2507, %v2670
    %v2688 = vadd.f32 %v2511, %v2674
    %v2689 = vadd.f32 %v2513, %v2676
    %v2691 = vrot.slane %v2172, 4
    %v2693 = vsel %vm2178, %v2175, %v2169
    %v2696 = vsel %vm2178, %v2177, %v2171
    %s2698 = scalar_lea.vmem [#allocation2], 384
    %v2699 = vld [vmem:[%s2698] sm:$0xff]
    %v2700 = vld [vmem:[%s2698 + $0x8] sm:$0xff]
    %v2701 = vld [vmem:[%s2698 + $0x10] sm:$0xff]
    %v2702 = vld [vmem:[%s2698 + $0x18] sm:$0xff]
    %v2703 = vld [vmem:[%s2698 + $0x20] sm:$0xff]
    %v2704 = vld [vmem:[%s2698 + $0x28] sm:$0xff]
    %v2705 = vld [vmem:[%s2698 + $0x30] sm:$0xff]
    %v2706 = vld [vmem:[%s2698 + $0x38] sm:$0xff]
    %v2707 = vld [vmem:[%s2698 + $0x40] sm:$0xff]
    %v2708 = vld [vmem:[%s2698 + $0x48] sm:$0xff]
    %v2709 = vld [vmem:[%s2698 + $0x50] sm:$0xff]
    %v2710 = vld [vmem:[%s2698 + $0x58] sm:$0xff]
    %v2711 = vld [vmem:[%s2698 + $0x60] sm:$0xff]
    %v2712 = vld [vmem:[%s2698 + $0x68] sm:$0xff]
    %v2713 = vld [vmem:[%s2698 + $0x70] sm:$0xff]
    %v2714 = vld [vmem:[%s2698 + $0x78] sm:$0xff]
    %v2731 = vunpack.c.l.b16 %v2699
    %v2732 = vunpack.c.h.b16 %v2699
    %v2733 = vunpack.c.l.b16 %v2700
    %v2734 = vunpack.c.h.b16 %v2700
    %v2735 = vunpack.c.l.b16 %v2701
    %v2736 = vunpack.c.h.b16 %v2701
    %v2737 = vunpack.c.l.b16 %v2702
    %v2738 = vunpack.c.h.b16 %v2702
    %v2739 = vunpack.c.l.b16 %v2703
    %v2740 = vunpack.c.h.b16 %v2703
    %v2741 = vunpack.c.l.b16 %v2704
    %v2742 = vunpack.c.h.b16 %v2704
    %v2743 = vunpack.c.l.b16 %v2705
    %v2744 = vunpack.c.h.b16 %v2705
    %v2745 = vunpack.c.l.b16 %v2706
    %v2746 = vunpack.c.h.b16 %v2706
    %v2747 = vunpack.c.l.b16 %v2707
    %v2748 = vunpack.c.h.b16 %v2707
    %v2749 = vunpack.c.l.b16 %v2708
    %v2750 = vunpack.c.h.b16 %v2708
    %v2751 = vunpack.c.l.b16 %v2709
    %v2752 = vunpack.c.h.b16 %v2709
    %v2753 = vunpack.c.l.b16 %v2710
    %v2754 = vunpack.c.h.b16 %v2710
    %v2755 = vunpack.c.l.b16 %v2711
    %v2756 = vunpack.c.h.b16 %v2711
    %v2757 = vunpack.c.l.b16 %v2712
    %v2758 = vunpack.c.h.b16 %v2712
    %v2759 = vunpack.c.l.b16 %v2713
    %v2760 = vunpack.c.h.b16 %v2713
    %v2761 = vunpack.c.l.b16 %v2714
    %v2762 = vunpack.c.h.b16 %v2714
    %v2763 = vpack.c.b16 %v2733, %v2731
    %v2764 = vpack.c.b16 %v2734, %v2732
    %v2765 = vpack.c.b16 %v2737, %v2735
    %v2766 = vpack.c.b16 %v2738, %v2736
    %v2767 = vpack.c.b16 %v2741, %v2739
    %v2768 = vpack.c.b16 %v2742, %v2740
    %v2769 = vpack.c.b16 %v2745, %v2743
    %v2770 = vpack.c.b16 %v2746, %v2744
    %v2771 = vpack.c.b16 %v2749, %v2747
    %v2772 = vpack.c.b16 %v2750, %v2748
    %v2773 = vpack.c.b16 %v2753, %v2751
    %v2774 = vpack.c.b16 %v2754, %v2752
    %v2775 = vpack.c.b16 %v2757, %v2755
    %v2776 = vpack.c.b16 %v2758, %v2756
    %v2777 = vpack.c.b16 %v2761, %v2759
    %v2778 = vpack.c.b16 %v2762, %v2760
    %2795 = vmatprep.subr.bf16.mxu0 %v2764
    %2796 = vmatpush1.bf16.msra.mxu0 %v2763
    %2797 = vmatprep.subr.bf16.mxu0 %v2766
    %2798 = vmatpush1.bf16.msra.mxu0 %v2765
    %2799 = vmatprep.subr.bf16.mxu0 %v2768
    %2800 = vmatpush1.bf16.msra.mxu0 %v2767
    %2801 = vmatprep.subr.bf16.mxu0 %v2770
    %2802 = vmatpush1.bf16.msra.mxu0 %v2769
    %2803 = vmatprep.subr.bf16.mxu0 %v2772
    %2804 = vmatpush1.bf16.msra.mxu0 %v2771
    %2805 = vmatprep.subr.bf16.mxu0 %v2774
    %2806 = vmatpush1.bf16.msra.mxu0 %v2773
    %2807 = vmatprep.subr.bf16.mxu0 %v2776
    %2808 = vmatpush1.bf16.msra.mxu0 %v2775
    %2809 = vmatprep.subr.bf16.mxu0 %v2778
    %2810 = vmatpush1.bf16.msra.mxu0 %v2777
    %2811 = vmatprep.subr.bf16.mxu0 0
    %2812 = vmatpush1.bf16.msra.mxu0 0
    %2813 = vmatprep.subr.bf16.mxu0 0
    %2814 = vmatpush1.bf16.msra.mxu0 0
    %2815 = vmatprep.subr.bf16.mxu0 0
    %2816 = vmatpush1.bf16.msra.mxu0 0
    %2817 = vmatprep.subr.bf16.mxu0 0
    %2818 = vmatpush1.bf16.msra.mxu0 0
    %2819 = vmatprep.subr.bf16.mxu0 0
    %2820 = vmatpush1.bf16.msra.mxu0 0
    %2821 = vmatprep.subr.bf16.mxu0 0
    %2822 = vmatpush1.bf16.msra.mxu0 0
    %2823 = vmatprep.subr.bf16.mxu0 0
    %2824 = vmatpush1.bf16.msra.mxu0 0
    %2825 = vmatprep.subr.bf16.mxu0 0
    %2826 = vmatpush1.bf16.msra.mxu0 0
    %2827 = vmatprep.mubr.bf16.mxu0 0
    %2828 = vmatmul.mubr.bf16.gmra.mrb[0].mxu0 %v2693
    %v2829 = vpop.f32.mrb[0].mxu0
    %v2830 = vadd.f32 0.0, %v2829
    %v2831 = vpop.f32.mrb[0].mxu0
    %v2832 = vadd.f32 0.0, %v2831
    %v2833 = vpop.f32.mrb[0].mxu0
    %v2834 = vadd.f32 0.0, %v2833
    %v2835 = vpop.f32.mrb[0].mxu0
    %v2836 = vadd.f32 0.0, %v2835
    %2837 = vmatprep.mubr.bf16.mxu0 0
    %2838 = vmatmul.mubr.bf16.gmra.mrb[0].mxu0 %v2696
    %v2839 = vpop.f32.mrb[0].mxu0
    %v2840 = vadd.f32 0.0, %v2839
    %v2841 = vpop.f32.mrb[0].mxu0
    %v2842 = vadd.f32 0.0, %v2841
    %v2843 = vpop.f32.mrb[0].mxu0
    %v2844 = vadd.f32 0.0, %v2843
    %v2845 = vpop.f32.mrb[0].mxu0
    %v2846 = vadd.f32 0.0, %v2845
    %2847 = vmatprep.mubr.bf16.mxu0 0
    %2848 = vmatmul.mubr.bf16.gmra.mrb[0].mxu0 %v2691
    %v2849 = vpop.f32.mrb[0].mxu0
    %v2850 = vadd.f32 0.0, %v2849
    %v2851 = vpop.f32.mrb[0].mxu0
    %v2852 = vadd.f32 0.0, %v2851
    %v2853 = vpop.f32.mrb[0].mxu0
    %v2854 = vpop.f32.mrb[0].mxu0
    %2855 = vdwg.mxu0
    %v2856 = vadd.f32 %v2680, %v2830
    %v2857 = vadd.f32 %v2681, %v2832
    %v2858 = vadd.f32 %v2682, %v2834
    %v2859 = vadd.f32 %v2683, %v2836
    %v2860 = vadd.f32 %v2684, %v2840
    %v2861 = vadd.f32 %v2685, %v2842
    %v2862 = vadd.f32 %v2686, %v2844
    %v2863 = vadd.f32 %v2687, %v2846
    %v2864 = vadd.f32 %v2688, %v2850
    %v2865 = vadd.f32 %v2689, %v2852
    %v2867 = vsel %vm2178, %v2171, %v2691
    %s2869 = scalar_lea.vmem [#allocation2], 512
    %v2870 = vld [vmem:[%s2869] sm:$0xff]
    %v2871 = vld [vmem:[%s2869 + $0x8] sm:$0xff]
    %v2872 = vld [vmem:[%s2869 + $0x10] sm:$0xff]
    %v2873 = vld [vmem:[%s2869 + $0x18] sm:$0xff]
    %v2874 = vld [vmem:[%s2869 + $0x20] sm:$0xff]
    %v2875 = vld [vmem:[%s2869 + $0x28] sm:$0xff]
    %v2876 = vld [vmem:[%s2869 + $0x30] sm:$0xff]
    %v2877 = vld [vmem:[%s2869 + $0x38] sm:$0xff]
    %v2878 = vld [vmem:[%s2869 + $0x40] sm:$0xff]
    %v2879 = vld [vmem:[%s2869 + $0x48] sm:$0xff]
    %v2880 = vld [vmem:[%s2869 + $0x50] sm:$0xff]
    %v2881 = vld [vmem:[%s2869 + $0x58] sm:$0xff]
    %v2882 = vld [vmem:[%s2869 + $0x60] sm:$0xff]
    %v2883 = vld [vmem:[%s2869 + $0x68] sm:$0xff]
    %v2884 = vld [vmem:[%s2869 + $0x70] sm:$0xff]
    %v2885 = vld [vmem:[%s2869 + $0x78] sm:$0xff]
    %v2902 = vunpack.c.l.b16 %v2870
    %v2903 = vunpack.c.h.b16 %v2870
    %v2904 = vunpack.c.l.b16 %v2871
    %v2905 = vunpack.c.h.b16 %v2871
    %v2906 = vunpack.c.l.b16 %v2872
    %v2907 = vunpack.c.h.b16 %v2872
    %v2908 = vunpack.c.l.b16 %v2873
    %v2909 = vunpack.c.h.b16 %v2873
    %v2910 = vunpack.c.l.b16 %v2874
    %v2911 = vunpack.c.h.b16 %v2874
    %v2912 = vunpack.c.l.b16 %v2875
    %v2913 = vunpack.c.h.b16 %v2875
    %v2914 = vunpack.c.l.b16 %v2876
    %v2915 = vunpack.c.h.b16 %v2876
    %v2916 = vunpack.c.l.b16 %v2877
    %v2917 = vunpack.c.h.b16 %v2877
    %v2918 = vunpack.c.l.b16 %v2878
    %v2919 = vunpack.c.h.b16 %v2878
    %v2920 = vunpack.c.l.b16 %v2879
    %v2921 = vunpack.c.h.b16 %v2879
    %v2922 = vunpack.c.l.b16 %v2880
    %v2923 = vunpack.c.h.b16 %v2880
    %v2924 = vunpack.c.l.b16 %v2881
    %v2925 = vunpack.c.h.b16 %v2881
    %v2926 = vunpack.c.l.b16 %v2882
    %v2927 = vunpack.c.h.b16 %v2882
    %v2928 = vunpack.c.l.b16 %v2883
    %v2929 = vunpack.c.h.b16 %v2883
    %v2930 = vunpack.c.l.b16 %v2884
    %v2931 = vunpack.c.h.b16 %v2884
    %v2932 = vunpack.c.l.b16 %v2885
    %v2933 = vunpack.c.h.b16 %v2885
    %v2934 = vpack.c.b16 %v2904, %v2902
    %v2935 = vpack.c.b16 %v2905, %v2903
    %v2936 = vpack.c.b16 %v2908, %v2906
    %v2937 = vpack.c.b16 %v2909, %v2907
    %v2938 = vpack.c.b16 %v2912, %v2910
    %v2939 = vpack.c.b16 %v2913, %v2911
    %v2940 = vpack.c.b16 %v2916, %v2914
    %v2941 = vpack.c.b16 %v2917, %v2915
    %v2942 = vpack.c.b16 %v2920, %v2918
    %v2943 = vpack.c.b16 %v2921, %v2919
    %v2944 = vpack.c.b16 %v2924, %v2922
    %v2945 = vpack.c.b16 %v2925, %v2923
    %v2946 = vpack.c.b16 %v2928, %v2926
    %v2947 = vpack.c.b16 %v2929, %v2927
    %v2948 = vpack.c.b16 %v2932, %v2930
    %v2949 = vpack.c.b16 %v2933, %v2931
    %2966 = vmatprep.subr.bf16.mxu0 %v2935
    %2967 = vmatpush1.bf16.msra.mxu0 %v2934
    %2968 = vmatprep.subr.bf16.mxu0 %v2937
    %2969 = vmatpush1.bf16.msra.mxu0 %v2936
    %2970 = vmatprep.subr.bf16.mxu0 %v2939
    %2971 = vmatpush1.bf16.msra.mxu0 %v2938
    %2972 = vmatprep.subr.bf16.mxu0 %v2941
    %2973 = vmatpush1.bf16.msra.mxu0 %v2940
    %2974 = vmatprep.subr.bf16.mxu0 %v2943
    %2975 = vmatpush1.bf16.msra.mxu0 %v2942
    %2976 = vmatprep.subr.bf16.mxu0 %v2945
    %2977 = vmatpush1.bf16.msra.mxu0 %v2944
    %2978 = vmatprep.subr.bf16.mxu0 %v2947
    %2979 = vmatpush1.bf16.msra.mxu0 %v2946
    %2980 = vmatprep.subr.bf16.mxu0 %v2949
    %2981 = vmatpush1.bf16.msra.mxu0 %v2948
    %2982 = vmatprep.subr.bf16.mxu0 0
    %2983 = vmatpush1.bf16.msra.mxu0 0
    %2984 = vmatprep.subr.bf16.mxu0 0
    %2985 = vmatpush1.bf16.msra.mxu0 0
    %2986 = vmatprep.subr.bf16.mxu0 0
    %2987 = vmatpush1.bf16.msra.mxu0 0
    %2988 = vmatprep.subr.bf16.mxu0 0
    %2989 = vmatpush1.bf16.msra.mxu0 0
    %2990 = vmatprep.subr.bf16.mxu0 0
    %2991 = vmatpush1.bf16.msra.mxu0 0
    %2992 = vmatprep.subr.bf16.mxu0 0
    %2993 = vmatpush1.bf16.msra.mxu0 0
    %2994 = vmatprep.subr.bf16.mxu0 0
    %2995 = vmatpush1.bf16.msra.mxu0 0
    %2996 = vmatprep.subr.bf16.mxu0 0
    %2997 = vmatpush1.bf16.msra.mxu0 0
    %2998 = vmatprep.mubr.bf16.mxu0 0
    %2999 = vmatmul.mubr.bf16.gmra.mrb[0].mxu0 %v2185
    %v3000 = vpop.f32.mrb[0].mxu0
    %v3001 = vadd.f32 0.0, %v3000
    %v3002 = vpop.f32.mrb[0].mxu0
    %v3003 = vadd.f32 0.0, %v3002
    %v3004 = vpop.f32.mrb[0].mxu0
    %v3005 = vadd.f32 0.0, %v3004
    %v3006 = vpop.f32.mrb[0].mxu0
    %v3007 = vadd.f32 0.0, %v3006
    %3008 = vmatprep.mubr.bf16.mxu0 0
    %3009 = vmatmul.mubr.bf16.gmra.mrb[0].mxu0 %v2867
    %v3010 = vpop.f32.mrb[0].mxu0
    %v3011 = vadd.f32 0.0, %v3010
    %v3012 = vpop.f32.mrb[0].mxu0
    %v3013 = vadd.f32 0.0, %v3012
    %v3014 = vpop.f32.mrb[0].mxu0
    %v3015 = vadd.f32 0.0, %v3014
    %v3016 = vpop.f32.mrb[0].mxu0
    %v3017 = vadd.f32 0.0, %v3016
    %3018 = vmatprep.mubr.bf16.mxu0 0
    %3019 = vmatmul.mubr.bf16.gmra.mrb[0].mxu0 %v2173
    %v3020 = vpop.f32.mrb[0].mxu0
    %v3021 = vadd.f32 0.0, %v3020
    %v3022 = vpop.f32.mrb[0].mxu0
    %v3023 = vadd.f32 0.0, %v3022
    %v3024 = vpop.f32.mrb[0].mxu0
    %v3025 = vpop.f32.mrb[0].mxu0
    %3026 = vdwg.mxu0
    %v3027 = vadd.f32 %v2856, %v3001
    %v3028 = vadd.f32 %v2857, %v3003
    %v3029 = vadd.f32 %v2858, %v3005
    %v3030 = vadd.f32 %v2859, %v3007
    %v3031 = vadd.f32 %v2860, %v3011
    %v3032 = vadd.f32 %v2861, %v3013
    %v3033 = vadd.f32 %v2862, %v3015
    %v3034 = vadd.f32 %v2863, %v3017
    %v3035 = vadd.f32 %v2864, %v3021
    %v3036 = vadd.f32 %v2865, %v3023
    %3037 = vmatprep.subr.bf16.mxu0 %v2284
    %3038 = vmatpush1.bf16.msra.mxu0 %v2283
    %3039 = vmatprep.subr.bf16.mxu0 %v2286
    %3040 = vmatpush1.bf16.msra.mxu0 %v2285
    %3041 = vmatprep.subr.bf16.mxu0 %v2288
    %3042 = vmatpush1.bf16.msra.mxu0 %v2287
    %3043 = vmatprep.subr.bf16.mxu0 %v2290
    %3044 = vmatpush1.bf16.msra.mxu0 %v2289
    %3045 = vmatprep.subr.bf16.mxu0 %v2292
    %3046 = vmatpush1.bf16.msra.mxu0 %v2291
    %3047 = vmatprep.subr.bf16.mxu0 %v2294
    %3048 = vmatpush1.bf16.msra.mxu0 %v2293
    %3049 = vmatprep.subr.bf16.mxu0 %v2296
    %3050 = vmatpush1.bf16.msra.mxu0 %v2295
    %3051 = vmatprep.subr.bf16.mxu0 %v2298
    %3052 = vmatpush1.bf16.msra.mxu0 %v2297
    %3053 = vmatprep.subr.bf16.mxu0 0
    %3054 = vmatpush1.bf16.msra.mxu0 0
    %3055 = vmatprep.subr.bf16.mxu0 0
    %3056 = vmatpush1.bf16.msra.mxu0 0
    %3057 = vmatprep.subr.bf16.mxu0 0
    %3058 = vmatpush1.bf16.msra.mxu0 0
    %3059 = vmatprep.subr.bf16.mxu0 0
    %3060 = vmatpush1.bf16.msra.mxu0 0
    %3061 = vmatprep.subr.bf16.mxu0 0
    %3062 = vmatpush1.bf16.msra.mxu0 0
    %3063 = vmatprep.subr.bf16.mxu0 0
    %3064 = vmatpush1.bf16.msra.mxu0 0
    %3065 = vmatprep.subr.bf16.mxu0 0
    %3066 = vmatpush1.bf16.msra.mxu0 0
    %3067 = vmatprep.subr.bf16.mxu0 0
    %3068 = vmatpush1.bf16.msra.mxu0 0
    %3069 = vmatprep.mubr.bf16.mxu0 0
    %3070 = vmatmul.mubr.bf16.gmra.mrb[0].mxu0 %v2517
    %v3071 = vpop.f32.mrb[0].mxu0
    %v3072 = vadd.f32 0.0, %v3071
    %v3073 = vpop.f32.mrb[0].mxu0
    %v3074 = vadd.f32 0.0, %v3073
    %v3075 = vpop.f32.mrb[0].mxu0
    %v3076 = vadd.f32 0.0, %v3075
    %v3077 = vpop.f32.mrb[0].mxu0
    %v3078 = vadd.f32 0.0, %v3077
    %3079 = vmatprep.mubr.bf16.mxu0 0
    %3080 = vmatmul.mubr.bf16.gmra.mrb[0].mxu0 %v2520
    %v3081 = vpop.f32.mrb[0].mxu0
    %v3082 = vadd.f32 0.0, %v3081
    %v3083 = vpop.f32.mrb[0].mxu0
    %v3084 = vadd.f32 0.0, %v3083
    %v3085 = vpop.f32.mrb[0].mxu0
    %v3086 = vadd.f32 0.0, %v3085
    %v3087 = vpop.f32.mrb[0].mxu0
    %v3088 = vadd.f32 0.0, %v3087
    %3089 = vmatprep.mubr.bf16.mxu0 0
    %3090 = vmatmul.mubr.bf16.gmra.mrb[0].mxu0 %v2172
    %v3091 = vpop.f32.mrb[0].mxu0
    %v3092 = vadd.f32 0.0, %v3091
    %v3093 = vpop.f32.mrb[0].mxu0
    %v3094 = vadd.f32 0.0, %v3093
    %v3095 = vpop.f32.mrb[0].mxu0
    %v3096 = vpop.f32.mrb[0].mxu0
    %3097 = vdwg.mxu0
    %3098 = vmatprep.subr.bf16.mxu0 %v2425
    %3099 = vmatpush1.bf16.msra.mxu0 %v2424
    %3100 = vmatprep.subr.bf16.mxu0 %v2427
    %3101 = vmatpush1.bf16.msra.mxu0 %v2426
    %3102 = vmatprep.subr.bf16.mxu0 %v2429
    %3103 = vmatpush1.bf16.msra.mxu0 %v2428
    %3104 = vmatprep.subr.bf16.mxu0 %v2431
    %3105 = vmatpush1.bf16.msra.mxu0 %v2430
    %3106 = vmatprep.subr.bf16.mxu0 %v2433
    %3107 = vmatpush1.bf16.msra.mxu0 %v2432
    %3108 = vmatprep.subr.bf16.mxu0 %v2435
    %3109 = vmatpush1.bf16.msra.mxu0 %v2434
    %3110 = vmatprep.subr.bf16.mxu0 %v2437
    %3111 = vmatpush1.bf16.msra.mxu0 %v2436
    %3112 = vmatprep.subr.bf16.mxu0 %v2439
    %3113 = vmatpush1.bf16.msra.mxu0 %v2438
    %3114 = vmatprep.subr.bf16.mxu0 0
    %3115 = vmatpush1.bf16.msra.mxu0 0
    %3116 = vmatprep.subr.bf16.mxu0 0
    %3117 = vmatpush1.bf16.msra.mxu0 0
    %3118 = vmatprep.subr.bf16.mxu0 0
    %3119 = vmatpush1.bf16.msra.mxu0 0
    %3120 = vmatprep.subr.bf16.mxu0 0
    %3121 = vmatpush1.bf16.msra.mxu0 0
    %3122 = vmatprep.subr.bf16.mxu0 0
    %3123 = vmatpush1.bf16.msra.mxu0 0
    %3124 = vmatprep.subr.bf16.mxu0 0
    %3125 = vmatpush1.bf16.msra.mxu0 0
    %3126 = vmatprep.subr.bf16.mxu0 0
    %3127 = vmatpush1.bf16.msra.mxu0 0
    %3128 = vmatprep.subr.bf16.mxu0 0
    %3129 = vmatpush1.bf16.msra.mxu0 0
    %3130 = vmatprep.mubr.bf16.mxu0 0
    %3131 = vmatmul.mubr.bf16.gmra.mrb[0].mxu0 %v2212
    %v3132 = vpop.f32.mrb[0].mxu0
    %v3133 = vadd.f32 %v3072, %v3132
    %v3134 = vpop.f32.mrb[0].mxu0
    %v3135 = vadd.f32 %v3074, %v3134
    %v3136 = vpop.f32.mrb[0].mxu0
    %v3137 = vadd.f32 %v3076, %v3136
    %v3138 = vpop.f32.mrb[0].mxu0
    %v3139 = vadd.f32 %v3078, %v3138
    %3140 = vmatprep.mubr.bf16.mxu0 0
    %3141 = vmatmul.mubr.bf16.gmra.mrb[0].mxu0 %v2216
    %v3142 = vpop.f32.mrb[0].mxu0
    %v3143 = vadd.f32 %v3082, %v3142
    %v3144 = vpop.f32.mrb[0].mxu0
    %v3145 = vadd.f32 %v3084, %v3144
    %v3146 = vpop.f32.mrb[0].mxu0
    %v3147 = vadd.f32 %v3086, %v3146
    %v3148 = vpop.f32.mrb[0].mxu0
    %v3149 = vadd.f32 %v3088, %v3148
    %3150 = vmatprep.mubr.bf16.mxu0 0
    %3151 = vmatmul.mubr.bf16.gmra.mrb[0].mxu0 %v2208
    %v3152 = vpop.f32.mrb[0].mxu0
    %v3153 = vadd.f32 %v3092, %v3152
    %v3154 = vpop.f32.mrb[0].mxu0
    %v3155 = vadd.f32 %v3094, %v3154
    %v3156 = vpop.f32.mrb[0].mxu0
    %v3157 = vpop.f32.mrb[0].mxu0
    %3158 = vdwg.mxu0
    %3159 = vmatprep.subr.bf16.mxu0 %v2588
    %3160 = vmatpush1.bf16.msra.mxu0 %v2587
    %3161 = vmatprep.subr.bf16.mxu0 %v2590
    %3162 = vmatpush1.bf16.msra.mxu0 %v2589
    %3163 = vmatprep.subr.bf16.mxu0 %v2592
    %3164 = vmatpush1.bf16.msra.mxu0 %v2591
    %3165 = vmatprep.subr.bf16.mxu0 %v2594
    %3166 = vmatpush1.bf16.msra.mxu0 %v2593
    %3167 = vmatprep.subr.bf16.mxu0 %v2596
    %3168 = vmatpush1.bf16.msra.mxu0 %v2595
    %3169 = vmatprep.subr.bf16.mxu0 %v2598
    %3170 = vmatpush1.bf16.msra.mxu0 %v2597
    %3171 = vmatprep.subr.bf16.mxu0 %v2600
    %3172 = vmatpush1.bf16.msra.mxu0 %v2599
    %3173 = vmatprep.subr.bf16.mxu0 %v2602
    %3174 = vmatpush1.bf16.msra.mxu0 %v2601
    %3175 = vmatprep.subr.bf16.mxu0 0
    %3176 = vmatpush1.bf16.msra.mxu0 0
    %3177 = vmatprep.subr.bf16.mxu0 0
    %3178 = vmatpush1.bf16.msra.mxu0 0
    %3179 = vmatprep.subr.bf16.mxu0 0
    %3180 = vmatpush1.bf16.msra.mxu0 0
    %3181 = vmatprep.subr.bf16.mxu0 0
    %3182 = vmatpush1.bf16.msra.mxu0 0
    %3183 = vmatprep.subr.bf16.mxu0 0
    %3184 = vmatpush1.bf16.msra.mxu0 0
    %3185 = vmatprep.subr.bf16.mxu0 0
    %3186 = vmatpush1.bf16.msra.mxu0 0
    %3187 = vmatprep.subr.bf16.mxu0 0
    %3188 = vmatpush1.bf16.msra.mxu0 0
    %3189 = vmatprep.subr.bf16.mxu0 0
    %3190 = vmatpush1.bf16.msra.mxu0 0
    %3191 = vmatprep.mubr.bf16.mxu0 0
    %3192 = vmatmul.mubr.bf16.gmra.mrb[0].mxu0 %v2693
    %v3193 = vpop.f32.mrb[0].mxu0
    %v3194 = vadd.f32 0.0, %v3193
    %v3195 = vpop.f32.mrb[0].mxu0
    %v3196 = vadd.f32 0.0, %v3195
    %v3197 = vpop.f32.mrb[0].mxu0
    %v3198 = vadd.f32 0.0, %v3197
    %v3199 = vpop.f32.mrb[0].mxu0
    %v3200 = vadd.f32 0.0, %v3199
    %3201 = vmatprep.mubr.bf16.mxu0 0
    %3202 = vmatmul.mubr.bf16.gmra.mrb[0].mxu0 %v2696
    %v3203 = vpop.f32.mrb[0].mxu0
    %v3204 = vadd.f32 0.0, %v3203
    %v3205 = vpop.f32.mrb[0].mxu0
    %v3206 = vadd.f32 0.0, %v3205
    %v3207 = vpop.f32.mrb[0].mxu0
    %v3208 = vadd.f32 0.0, %v3207
    %v3209 = vpop.f32.mrb[0].mxu0
    %v3210 = vadd.f32 0.0, %v3209
    %3211 = vmatprep.mubr.bf16.mxu0 0
    %3212 = vmatmul.mubr.bf16.gmra.mrb[0].mxu0 %v2691
    %v3213 = vpop.f32.mrb[0].mxu0
    %v3214 = vadd.f32 0.0, %v3213
    %v3215 = vpop.f32.mrb[0].mxu0
    %v3216 = vadd.f32 0.0, %v3215
    %v3217 = vpop.f32.mrb[0].mxu0
    %v3218 = vpop.f32.mrb[0].mxu0
    %3219 = vdwg.mxu0
    %v3220 = vadd.f32 %v3133, %v3194
    %v3221 = vadd.f32 %v3135, %v3196
    %v3222 = vadd.f32 %v3137, %v3198
    %v3223 = vadd.f32 %v3139, %v3200
    %v3224 = vadd.f32 %v3143, %v3204
    %v3225 = vadd.f32 %v3145, %v3206
    %v3226 = vadd.f32 %v3147, %v3208
    %v3227 = vadd.f32 %v3149, %v3210
    %v3228 = vadd.f32 %v3153, %v3214
    %v3229 = vadd.f32 %v3155, %v3216
    %3230 = vmatprep.subr.bf16.mxu0 %v2764
    %3231 = vmatpush1.bf16.msra.mxu0 %v2763
    %3232 = vmatprep.subr.bf16.mxu0 %v2766
    %3233 = vmatpush1.bf16.msra.mxu0 %v2765
    %3234 = vmatprep.subr.bf16.mxu0 %v2768
    %3235 = vmatpush1.bf16.msra.mxu0 %v2767
    %3236 = vmatprep.subr.bf16.mxu0 %v2770
    %3237 = vmatpush1.bf16.msra.mxu0 %v2769
    %3238 = vmatprep.subr.bf16.mxu0 %v2772
    %3239 = vmatpush1.bf16.msra.mxu0 %v2771
    %3240 = vmatprep.subr.bf16.mxu0 %v2774
    %3241 = vmatpush1.bf16.msra.mxu0 %v2773
    %3242 = vmatprep.subr.bf16.mxu0 %v2776
    %3243 = vmatpush1.bf16.msra.mxu0 %v2775
    %3244 = vmatprep.subr.bf16.mxu0 %v2778
    %3245 = vmatpush1.bf16.msra.mxu0 %v2777
    %3246 = vmatprep.subr.bf16.mxu0 0
    %3247 = vmatpush1.bf16.msra.mxu0 0
    %3248 = vmatprep.subr.bf16.mxu0 0
    %3249 = vmatpush1.bf16.msra.mxu0 0
    %3250 = vmatprep.subr.bf16.mxu0 0
    %3251 = vmatpush1.bf16.msra.mxu0 0
    %3252 = vmatprep.subr.bf16.mxu0 0
    %3253 = vmatpush1.bf16.msra.mxu0 0
    %3254 = vmatprep.subr.bf16.mxu0 0
    %3255 = vmatpush1.bf16.msra.mxu0 0
    %3256 = vmatprep.subr.bf16.mxu0 0
    %3257 = vmatpush1.bf16.msra.mxu0 0
    %3258 = vmatprep.subr.bf16.mxu0 0
    %3259 = vmatpush1.bf16.msra.mxu0 0
    %3260 = vmatprep.subr.bf16.mxu0 0
    %3261 = vmatpush1.bf16.msra.mxu0 0
    %3262 = vmatprep.mubr.bf16.mxu0 0
    %3263 = vmatmul.mubr.bf16.gmra.mrb[0].mxu0 %v2185
    %v3264 = vpop.f32.mrb[0].mxu0
    %v3265 = vadd.f32 0.0, %v3264
    %v3266 = vpop.f32.mrb[0].mxu0
    %v3267 = vadd.f32 0.0, %v3266
    %v3268 = vpop.f32.mrb[0].mxu0
    %v3269 = vadd.f32 0.0, %v3268
    %v3270 = vpop.f32.mrb[0].mxu0
    %v3271 = vadd.f32 0.0, %v3270
    %3272 = vmatprep.mubr.bf16.mxu0 0
    %3273 = vmatmul.mubr.bf16.gmra.mrb[0].mxu0 %v2867
    %v3274 = vpop.f32.mrb[0].mxu0
    %v3275 = vadd.f32 0.0, %v3274
    %v3276 = vpop.f32.mrb[0].mxu0
    %v3277 = vadd.f32 0.0, %v3276
    %v3278 = vpop.f32.mrb[0].mxu0
    %v3279 = vadd.f32 0.0, %v3278
    %v3280 = vpop.f32.mrb[0].mxu0
    %v3281 = vadd.f32 0.0, %v3280
    %3282 = vmatprep.mubr.bf16.mxu0 0
    %3283 = vmatmul.mubr.bf16.gmra.mrb[0].mxu0 %v2173
    %v3284 = vpop.f32.mrb[0].mxu0
    %v3285 = vadd.f32 0.0, %v3284
    %v3286 = vpop.f32.mrb[0].mxu0
    %v3287 = vadd.f32 0.0, %v3286
    %v3288 = vpop.f32.mrb[0].mxu0
    %v3289 = vpop.f32.mrb[0].mxu0
    %3290 = vdwg.mxu0
    %v3291 = vadd.f32 %v3220, %v3265
    %v3292 = vadd.f32 %v3221, %v3267
    %v3293 = vadd.f32 %v3222, %v3269
    %v3294 = vadd.f32 %v3223, %v3271
    %v3295 = vadd.f32 %v3224, %v3275
    %v3296 = vadd.f32 %v3225, %v3277
    %v3297 = vadd.f32 %v3226, %v3279
    %v3298 = vadd.f32 %v3227, %v3281
    %v3299 = vadd.f32 %v3228, %v3285
    %v3300 = vadd.f32 %v3229, %v3287
    %v3302 = vrot.slane %v2173, 4
    %v3305 = vsel %vm2178, %v2208, %v2172
    %3307 = vmatprep.subr.bf16.mxu0 %v2935
    %3308 = vmatpush1.bf16.msra.mxu0 %v2934
    %3309 = vmatprep.subr.bf16.mxu0 %v2937
    %3310 = vmatpush1.bf16.msra.mxu0 %v2936
    %3311 = vmatprep.subr.bf16.mxu0 %v2939
    %3312 = vmatpush1.bf16.msra.mxu0 %v2938
    %3313 = vmatprep.subr.bf16.mxu0 %v2941
    %3314 = vmatpush1.bf16.msra.mxu0 %v2940
    %3315 = vmatprep.subr.bf16.mxu0 %v2943
    %3316 = vmatpush1.bf16.msra.mxu0 %v2942
    %3317 = vmatprep.subr.bf16.mxu0 %v2945
    %3318 = vmatpush1.bf16.msra.mxu0 %v2944
    %3319 = vmatprep.subr.bf16.mxu0 %v2947
    %3320 = vmatpush1.bf16.msra.mxu0 %v2946
    %3321 = vmatprep.subr.bf16.mxu0 %v2949
    %3322 = vmatpush1.bf16.msra.mxu0 %v2948
    %3323 = vmatprep.subr.bf16.mxu0 0
    %3324 = vmatpush1.bf16.msra.mxu0 0
    %3325 = vmatprep.subr.bf16.mxu0 0
    %3326 = vmatpush1.bf16.msra.mxu0 0
    %3327 = vmatprep.subr.bf16.mxu0 0
    %3328 = vmatpush1.bf16.msra.mxu0 0
    %3329 = vmatprep.subr.bf16.mxu0 0
    %3330 = vmatpush1.bf16.msra.mxu0 0
    %3331 = vmatprep.subr.bf16.mxu0 0
    %3332 = vmatpush1.bf16.msra.mxu0 0
    %3333 = vmatprep.subr.bf16.mxu0 0
    %3334 = vmatpush1.bf16.msra.mxu0 0
    %3335 = vmatprep.subr.bf16.mxu0 0
    %3336 = vmatpush1.bf16.msra.mxu0 0
    %3337 = vmatprep.subr.bf16.mxu0 0
    %3338 = vmatpush1.bf16.msra.mxu0 0
    %3339 = vmatprep.mubr.bf16.mxu0 0
    %3340 = vmatmul.mubr.bf16.gmra.mrb[0].mxu0 %v2216
    %v3341 = vpop.f32.mrb[0].mxu0
    %v3342 = vadd.f32 0.0, %v3341
    %v3343 = vpop.f32.mrb[0].mxu0
    %v3344 = vadd.f32 0.0, %v3343
    %v3345 = vpop.f32.mrb[0].mxu0
    %v3346 = vadd.f32 0.0, %v3345
    %v3347 = vpop.f32.mrb[0].mxu0
    %v3348 = vadd.f32 0.0, %v3347
    %3349 = vmatprep.mubr.bf16.mxu0 0
    %3350 = vmatmul.mubr.bf16.gmra.mrb[0].mxu0 %v3305
    %v3351 = vpop.f32.mrb[0].mxu0
    %v3352 = vadd.f32 0.0, %v3351
    %v3353 = vpop.f32.mrb[0].mxu0
    %v3354 = vadd.f32 0.0, %v3353
    %v3355 = vpop.f32.mrb[0].mxu0
    %v3356 = vadd.f32 0.0, %v3355
    %v3357 = vpop.f32.mrb[0].mxu0
    %v3358 = vadd.f32 0.0, %v3357
    %3359 = vmatprep.mubr.bf16.mxu0 0
    %3360 = vmatmul.mubr.bf16.gmra.mrb[0].mxu0 %v3302
    %v3361 = vpop.f32.mrb[0].mxu0
    %v3362 = vadd.f32 0.0, %v3361
    %v3363 = vpop.f32.mrb[0].mxu0
    %v3364 = vadd.f32 0.0, %v3363
    %v3365 = vpop.f32.mrb[0].mxu0
    %v3366 = vpop.f32.mrb[0].mxu0
    %3367 = vdwg.mxu0
    %v3368 = vadd.f32 %v3291, %v3342
    %v3369 = vadd.f32 %v3292, %v3344
    %v3370 = vadd.f32 %v3293, %v3346
    %v3371 = vadd.f32 %v3294, %v3348
    %v3372 = vadd.f32 %v3295, %v3352
    %v3373 = vadd.f32 %v3296, %v3354
    %v3374 = vadd.f32 %v3297, %v3356
    %v3375 = vadd.f32 %v3298, %v3358
    %v3376 = vadd.f32 %v3299, %v3362
    %v3377 = vadd.f32 %v3300, %v3364
    %v3378 = vmax.f32 %v3027, %v3368
    %v3379 = vmax.f32 %v3028, %v3369
    %v3380 = vmax.f32 %v3029, %v3370
    %v3381 = vmax.f32 %v3030, %v3371
    %v3382 = vmax.f32 %v3031, %v3372
    %v3383 = vmax.f32 %v3032, %v3373
    %v3384 = vmax.f32 %v3033, %v3374
    %v3385 = vmax.f32 %v3034, %v3375
    %v3386 = vmax.f32 %v3035, %v3376
    %v3387 = vmax.f32 %v3036, %v3377
    %v3388 = vmax.f32 %v3378, %v3379
    %v3389 = vmax.f32 %v3380, %v3381
    %v3390 = vmax.f32 %v3382, %v3383
    %v3391 = vmax.f32 %v3384, %v3385
    %v3392 = vmax.f32 %v3386, %v3387
    %v3393 = vld [vmem:[%s4] sm:$0x1]
    %v3395 = vlaneseq
    %v3396 = vshrl.u32 %v3395, 7
    %v3397 = vsub.s32 0, %v3396
    %v3398 = vrot.slane %v3393, %v3397
    %v3400 = vadd.f32 %v3388, %v3398
    %v3401 = vadd.f32 %v3389, %v3398
    %v3402 = vadd.f32 %v3390, %v3398
    %v3403 = vadd.f32 %v3391, %v3398
    %v3404 = vadd.f32 %v3392, %v3398
    %v3405 = vmax.f32 %v3400, 0.0
    %v3406 = vmax.f32 %v3401, 0.0
    %v3407 = vmax.f32 %v3402, 0.0
    %v3408 = vmax.f32 %v3403, 0.0
    %v3409 = vmax.f32 %v3404, 0.0
    %v3410 = vpack.c.bf16 %v3406, %v3405
    %v3411 = vpack.c.bf16 %v3408, %v3407
    %v3412 = vpack.c.bf16 %v3409, %v3409
    %v3413 = vld [vmem:[%s5] sm:$0xf]
    %v3414 = vld [vmem:[%s5 + $0x4] sm:$0xf]
    %v3415 = vld [vmem:[%s5 + $0x8] sm:$0xf]
    %v3416 = vld [vmem:[%s5 + $0xc] sm:$0xf]
    %v3417 = vld [vmem:[%s5 + $0x10] sm:$0xf]
    %v3418 = vld [vmem:[%s5 + $0x14] sm:$0xf]
    %v3419 = vld [vmem:[%s5 + $0x18] sm:$0xf]
    %v3420 = vld [vmem:[%s5 + $0x1c] sm:$0xf]
    %v3421 = vld [vmem:[%s5 + $0x20] sm:$0xf]
    %v3422 = vld [vmem:[%s5 + $0x24] sm:$0xf]
    %v3423 = vld [vmem:[%s5 + $0x28] sm:$0xf]
    %v3424 = vld [vmem:[%s5 + $0x2c] sm:$0xf]
    %v3425 = vld [vmem:[%s5 + $0x30] sm:$0xf]
    %v3426 = vld [vmem:[%s5 + $0x34] sm:$0xf]
    %v3427 = vld [vmem:[%s5 + $0x38] sm:$0xf]
    %v3428 = vld [vmem:[%s5 + $0x3c] sm:$0xf]
    %s3429 = scalar_lea.vmem %s5, 64
    %v3430 = vld [vmem:[%s3429] sm:$0xf]
    %v3431 = vld [vmem:[%s3429 + $0x4] sm:$0xf]
    %v3432 = vld [vmem:[%s3429 + $0x8] sm:$0xf]
    %v3433 = vld [vmem:[%s3429 + $0xc] sm:$0xf]
    %v3434 = vld [vmem:[%s3429 + $0x10] sm:$0xf]
    %v3435 = vld [vmem:[%s3429 + $0x14] sm:$0xf]
    %v3436 = vld [vmem:[%s3429 + $0x18] sm:$0xf]
    %v3437 = vld [vmem:[%s3429 + $0x1c] sm:$0xf]
    %v3438 = vld [vmem:[%s3429 + $0x20] sm:$0xf]
    %v3439 = vld [vmem:[%s3429 + $0x24] sm:$0xf]
    %v3440 = vld [vmem:[%s3429 + $0x28] sm:$0xf]
    %v3441 = vld [vmem:[%s3429 + $0x2c] sm:$0xf]
    %v3442 = vld [vmem:[%s3429 + $0x30] sm:$0xf]
    %v3443 = vld [vmem:[%s3429 + $0x34] sm:$0xf]
    %v3444 = vld [vmem:[%s3429 + $0x38] sm:$0xf]
    %v3445 = vld [vmem:[%s3429 + $0x3c] sm:$0xf]
    %v3447 = vrot.slane %v3410, 4
    %v3465 = vunpack.c.l.b16 %v3430
    %v3466 = vunpack.c.l.b16 %v3431
    %v3467 = vunpack.c.l.b16 %v3432
    %v3468 = vunpack.c.l.b16 %v3433
    %v3469 = vunpack.c.l.b16 %v3434
    %v3470 = vunpack.c.l.b16 %v3435
    %v3471 = vunpack.c.l.b16 %v3436
    %v3472 = vunpack.c.l.b16 %v3437
    %v3473 = vunpack.c.l.b16 %v3438
    %v3474 = vunpack.c.l.b16 %v3439
    %v3475 = vunpack.c.l.b16 %v3440
    %v3476 = vunpack.c.l.b16 %v3441
    %v3477 = vunpack.c.l.b16 %v3442
    %v3478 = vunpack.c.l.b16 %v3443
    %v3479 = vunpack.c.l.b16 %v3444
    %v3480 = vunpack.c.l.b16 %v3445
    %v3481 = vpack.c.b16 %v3466, %v3465
    %v3482 = vpack.c.b16 %v3468, %v3467
    %v3483 = vpack.c.b16 %v3470, %v3469
    %v3484 = vpack.c.b16 %v3472, %v3471
    %v3485 = vpack.c.b16 %v3474, %v3473
    %v3486 = vpack.c.b16 %v3476, %v3475
    %v3487 = vpack.c.b16 %v3478, %v3477
    %v3488 = vpack.c.b16 %v3480, %v3479
    %3497 = vmatprep.subr.bf16.mxu0 0
    %3498 = vmatpush1.bf16.msra.mxu0 %v3481
    %3499 = vmatprep.subr.bf16.mxu0 0
    %3500 = vmatpush1.bf16.msra.mxu0 %v3482
    %3501 = vmatprep.subr.bf16.mxu0 0
    %3502 = vmatpush1.bf16.msra.mxu0 %v3483
    %3503 = vmatprep.subr.bf16.mxu0 0
    %3504 = vmatpush1.bf16.msra.mxu0 %v3484
    %3505 = vmatprep.subr.bf16.mxu0 0
    %3506 = vmatpush1.bf16.msra.mxu0 %v3485
    %3507 = vmatprep.subr.bf16.mxu0 0
    %3508 = vmatpush1.bf16.msra.mxu0 %v3486
    %3509 = vmatprep.subr.bf16.mxu0 0
    %3510 = vmatpush1.bf16.msra.mxu0 %v3487
    %3511 = vmatprep.subr.bf16.mxu0 0
    %3512 = vmatpush1.bf16.msra.mxu0 %v3488
    %3513 = vmatprep.subr.bf16.mxu0 0
    %3514 = vmatpush1.bf16.msra.mxu0 0
    %3515 = vmatprep.subr.bf16.mxu0 0
    %3516 = vmatpush1.bf16.msra.mxu0 0
    %3517 = vmatprep.subr.bf16.mxu0 0
    %3518 = vmatpush1.bf16.msra.mxu0 0
    %3519 = vmatprep.subr.bf16.mxu0 0
    %3520 = vmatpush1.bf16.msra.mxu0 0
    %3521 = vmatprep.subr.bf16.mxu0 0
    %3522 = vmatpush1.bf16.msra.mxu0 0
    %3523 = vmatprep.subr.bf16.mxu0 0
    %3524 = vmatpush1.bf16.msra.mxu0 0
    %3525 = vmatprep.subr.bf16.mxu0 0
    %3526 = vmatpush1.bf16.msra.mxu0 0
    %3527 = vmatprep.subr.bf16.mxu0 0
    %3528 = vmatpush1.bf16.msra.mxu0 0
    %3529 = vmatprep.mubr.bf16.mxu0 0
    %3530 = vmatmul.mubr.bf16.gmra.mrb[0].mxu0 %v3447
    %v3531 = vpop.f32.mrb[0].mxu0
    %v3532 = vadd.f32 0.0, %v3531
    %v3533 = vpop.f32.mrb[0].mxu0
    %v3534 = vpop.f32.mrb[0].mxu0
    %v3535 = vpop.f32.mrb[0].mxu0
    %3536 = vdwg.mxu0
    %v3553 = vunpack.c.l.b16 %v3413
    %v3554 = vunpack.c.l.b16 %v3414
    %v3555 = vunpack.c.l.b16 %v3415
    %v3556 = vunpack.c.l.b16 %v3416
    %v3557 = vunpack.c.l.b16 %v3417
    %v3558 = vunpack.c.l.b16 %v3418
    %v3559 = vunpack.c.l.b16 %v3419
    %v3560 = vunpack.c.l.b16 %v3420
    %v3561 = vunpack.c.l.b16 %v3421
    %v3562 = vunpack.c.l.b16 %v3422
    %v3563 = vunpack.c.l.b16 %v3423
    %v3564 = vunpack.c.l.b16 %v3424
    %v3565 = vunpack.c.l.b16 %v3425
    %v3566 = vunpack.c.l.b16 %v3426
    %v3567 = vunpack.c.l.b16 %v3427
    %v3568 = vunpack.c.l.b16 %v3428
    %v3569 = vpack.c.b16 %v3554, %v3553
    %v3570 = vpack.c.b16 %v3556, %v3555
    %v3571 = vpack.c.b16 %v3558, %v3557
    %v3572 = vpack.c.b16 %v3560, %v3559
    %v3573 = vpack.c.b16 %v3562, %v3561
    %v3574 = vpack.c.b16 %v3564, %v3563
    %v3575 = vpack.c.b16 %v3566, %v3565
    %v3576 = vpack.c.b16 %v3568, %v3567
    %3585 = vmatprep.subr.bf16.mxu0 0
    %3586 = vmatpush1.bf16.msra.mxu0 %v3569
    %3587 = vmatprep.subr.bf16.mxu0 0
    %3588 = vmatpush1.bf16.msra.mxu0 %v3570
    %3589 = vmatprep.subr.bf16.mxu0 0
    %3590 = vmatpush1.bf16.msra.mxu0 %v3571
    %3591 = vmatprep.subr.bf16.mxu0 0
    %3592 = vmatpush1.bf16.msra.mxu0 %v3572
    %3593 = vmatprep.subr.bf16.mxu0 0
    %3594 = vmatpush1.bf16.msra.mxu0 %v3573
    %3595 = vmatprep.subr.bf16.mxu0 0
    %3596 = vmatpush1.bf16.msra.mxu0 %v3574
    %3597 = vmatprep.subr.bf16.mxu0 0
    %3598 = vmatpush1.bf16.msra.mxu0 %v3575
    %3599 = vmatprep.subr.bf16.mxu0 0
    %3600 = vmatpush1.bf16.msra.mxu0 %v3576
    %3601 = vmatprep.subr.bf16.mxu0 0
    %3602 = vmatpush1.bf16.msra.mxu0 0
    %3603 = vmatprep.subr.bf16.mxu0 0
    %3604 = vmatpush1.bf16.msra.mxu0 0
    %3605 = vmatprep.subr.bf16.mxu0 0
    %3606 = vmatpush1.bf16.msra.mxu0 0
    %3607 = vmatprep.subr.bf16.mxu0 0
    %3608 = vmatpush1.bf16.msra.mxu0 0
    %3609 = vmatprep.subr.bf16.mxu0 0
    %3610 = vmatpush1.bf16.msra.mxu0 0
    %3611 = vmatprep.subr.bf16.mxu0 0
    %3612 = vmatpush1.bf16.msra.mxu0 0
    %3613 = vmatprep.subr.bf16.mxu0 0
    %3614 = vmatpush1.bf16.msra.mxu0 0
    %3615 = vmatprep.subr.bf16.mxu0 0
    %3616 = vmatpush1.bf16.msra.mxu0 0
    %3617 = vmatprep.mubr.bf16.mxu0 0
    %3618 = vmatmul.mubr.bf16.gmra.mrb[0].mxu0 %v3410
    %v3619 = vpop.f32.mrb[0].mxu0
    %v3620 = vadd.f32 %v3532, %v3619
    %v3621 = vpop.f32.mrb[0].mxu0
    %v3622 = vpop.f32.mrb[0].mxu0
    %v3623 = vpop.f32.mrb[0].mxu0
    %3624 = vdwg.mxu0
    %s3625 = scalar_lea.vmem %s5, 128
    %v3626 = vld [vmem:[%s3625] sm:$0xf]
    %v3627 = vld [vmem:[%s3625 + $0x4] sm:$0xf]
    %v3628 = vld [vmem:[%s3625 + $0x8] sm:$0xf]
    %v3629 = vld [vmem:[%s3625 + $0xc] sm:$0xf]
    %v3630 = vld [vmem:[%s3625 + $0x10] sm:$0xf]
    %v3631 = vld [vmem:[%s3625 + $0x14] sm:$0xf]
    %v3632 = vld [vmem:[%s3625 + $0x18] sm:$0xf]
    %v3633 = vld [vmem:[%s3625 + $0x1c] sm:$0xf]
    %v3634 = vld [vmem:[%s3625 + $0x20] sm:$0xf]
    %v3635 = vld [vmem:[%s3625 + $0x24] sm:$0xf]
    %v3636 = vld [vmem:[%s3625 + $0x28] sm:$0xf]
    %v3637 = vld [vmem:[%s3625 + $0x2c] sm:$0xf]
    %v3638 = vld [vmem:[%s3625 + $0x30] sm:$0xf]
    %v3639 = vld [vmem:[%s3625 + $0x34] sm:$0xf]
    %v3640 = vld [vmem:[%s3625 + $0x38] sm:$0xf]
    %v3641 = vld [vmem:[%s3625 + $0x3c] sm:$0xf]
    %v3658 = vunpack.c.l.b16 %v3626
    %v3659 = vunpack.c.l.b16 %v3627
    %v3660 = vunpack.c.l.b16 %v3628
    %v3661 = vunpack.c.l.b16 %v3629
    %v3662 = vunpack.c.l.b16 %v3630
    %v3663 = vunpack.c.l.b16 %v3631
    %v3664 = vunpack.c.l.b16 %v3632
    %v3665 = vunpack.c.l.b16 %v3633
    %v3666 = vunpack.c.l.b16 %v3634
    %v3667 = vunpack.c.l.b16 %v3635
    %v3668 = vunpack.c.l.b16 %v3636
    %v3669 = vunpack.c.l.b16 %v3637
    %v3670 = vunpack.c.l.b16 %v3638
    %v3671 = vunpack.c.l.b16 %v3639
    %v3672 = vunpack.c.l.b16 %v3640
    %v3673 = vunpack.c.l.b16 %v3641
    %v3674 = vpack.c.b16 %v3659, %v3658
    %v3675 = vpack.c.b16 %v3661, %v3660
    %v3676 = vpack.c.b16 %v3663, %v3662
    %v3677 = vpack.c.b16 %v3665, %v3664
    %v3678 = vpack.c.b16 %v3667, %v3666
    %v3679 = vpack.c.b16 %v3669, %v3668
    %v3680 = vpack.c.b16 %v3671, %v3670
    %v3681 = vpack.c.b16 %v3673, %v3672
    %3690 = vmatprep.subr.bf16.mxu0 0
    %3691 = vmatpush1.bf16.msra.mxu0 %v3674
    %3692 = vmatprep.subr.bf16.mxu0 0
    %3693 = vmatpush1.bf16.msra.mxu0 %v3675
    %3694 = vmatprep.subr.bf16.mxu0 0
    %3695 = vmatpush1.bf16.msra.mxu0 %v3676
    %3696 = vmatprep.subr.bf16.mxu0 0
    %3697 = vmatpush1.bf16.msra.mxu0 %v3677
    %3698 = vmatprep.subr.bf16.mxu0 0
    %3699 = vmatpush1.bf16.msra.mxu0 %v3678
    %3700 = vmatprep.subr.bf16.mxu0 0
    %3701 = vmatpush1.bf16.msra.mxu0 %v3679
    %3702 = vmatprep.subr.bf16.mxu0 0
    %3703 = vmatpush1.bf16.msra.mxu0 %v3680
    %3704 = vmatprep.subr.bf16.mxu0 0
    %3705 = vmatpush1.bf16.msra.mxu0 %v3681
    %3706 = vmatprep.subr.bf16.mxu0 0
    %3707 = vmatpush1.bf16.msra.mxu0 0
    %3708 = vmatprep.subr.bf16.mxu0 0
    %3709 = vmatpush1.bf16.msra.mxu0 0
    %3710 = vmatprep.subr.bf16.mxu0 0
    %3711 = vmatpush1.bf16.msra.mxu0 0
    %3712 = vmatprep.subr.bf16.mxu0 0
    %3713 = vmatpush1.bf16.msra.mxu0 0
    %3714 = vmatprep.subr.bf16.mxu0 0
    %3715 = vmatpush1.bf16.msra.mxu0 0
    %3716 = vmatprep.subr.bf16.mxu0 0
    %3717 = vmatpush1.bf16.msra.mxu0 0
    %3718 = vmatprep.subr.bf16.mxu0 0
    %3719 = vmatpush1.bf16.msra.mxu0 0
    %3720 = vmatprep.subr.bf16.mxu0 0
    %3721 = vmatpush1.bf16.msra.mxu0 0
    %3722 = vmatprep.mubr.bf16.mxu0 0
    %3723 = vmatmul.mubr.bf16.gmra.mrb[0].mxu0 %v3411
    %v3724 = vpop.f32.mrb[0].mxu0
    %v3725 = vadd.f32 0.0, %v3724
    %v3726 = vpop.f32.mrb[0].mxu0
    %v3727 = vpop.f32.mrb[0].mxu0
    %v3728 = vpop.f32.mrb[0].mxu0
    %3729 = vdwg.mxu0
    %v3730 = vadd.f32 %v3620, %v3725
    %s3731 = scalar_lea.vmem %s5, 192
    %v3732 = vld [vmem:[%s3731] sm:$0xf]
    %v3733 = vld [vmem:[%s3731 + $0x4] sm:$0xf]
    %v3734 = vld [vmem:[%s3731 + $0x8] sm:$0xf]
    %v3735 = vld [vmem:[%s3731 + $0xc] sm:$0xf]
    %v3736 = vld [vmem:[%s3731 + $0x10] sm:$0xf]
    %v3737 = vld [vmem:[%s3731 + $0x14] sm:$0xf]
    %v3738 = vld [vmem:[%s3731 + $0x18] sm:$0xf]
    %v3739 = vld [vmem:[%s3731 + $0x1c] sm:$0xf]
    %v3740 = vld [vmem:[%s3731 + $0x20] sm:$0xf]
    %v3741 = vld [vmem:[%s3731 + $0x24] sm:$0xf]
    %v3742 = vld [vmem:[%s3731 + $0x28] sm:$0xf]
    %v3743 = vld [vmem:[%s3731 + $0x2c] sm:$0xf]
    %v3744 = vld [vmem:[%s3731 + $0x30] sm:$0xf]
    %v3745 = vld [vmem:[%s3731 + $0x34] sm:$0xf]
    %v3746 = vld [vmem:[%s3731 + $0x38] sm:$0xf]
    %v3747 = vld [vmem:[%s3731 + $0x3c] sm:$0xf]
    %v3749 = vrot.slane %v3411, 4
    %v3767 = vunpack.c.l.b16 %v3732
    %v3768 = vunpack.c.l.b16 %v3733
    %v3769 = vunpack.c.l.b16 %v3734
    %v3770 = vunpack.c.l.b16 %v3735
    %v3771 = vunpack.c.l.b16 %v3736
    %v3772 = vunpack.c.l.b16 %v3737
    %v3773 = vunpack.c.l.b16 %v3738
    %v3774 = vunpack.c.l.b16 %v3739
    %v3775 = vunpack.c.l.b16 %v3740
    %v3776 = vunpack.c.l.b16 %v3741
    %v3777 = vunpack.c.l.b16 %v3742
    %v3778 = vunpack.c.l.b16 %v3743
    %v3779 = vunpack.c.l.b16 %v3744
    %v3780 = vunpack.c.l.b16 %v3745
    %v3781 = vunpack.c.l.b16 %v3746
    %v3782 = vunpack.c.l.b16 %v3747
    %v3783 = vpack.c.b16 %v3768, %v3767
    %v3784 = vpack.c.b16 %v3770, %v3769
    %v3785 = vpack.c.b16 %v3772, %v3771
    %v3786 = vpack.c.b16 %v3774, %v3773
    %v3787 = vpack.c.b16 %v3776, %v3775
    %v3788 = vpack.c.b16 %v3778, %v3777
    %v3789 = vpack.c.b16 %v3780, %v3779
    %v3790 = vpack.c.b16 %v3782, %v3781
    %3799 = vmatprep.subr.bf16.mxu0 0
    %3800 = vmatpush1.bf16.msra.mxu0 %v3783
    %3801 = vmatprep.subr.bf16.mxu0 0
    %3802 = vmatpush1.bf16.msra.mxu0 %v3784
    %3803 = vmatprep.subr.bf16.mxu0 0
    %3804 = vmatpush1.bf16.msra.mxu0 %v3785
    %3805 = vmatprep.subr.bf16.mxu0 0
    %3806 = vmatpush1.bf16.msra.mxu0 %v3786
    %3807 = vmatprep.subr.bf16.mxu0 0
    %3808 = vmatpush1.bf16.msra.mxu0 %v3787
    %3809 = vmatprep.subr.bf16.mxu0 0
    %3810 = vmatpush1.bf16.msra.mxu0 %v3788
    %3811 = vmatprep.subr.bf16.mxu0 0
    %3812 = vmatpush1.bf16.msra.mxu0 %v3789
    %3813 = vmatprep.subr.bf16.mxu0 0
    %3814 = vmatpush1.bf16.msra.mxu0 %v3790
    %3815 = vmatprep.subr.bf16.mxu0 0
    %3816 = vmatpush1.bf16.msra.mxu0 0
    %3817 = vmatprep.subr.bf16.mxu0 0
    %3818 = vmatpush1.bf16.msra.mxu0 0
    %3819 = vmatprep.subr.bf16.mxu0 0
    %3820 = vmatpush1.bf16.msra.mxu0 0
    %3821 = vmatprep.subr.bf16.mxu0 0
    %3822 = vmatpush1.bf16.msra.mxu0 0
    %3823 = vmatprep.subr.bf16.mxu0 0
    %3824 = vmatpush1.bf16.msra.mxu0 0
    %3825 = vmatprep.subr.bf16.mxu0 0
    %3826 = vmatpush1.bf16.msra.mxu0 0
    %3827 = vmatprep.subr.bf16.mxu0 0
    %3828 = vmatpush1.bf16.msra.mxu0 0
    %3829 = vmatprep.subr.bf16.mxu0 0
    %3830 = vmatpush1.bf16.msra.mxu0 0
    %3831 = vmatprep.mubr.bf16.mxu0 0
    %3832 = vmatmul.mubr.bf16.gmra.mrb[0].mxu0 %v3749
    %v3833 = vpop.f32.mrb[0].mxu0
    %v3834 = vadd.f32 0.0, %v3833
    %v3835 = vpop.f32.mrb[0].mxu0
    %v3836 = vpop.f32.mrb[0].mxu0
    %v3837 = vpop.f32.mrb[0].mxu0
    %3838 = vdwg.mxu0
    %v3839 = vadd.f32 %v3730, %v3834
    %s3840 = scalar_lea.vmem %s5, 256
    %v3841 = vld [vmem:[%s3840] sm:$0xf]
    %v3842 = vld [vmem:[%s3840 + $0x4] sm:$0xf]
    %v3843 = vld [vmem:[%s3840 + $0x8] sm:$0xf]
    %v3844 = vld [vmem:[%s3840 + $0xc] sm:$0xf]
    %v3845 = vld [vmem:[%s3840 + $0x10] sm:$0xf]
    %v3846 = vld [vmem:[%s3840 + $0x14] sm:$0xf]
    %v3847 = vld [vmem:[%s3840 + $0x18] sm:$0xf]
    %v3848 = vld [vmem:[%s3840 + $0x1c] sm:$0xf]
    %v3849 = vld [vmem:[%s3840 + $0x20] sm:$0xf]
    %v3850 = vld [vmem:[%s3840 + $0x24] sm:$0xf]
    %v3851 = vld [vmem:[%s3840 + $0x28] sm:$0xf]
    %v3852 = vld [vmem:[%s3840 + $0x2c] sm:$0xf]
    %v3853 = vld [vmem:[%s3840 + $0x30] sm:$0xf]
    %v3854 = vld [vmem:[%s3840 + $0x34] sm:$0xf]
    %v3855 = vld [vmem:[%s3840 + $0x38] sm:$0xf]
    %v3856 = vld [vmem:[%s3840 + $0x3c] sm:$0xf]
    %v3873 = vunpack.c.l.b16 %v3841
    %v3874 = vunpack.c.l.b16 %v3842
    %v3875 = vunpack.c.l.b16 %v3843
    %v3876 = vunpack.c.l.b16 %v3844
    %v3877 = vunpack.c.l.b16 %v3845
    %v3878 = vunpack.c.l.b16 %v3846
    %v3879 = vunpack.c.l.b16 %v3847
    %v3880 = vunpack.c.l.b16 %v3848
    %v3881 = vunpack.c.l.b16 %v3849
    %v3882 = vunpack.c.l.b16 %v3850
    %v3883 = vunpack.c.l.b16 %v3851
    %v3884 = vunpack.c.l.b16 %v3852
    %v3885 = vunpack.c.l.b16 %v3853
    %v3886 = vunpack.c.l.b16 %v3854
    %v3887 = vunpack.c.l.b16 %v3855
    %v3888 = vunpack.c.l.b16 %v3856
    %v3889 = vpack.c.b16 %v3874, %v3873
    %v3890 = vpack.c.b16 %v3876, %v3875
    %v3891 = vpack.c.b16 %v3878, %v3877
    %v3892 = vpack.c.b16 %v3880, %v3879
    %v3893 = vpack.c.b16 %v3882, %v3881
    %v3894 = vpack.c.b16 %v3884, %v3883
    %v3895 = vpack.c.b16 %v3886, %v3885
    %v3896 = vpack.c.b16 %v3888, %v3887
    %3905 = vmatprep.subr.bf16.mxu0 0
    %3906 = vmatpush1.bf16.msra.mxu0 %v3889
    %3907 = vmatprep.subr.bf16.mxu0 0
    %3908 = vmatpush1.bf16.msra.mxu0 %v3890
    %3909 = vmatprep.subr.bf16.mxu0 0
    %3910 = vmatpush1.bf16.msra.mxu0 %v3891
    %3911 = vmatprep.subr.bf16.mxu0 0
    %3912 = vmatpush1.bf16.msra.mxu0 %v3892
    %3913 = vmatprep.subr.bf16.mxu0 0
    %3914 = vmatpush1.bf16.msra.mxu0 %v3893
    %3915 = vmatprep.subr.bf16.mxu0 0
    %3916 = vmatpush1.bf16.msra.mxu0 %v3894
    %3917 = vmatprep.subr.bf16.mxu0 0
    %3918 = vmatpush1.bf16.msra.mxu0 %v3895
    %3919 = vmatprep.subr.bf16.mxu0 0
    %3920 = vmatpush1.bf16.msra.mxu0 %v3896
    %3921 = vmatprep.subr.bf16.mxu0 0
    %3922 = vmatpush1.bf16.msra.mxu0 0
    %3923 = vmatprep.subr.bf16.mxu0 0
    %3924 = vmatpush1.bf16.msra.mxu0 0
    %3925 = vmatprep.subr.bf16.mxu0 0
    %3926 = vmatpush1.bf16.msra.mxu0 0
    %3927 = vmatprep.subr.bf16.mxu0 0
    %3928 = vmatpush1.bf16.msra.mxu0 0
    %3929 = vmatprep.subr.bf16.mxu0 0
    %3930 = vmatpush1.bf16.msra.mxu0 0
    %3931 = vmatprep.subr.bf16.mxu0 0
    %3932 = vmatpush1.bf16.msra.mxu0 0
    %3933 = vmatprep.subr.bf16.mxu0 0
    %3934 = vmatpush1.bf16.msra.mxu0 0
    %3935 = vmatprep.subr.bf16.mxu0 0
    %3936 = vmatpush1.bf16.msra.mxu0 0
    %3937 = vmatprep.mubr.bf16.mxu0 0
    %3938 = vmatmul.mubr.bf16.gmra.mrb[0].mxu0 %v3412
    %v3939 = vpop.f32.mrb[0].mxu0
    %v3940 = vadd.f32 0.0, %v3939
    %v3941 = vpop.f32.mrb[0].mxu0
    %v3942 = vpop.f32.mrb[0].mxu0
    %v3943 = vpop.f32.mrb[0].mxu0
    %3944 = vdwg.mxu0
    %v3945 = vadd.f32 %v3839, %v3940
    %v3946 = vld [vmem:[%s6] sm:$0x1]
    %v3948 = vlaneseq
    %v3949 = vshrl.u32 %v3948, 7
    %v3950 = vsub.s32 0, %v3949
    %v3951 = vrot.slane %v3946, %v3950
    %v3953 = vadd.f32 %v3945, %v3951
    %v3954 = vmax.f32 %v3953, 0.0
    %v3955 = vpack.c.bf16 %v3954, %v3954
    %v3956 = vld [vmem:[%s7] sm:$0xf]
    %v3957 = vld [vmem:[%s7 + $0x4] sm:$0xf]
    %v3958 = vld [vmem:[%s7 + $0x8] sm:$0xf]
    %v3959 = vld [vmem:[%s7 + $0xc] sm:$0xf]
    %v3960 = vld [vmem:[%s7 + $0x10] sm:$0xf]
    %v3961 = vld [vmem:[%s7 + $0x14] sm:$0xf]
    %v3962 = vld [vmem:[%s7 + $0x18] sm:$0xf]
    %v3963 = vld [vmem:[%s7 + $0x1c] sm:$0xf]
    %v3964 = vld [vmem:[%s7 + $0x20] sm:$0xf]
    %v3965 = vld [vmem:[%s7 + $0x24] sm:$0xf]
    %v3966 = vld [vmem:[%s7 + $0x28] sm:$0xf]
    %v3967 = vld [vmem:[%s7 + $0x2c] sm:$0xf]
    %v3968 = vld [vmem:[%s7 + $0x30] sm:$0xf]
    %v3969 = vld [vmem:[%s7 + $0x34] sm:$0xf]
    %v3970 = vld [vmem:[%s7 + $0x38] sm:$0xf]
    %v3971 = vld [vmem:[%s7 + $0x3c] sm:$0xf]
    %v3972 = vld [vmem:[%s8] sm:$0x1]
    %v3974 = vlaneseq
    %v3975 = vshrl.u32 %v3974, 7
    %v3976 = vsub.s32 0, %v3975
    %v3977 = vrot.slane %v3972, %v3976
    %v3995 = vunpack.c.l.b16 %v3956
    %v3996 = vunpack.c.l.b16 %v3957
    %v3997 = vunpack.c.l.b16 %v3958
    %v3998 = vunpack.c.l.b16 %v3959
    %v3999 = vunpack.c.l.b16 %v3960
    %v4000 = vunpack.c.l.b16 %v3961
    %v4001 = vunpack.c.l.b16 %v3962
    %v4002 = vunpack.c.l.b16 %v3963
    %v4003 = vunpack.c.l.b16 %v3964
    %v4004 = vunpack.c.l.b16 %v3965
    %v4005 = vunpack.c.l.b16 %v3966
    %v4006 = vunpack.c.l.b16 %v3967
    %v4007 = vunpack.c.l.b16 %v3968
    %v4008 = vunpack.c.l.b16 %v3969
    %v4009 = vunpack.c.l.b16 %v3970
    %v4010 = vunpack.c.l.b16 %v3971
    %v4011 = vpack.c.b16 %v3996, %v3995
    %v4012 = vpack.c.b16 %v3998, %v3997
    %v4013 = vpack.c.b16 %v4000, %v3999
    %v4014 = vpack.c.b16 %v4002, %v4001
    %v4015 = vpack.c.b16 %v4004, %v4003
    %v4016 = vpack.c.b16 %v4006, %v4005
    %v4017 = vpack.c.b16 %v4008, %v4007
    %v4018 = vpack.c.b16 %v4010, %v4009
    %4027 = vmatprep.subr.bf16.mxu0 0
    %4028 = vmatpush1.bf16.msra.mxu0 %v4011
    %4029 = vmatprep.subr.bf16.mxu0 0
    %4030 = vmatpush1.bf16.msra.mxu0 %v4012
    %4031 = vmatprep.subr.bf16.mxu0 0
    %4032 = vmatpush1.bf16.msra.mxu0 %v4013
    %4033 = vmatprep.subr.bf16.mxu0 0
    %4034 = vmatpush1.bf16.msra.mxu0 %v4014
    %4035 = vmatprep.subr.bf16.mxu0 0
    %4036 = vmatpush1.bf16.msra.mxu0 %v4015
    %4037 = vmatprep.subr.bf16.mxu0 0
    %4038 = vmatpush1.bf16.msra.mxu0 %v4016
    %4039 = vmatprep.subr.bf16.mxu0 0
    %4040 = vmatpush1.bf16.msra.mxu0 %v4017
    %4041 = vmatprep.subr.bf16.mxu0 0
    %4042 = vmatpush1.bf16.msra.mxu0 %v4018
    %4043 = vmatprep.subr.bf16.mxu0 0
    %4044 = vmatpush1.bf16.msra.mxu0 0
    %4045 = vmatprep.subr.bf16.mxu0 0
    %4046 = vmatpush1.bf16.msra.mxu0 0
    %4047 = vmatprep.subr.bf16.mxu0 0
    %4048 = vmatpush1.bf16.msra.mxu0 0
    %4049 = vmatprep.subr.bf16.mxu0 0
    %4050 = vmatpush1.bf16.msra.mxu0 0
    %4051 = vmatprep.subr.bf16.mxu0 0
    %4052 = vmatpush1.bf16.msra.mxu0 0
    %4053 = vmatprep.subr.bf16.mxu0 0
    %4054 = vmatpush1.bf16.msra.mxu0 0
    %4055 = vmatprep.subr.bf16.mxu0 0
    %4056 = vmatpush1.bf16.msra.mxu0 0
    %4057 = vmatprep.subr.bf16.mxu0 0
    %4058 = vmatpush1.bf16.msra.mxu0 0
    %4059 = vmatprep.mubr.bf16.mxu0 0
    %4060 = vmatmul.mubr.bf16.gmra.mrb[0].mxu0 %v3955
    %v4061 = vpop.f32.mrb[0].mxu0
    %v4062 = vadd.f32 %v3977, %v4061
    %v4063 = vpop.f32.mrb[0].mxu0
    %v4064 = vpop.f32.mrb[0].mxu0
    %v4065 = vpop.f32.mrb[0].mxu0
    %4066 = vdwg.mxu0
    %v4067 = vmax.f32 %v4062, 0.0
    %v4068 = vpack.c.bf16 %v4067, %v4067
    %v4069 = vld [vmem:[#allocation4] sm:$0xf]
    %v4070 = vld [vmem:[#allocation4 + $0x4] sm:$0xf]
    %v4071 = vld [vmem:[#allocation4 + $0x8] sm:$0xf]
    %v4072 = vld [vmem:[#allocation4 + $0xc] sm:$0xf]
    %v4073 = vld [vmem:[#allocation4 + $0x10] sm:$0xf]
    %v4074 = vld [vmem:[#allocation4 + $0x14] sm:$0xf]
    %v4075 = vld [vmem:[#allocation4 + $0x18] sm:$0xf]
    %v4076 = vld [vmem:[#allocation4 + $0x1c] sm:$0xf]
    %v4077 = vld [vmem:[#allocation4 + $0x20] sm:$0xf]
    %v4078 = vld [vmem:[#allocation4 + $0x24] sm:$0xf]
    %v4079 = vld [vmem:[#allocation4 + $0x28] sm:$0xf]
    %v4080 = vld [vmem:[#allocation4 + $0x2c] sm:$0xf]
    %v4081 = vld [vmem:[#allocation4 + $0x30] sm:$0xf]
    %v4082 = vld [vmem:[#allocation4 + $0x34] sm:$0xf]
    %v4083 = vld [vmem:[#allocation4 + $0x38] sm:$0xf]
    %v4084 = vld [vmem:[#allocation4 + $0x3c] sm:$0xf]
    %v4085 = vld [vmem:[%s10] sm:$0x1]
    %v4087 = vlaneseq
    %v4088 = vshrl.u32 %v4087, 7
    %v4089 = vsub.s32 0, %v4088
    %v4090 = vrot.slane %v4085, %v4089
    %v4108 = vunpack.c.l.b16 %v4069
    %v4109 = vunpack.c.l.b16 %v4070
    %v4110 = vunpack.c.l.b16 %v4071
    %v4111 = vunpack.c.l.b16 %v4072
    %v4112 = vunpack.c.l.b16 %v4073
    %v4113 = vunpack.c.l.b16 %v4074
    %v4114 = vunpack.c.l.b16 %v4075
    %v4115 = vunpack.c.l.b16 %v4076
    %v4116 = vunpack.c.l.b16 %v4077
    %v4117 = vunpack.c.l.b16 %v4078
    %v4118 = vunpack.c.l.b16 %v4079
    %v4119 = vunpack.c.l.b16 %v4080
    %v4120 = vunpack.c.l.b16 %v4081
    %v4121 = vunpack.c.l.b16 %v4082
    %v4122 = vunpack.c.l.b16 %v4083
    %v4123 = vunpack.c.l.b16 %v4084
    %v4124 = vpack.c.b16 %v4109, %v4108
    %v4125 = vpack.c.b16 %v4111, %v4110
    %v4126 = vpack.c.b16 %v4113, %v4112
    %v4127 = vpack.c.b16 %v4115, %v4114
    %v4128 = vpack.c.b16 %v4117, %v4116
    %v4129 = vpack.c.b16 %v4119, %v4118
    %v4130 = vpack.c.b16 %v4121, %v4120
    %v4131 = vpack.c.b16 %v4123, %v4122
    %4140 = vmatprep.subr.bf16.mxu0 0
    %4141 = vmatpush1.bf16.msra.mxu0 %v4124
    %4142 = vmatprep.subr.bf16.mxu0 0
    %4143 = vmatpush1.bf16.msra.mxu0 %v4125
    %4144 = vmatprep.subr.bf16.mxu0 0
    %4145 = vmatpush1.bf16.msra.mxu0 %v4126
    %4146 = vmatprep.subr.bf16.mxu0 0
    %4147 = vmatpush1.bf16.msra.mxu0 %v4127
    %4148 = vmatprep.subr.bf16.mxu0 0
    %4149 = vmatpush1.bf16.msra.mxu0 %v4128
    %4150 = vmatprep.subr.bf16.mxu0 0
    %4151 = vmatpush1.bf16.msra.mxu0 %v4129
    %4152 = vmatprep.subr.bf16.mxu0 0
    %4153 = vmatpush1.bf16.msra.mxu0 %v4130
    %4154 = vmatprep.subr.bf16.mxu0 0
    %4155 = vmatpush1.bf16.msra.mxu0 %v4131
    %4156 = vmatprep.subr.bf16.mxu0 0
    %4157 = vmatpush1.bf16.msra.mxu0 0
    %4158 = vmatprep.subr.bf16.mxu0 0
    %4159 = vmatpush1.bf16.msra.mxu0 0
    %4160 = vmatprep.subr.bf16.mxu0 0
    %4161 = vmatpush1.bf16.msra.mxu0 0
    %4162 = vmatprep.subr.bf16.mxu0 0
    %4163 = vmatpush1.bf16.msra.mxu0 0
    %4164 = vmatprep.subr.bf16.mxu0 0
    %4165 = vmatpush1.bf16.msra.mxu0 0
    %4166 = vmatprep.subr.bf16.mxu0 0
    %4167 = vmatpush1.bf16.msra.mxu0 0
    %4168 = vmatprep.subr.bf16.mxu0 0
    %4169 = vmatpush1.bf16.msra.mxu0 0
    %4170 = vmatprep.subr.bf16.mxu0 0
    %4171 = vmatpush1.bf16.msra.mxu0 0
    %4172 = vmatprep.mubr.bf16.mxu0 0
    %4173 = vmatmul.mubr.bf16.gmra.mrb[0].mxu0 %v4068
    %v4174 = vpop.f32.mrb[0].mxu0
    %v4175 = vadd.f32 %v4090, %v4174
    %v4176 = vpop.f32.mrb[0].mxu0
    %v4177 = vpop.f32.mrb[0].mxu0
    %v4178 = vpop.f32.mrb[0].mxu0
    %4179 = vdwg.mxu0
    %4180 = vst [vmem:[%s11] sm:$0xff] %v4175
    // Predicated region
    $region54: #{lenet_forward.1} parent=1 // pred_check
      _
    $region55: #{lenet_forward.1} parent=1 // pred_check_branch
      %4182 = sbr.rel (0) target = $region57
    $region56: #{lenet_forward.1} parent=1 // pred_region
      _
    $region57: #{lenet_forward.1} parent=1 // pred_fallthru
      _
    // Predicated region
    $region58: #{lenet_forward.1} parent=1 // pred_check
      _
    $region59: #{lenet_forward.1} parent=1 // pred_check_branch
      %4184 = sbr.rel (0) target = $region61
    $region60: #{lenet_forward.1} parent=1 // pred_region
      _
    $region61: #{lenet_forward.1} parent=1 // pred_fallthru
      _
    %4185 = vsyncpa [#allocation3], 1
    %4186 = vsyncpa [#allocation5], 1

</llo_original>
